<compile_context>
chip_gen: v5e
topology: v5e:2x2
jax: 0.10.0
libtpu: 0.0.40
codegen_flags: <defaults>
</compile_context>

<pallas_src>
import numpy as np
import jax
import jax.numpy as jnp
from jax.experimental import pallas as pl
from jax.experimental.pallas import tpu as pltpu

# ---------------- model hyper-parameters (small, consistent with the module) ----------------
B = 8            # batch
T = 8            # number of spline grid points -> T-1 intervals
IN_CH = 4        # input_channels
HIDDEN = 32      # hidden_channels
HID_HID = 64     # hidden_hidden_channels
OUT_CH = 2       # output_channels
N_LAYERS = 3     # n_layers  (=> N_LAYERS-1 hidden linears inside CDEFunc)
N_HID_LAYERS = N_LAYERS - 1
TM1 = T - 1
OUT_PAD = 128    # lane-dense readout width (wrapper slices back to OUT_CH)


# ---------------------------------- Pallas kernel ----------------------------------
def make_neural_cde_kernel(n_hid_layers, n_steps):
    """Single-program kernel: full RK4 time loop unrolled, everything resident in VMEM."""

    def kernel(*refs):
        (z0_ref, d_ref, w_in_ref, b_in_ref) = refs[:4]
        hid_refs = refs[4:4 + 2 * n_hid_layers]
        (w_out_ref, b_out_ref,
         w_ro_ref, b_ro_ref,
         out_ref) = refs[4 + 2 * n_hid_layers:]

        # ---- hoist every weight / bias load out of the unrolled time loop ----
        w_in = w_in_ref[...]
        b_in = b_in_ref[...]
        hids = [(hid_refs[2 * l][...], hid_refs[2 * l + 1][...])
                for l in range(n_hid_layers)]
        w_out = w_out_ref[...]
        b_out = b_out_ref[...]
        w_ro = w_ro_ref[...]
        b_ro = b_ro_ref[...]

        def mm(x_f32, w_bf16):
            # bf16 operands, f32 accumulate (single-pass MXU); activations stay f32.
            return jnp.dot(x_f32.astype(jnp.bfloat16), w_bf16,
                           preferred_element_type=jnp.float32)

        def vector_field(z, d_rep):
            # CDEFunc: linear_in -> relu -> (linear -> relu)* -> linear_out -> tanh,
            # then contract f.view(B, H, I) with dX/dt.
            h = jnp.maximum(mm(z, w_in) + b_in, 0.0)
            for w_h, b_h in hids:
                h = jnp.maximum(mm(h, w_h) + b_h, 0.0)
            # linear_out columns are permuted host-side to i-major/h-minor layout,
            # so h[:, i*H:(i+1)*H] == f[:, :, i].  (B, I*H) = (8, 128): one vreg.
            h = jnp.tanh(mm(h, w_out) + b_out)
            # d_rep is lane-dense (each channel repeated HIDDEN times), so the
            # contraction is one vreg multiply + 3 segment adds.
            prod = h * d_rep
            out = prod[:, 0:HIDDEN]
            for i in range(1, IN_CH):
                out = out + prod[:, i * HIDDEN:(i + 1) * HIDDEN]
            return out

        z = z0_ref[...]                        # z0 computed in the wrapper

        # torchdiffeq fixed-grid RK4 (3/8 rule), step size h = 1 (grid points are arange).
        for n in range(n_steps):
            base = 4 * n
            k1 = vector_field(z, d_ref[base + 0])
            k2 = vector_field(z + k1 * (1.0 / 3.0), d_ref[base + 1])
            k3 = vector_field(z + (k2 - k1 * (1.0 / 3.0)), d_ref[base + 2])
            k4 = vector_field(z + (k1 - k2 + k3), d_ref[base + 3])
            z = z + (k1 + 3.0 * (k2 + k3) + k4) * 0.125

        # readout(z_T), lane-dense (padded to OUT_PAD columns).
        out_ref[...] = (mm(z, w_ro) + b_ro).astype(out_ref.dtype)

    return kernel


# ---------------------------------- glue (plain JAX) ----------------------------------
def spline_stage_derivs(coeffs):
    """Evaluate dX/dt at the 4 RK stage times of each interval, following
    torchcde.CubicSpline.derivative / _interpret_t semantics (bucketize -> index clamp).
    Returns X0 (B, I) and d_all of shape (T-1, 4, B, I)."""
    a, b, two_c, three_d = jnp.split(coeffs, 4, axis=-1)   # each (B, T-1, I)
    x0 = a[:, 0, :]                                         # X.evaluate(t=0) == a_0

    n = np.arange(TM1)
    # stage 1: t = n   -> interval max(n-1,0), frac = 1.0 (0.0 for n == 0)
    idx0 = np.maximum(n - 1, 0)
    frac0 = np.where(n > 0, 1.0, 0.0).astype(np.float32)
    # stage 2/3: t = n + 1/3, n + 2/3 -> interval n ; stage 4: t = n+1 -> clamp -> n

    def deriv(idx, frac):
        f = jnp.asarray(frac, jnp.float32).reshape(1, -1, 1)
        der = b[:, idx, :] + (two_c[:, idx, :] + three_d[:, idx, :] * f) * f  # (B, T-1, I)
        return jnp.transpose(der, (1, 0, 2))                                  # (T-1, B, I)

    d0 = deriv(idx0, frac0)
    d1 = deriv(n, np.full(TM1, 1.0 / 3.0, np.float32))
    d2 = deriv(n, np.full(TM1, 2.0 / 3.0, np.float32))
    d3 = deriv(n, np.full(TM1, 1.0, np.float32))
    return x0, jnp.stack([d0, d1, d2, d3], axis=1)          # (T-1, 4, B, I)


def init_params(key):
    """Deterministic PyTorch-Linear-style init (U(-1/sqrt(fan_in), 1/sqrt(fan_in)))."""
    def linear(k, fan_in, fan_out):
        k1, k2 = jax.random.split(k)
        bound = 1.0 / np.sqrt(fan_in)
        w = jax.random.uniform(k1, (fan_out, fan_in), jnp.float32, -bound, bound)
        bias = jax.random.uniform(k2, (fan_out,), jnp.float32, -bound, bound)
        return w, bias

    keys = jax.random.split(key, 4 + N_HID_LAYERS)
    w_init, b_init = linear(keys[0], IN_CH, HIDDEN)
    w_in, b_in = linear(keys[1], HIDDEN, HID_HID)
    w_hids, b_hids = [], []
    for l in range(N_HID_LAYERS):
        w, bias = linear(keys[2 + l], HID_HID, HID_HID)
        w_hids.append(w)
        b_hids.append(bias)
    w_out, b_out = linear(keys[2 + N_HID_LAYERS], HID_HID, IN_CH * HIDDEN)
    w_ro, b_ro = linear(keys[3 + N_HID_LAYERS], HIDDEN, OUT_CH)

    return dict(
        w_init_t=w_init.T, b_init=b_init.reshape(1, -1),
        w_in_t=w_in.T, b_in=b_in.reshape(1, -1),
        w_hid_t=jnp.stack([w.T for w in w_hids]),               # (nh, HH, HH)
        b_hid=jnp.stack([b.reshape(1, -1) for b in b_hids]),    # (nh, 1, HH)
        w_out_t=w_out.T, b_out=b_out.reshape(1, -1),            # (HH, H*I), columns h*I+i
        w_ro_t=w_ro.T, b_ro=b_ro.reshape(1, -1),
    )


@jax.jit
def neural_cde_forward(coeffs, params):
    x0, d_all = spline_stage_derivs(coeffs)

    # z0 = initial(X0): K=4 matmul done in the wrapper (f32), not on the MXU in-kernel.
    z0 = x0 @ params['w_init_t'] + params['b_init']             # (B, HIDDEN)

    # Lane-dense dX/dt: repeat each input channel HIDDEN times along lanes so that
    # d_rep[..., i*H + h] == d[..., i]; flatten (step, stage) into one leading axis.
    d_rep = jnp.repeat(d_all, HIDDEN, axis=-1).reshape(TM1 * 4, B, IN_CH * HIDDEN)

    # Column permutation (h*I + i) -> (i*H + h): new column i*H+h takes old column h*I+i,
    # so the in-kernel contraction is a full-vreg multiply + 3 segment adds.
    perm = np.arange(HIDDEN * IN_CH).reshape(HIDDEN, IN_CH).T.reshape(-1)
    w_out_perm = params['w_out_t'][:, perm]
    b_out_perm = params['b_out'][:, perm]

    # Lane-dense readout: pad (H, OUT_CH) -> (H, OUT_PAD); wrapper slices the result.
    w_ro_pad = jnp.zeros((HIDDEN, OUT_PAD), jnp.float32).at[:, :OUT_CH].set(params['w_ro_t'])
    b_ro_pad = jnp.zeros((1, OUT_PAD), jnp.float32).at[:, :OUT_CH].set(params['b_ro'])

    bf16 = lambda w: w.astype(jnp.bfloat16)   # MXU operands in bf16, f32 accumulation
    args = [z0, d_rep, bf16(params['w_in_t']), params['b_in']]
    for l in range(N_HID_LAYERS):
        args += [bf16(params['w_hid_t'][l]), params['b_hid'][l]]
    args += [bf16(w_out_perm), b_out_perm, bf16(w_ro_pad), b_ro_pad]

    vmem = pl.BlockSpec(memory_space=pltpu.MemorySpace.VMEM)   # whole array, resident in VMEM
    out_padded = pl.pallas_call(
        make_neural_cde_kernel(N_HID_LAYERS, TM1),
        out_shape=jax.ShapeDtypeStruct((B, OUT_PAD), jnp.float32),
        in_specs=[vmem] * len(args),
        out_specs=vmem,
    )(*args)
    return out_padded[:, :OUT_CH]


# ---------------------------------- pure-JAX reference ----------------------------------
def neural_cde_reference(coeffs, params):
    """Same forward semantics (unpermuted weights, explicit view+contract), using the same
    precision policy as the kernel: bf16 matmul operands, f32 accumulation, f32 elementwise,
    f32 initial linear."""
    x0, d_all = spline_stage_derivs(coeffs)

    def bdot(x, w):
        return jnp.dot(x.astype(jnp.bfloat16), w.astype(jnp.bfloat16),
                       preferred_element_type=jnp.float32)

    def vf(z, d):
        h = jax.nn.relu(bdot(z, params['w_in_t']) + params['b_in'])
        for l in range(N_HID_LAYERS):
            h = jax.nn.relu(bdot(h, params['w_hid_t'][l]) + params['b_hid'][l])
        h = jnp.tanh(bdot(h, params['w_out_t']) + params['b_out'])
        f = h.reshape(B, HIDDEN, IN_CH)
        return (f * d[:, None, :]).sum(-1)

    z = x0 @ params['w_init_t'] + params['b_init']
    for n in range(TM1):
        k1 = vf(z, d_all[n, 0])
        k2 = vf(z + k1 / 3.0, d_all[n, 1])
        k3 = vf(z + (k2 - k1 / 3.0), d_all[n, 2])
        k4 = vf(z + (k1 - k2 + k3), d_all[n, 3])
        z = z + (k1 + 3.0 * (k2 + k3) + k4) * 0.125
    return bdot(z, params['w_ro_t']) + params['b_ro']


# ---------------------------------------- main ----------------------------------------
if __name__ == "__main__":
    key = jax.random.PRNGKey(0)
    k_params, k_coeffs = jax.random.split(key)

    params = init_params(k_params)
    # coeffs as produced by torchcde.natural_cubic_coeffs: (B, T-1, 4*I)
    coeffs = jax.random.normal(k_coeffs, (B, TM1, 4 * IN_CH), jnp.float32) * 0.5

    pred = jax.block_until_ready(neural_cde_forward(coeffs, params))
    ref = jax.block_until_ready(neural_cde_reference(coeffs, params))

    assert pred.shape == (B, OUT_CH)
    assert jnp.allclose(pred, ref, rtol=5e-3, atol=5e-3), (
        f"mismatch: max abs diff {float(jnp.max(jnp.abs(pred - ref)))}")

    print("KERNEL_OK")
</pallas_src>

<mosaic_0001>
module attributes {stable_mosaic.version = 11 : i64} {
  func.func @kernel(%arg0: memref<8x32xf32, #tpu.memory_space<vmem>>, %arg1: memref<28x8x128xf32, #tpu.memory_space<vmem>>, %arg2: memref<32x64xbf16, #tpu.memory_space<vmem>>, %arg3: memref<1x64xf32, #tpu.memory_space<vmem>>, %arg4: memref<64x64xbf16, #tpu.memory_space<vmem>>, %arg5: memref<1x64xf32, #tpu.memory_space<vmem>>, %arg6: memref<64x64xbf16, #tpu.memory_space<vmem>>, %arg7: memref<1x64xf32, #tpu.memory_space<vmem>>, %arg8: memref<64x128xbf16, #tpu.memory_space<vmem>>, %arg9: memref<1x128xf32, #tpu.memory_space<vmem>>, %arg10: memref<32x128xbf16, #tpu.memory_space<vmem>>, %arg11: memref<1x128xf32, #tpu.memory_space<vmem>>, %arg12: memref<8x128xf32, #tpu.memory_space<vmem>>) attributes {dimension_semantics = [], scalar_prefetch = 0 : i64, scratch_operands = 0 : i64, tpu.core_type = #tpu.core_type<tc>} {
    %c0 = arith.constant 0 : index
    %c0_0 = arith.constant 0 : index
    %0 = vector.load %arg2[%c0, %c0_0] : memref<32x64xbf16, #tpu.memory_space<vmem>>, vector<32x64xbf16>
    %c0_1 = arith.constant 0 : index
    %c0_2 = arith.constant 0 : index
    %1 = vector.load %arg3[%c0_1, %c0_2] : memref<1x64xf32, #tpu.memory_space<vmem>>, vector<1x64xf32>
    %c0_3 = arith.constant 0 : index
    %c0_4 = arith.constant 0 : index
    %2 = vector.load %arg4[%c0_3, %c0_4] : memref<64x64xbf16, #tpu.memory_space<vmem>>, vector<64x64xbf16>
    %c0_5 = arith.constant 0 : index
    %c0_6 = arith.constant 0 : index
    %3 = vector.load %arg5[%c0_5, %c0_6] : memref<1x64xf32, #tpu.memory_space<vmem>>, vector<1x64xf32>
    %c0_7 = arith.constant 0 : index
    %c0_8 = arith.constant 0 : index
    %4 = vector.load %arg6[%c0_7, %c0_8] : memref<64x64xbf16, #tpu.memory_space<vmem>>, vector<64x64xbf16>
    %c0_9 = arith.constant 0 : index
    %c0_10 = arith.constant 0 : index
    %5 = vector.load %arg7[%c0_9, %c0_10] : memref<1x64xf32, #tpu.memory_space<vmem>>, vector<1x64xf32>
    %c0_11 = arith.constant 0 : index
    %c0_12 = arith.constant 0 : index
    %6 = vector.load %arg8[%c0_11, %c0_12] : memref<64x128xbf16, #tpu.memory_space<vmem>>, vector<64x128xbf16>
    %c0_13 = arith.constant 0 : index
    %c0_14 = arith.constant 0 : index
    %7 = vector.load %arg9[%c0_13, %c0_14] : memref<1x128xf32, #tpu.memory_space<vmem>>, vector<1x128xf32>
    %c0_15 = arith.constant 0 : index
    %c0_16 = arith.constant 0 : index
    %8 = vector.load %arg10[%c0_15, %c0_16] : memref<32x128xbf16, #tpu.memory_space<vmem>>, vector<32x128xbf16>
    %c0_17 = arith.constant 0 : index
    %c0_18 = arith.constant 0 : index
    %9 = vector.load %arg11[%c0_17, %c0_18] : memref<1x128xf32, #tpu.memory_space<vmem>>, vector<1x128xf32>
    %c0_19 = arith.constant 0 : index
    %c0_20 = arith.constant 0 : index
    %10 = vector.load %arg0[%c0_19, %c0_20] : memref<8x32xf32, #tpu.memory_space<vmem>>, vector<8x32xf32>
    %c0_21 = arith.constant 0 : index
    %c0_22 = arith.constant 0 : index
    %c0_23 = arith.constant 0 : index
    %11 = vector.load %arg1[%c0_21, %c0_22, %c0_23] : memref<28x8x128xf32, #tpu.memory_space<vmem>>, vector<1x8x128xf32>
    %12 = vector.shape_cast %11 : vector<1x8x128xf32> to vector<8x128xf32>
    %13 = arith.truncf %10 : vector<8x32xf32> to vector<8x32xbf16>
    %cst = arith.constant dense<0.000000e+00> : vector<8x64xf32>
    %14 = tpu.matmul %13, %0, %cst {dimension_numbers = #tpu.dot_dimension_numbers<[1], [0], [0], [1], [0, 0, 1, 1], [], []>} : vector<8x32xbf16>, vector<32x64xbf16>, vector<8x64xf32> -> vector<8x64xf32>
    %15 = vector.broadcast %1 : vector<1x64xf32> to vector<8x64xf32>
    %16 = arith.addf %14, %15 : vector<8x64xf32>
    %cst_24 = arith.constant 0.000000e+00 : f32
    %17 = vector.broadcast %cst_24 : f32 to vector<8x64xf32>
    %18 = arith.maximumf %16, %17 : vector<8x64xf32>
    %19 = arith.truncf %18 : vector<8x64xf32> to vector<8x64xbf16>
    %cst_25 = arith.constant dense<0.000000e+00> : vector<8x64xf32>
    %20 = tpu.matmul %19, %2, %cst_25 {dimension_numbers = #tpu.dot_dimension_numbers<[1], [0], [0], [1], [0, 0, 1, 1], [], []>} : vector<8x64xbf16>, vector<64x64xbf16>, vector<8x64xf32> -> vector<8x64xf32>
    %21 = vector.broadcast %3 : vector<1x64xf32> to vector<8x64xf32>
    %22 = arith.addf %20, %21 : vector<8x64xf32>
    %cst_26 = arith.constant 0.000000e+00 : f32
    %23 = vector.broadcast %cst_26 : f32 to vector<8x64xf32>
    %24 = arith.maximumf %22, %23 : vector<8x64xf32>
    %25 = arith.truncf %24 : vector<8x64xf32> to vector<8x64xbf16>
    %cst_27 = arith.constant dense<0.000000e+00> : vector<8x64xf32>
    %26 = tpu.matmul %25, %4, %cst_27 {dimension_numbers = #tpu.dot_dimension_numbers<[1], [0], [0], [1], [0, 0, 1, 1], [], []>} : vector<8x64xbf16>, vector<64x64xbf16>, vector<8x64xf32> -> vector<8x64xf32>
    %27 = vector.broadcast %5 : vector<1x64xf32> to vector<8x64xf32>
    %28 = arith.addf %26, %27 : vector<8x64xf32>
    %cst_28 = arith.constant 0.000000e+00 : f32
    %29 = vector.broadcast %cst_28 : f32 to vector<8x64xf32>
    %30 = arith.maximumf %28, %29 : vector<8x64xf32>
    %31 = arith.truncf %30 : vector<8x64xf32> to vector<8x64xbf16>
    %cst_29 = arith.constant dense<0.000000e+00> : vector<8x128xf32>
    %32 = tpu.matmul %31, %6, %cst_29 {dimension_numbers = #tpu.dot_dimension_numbers<[1], [0], [0], [1], [0, 0, 1, 1], [], []>} : vector<8x64xbf16>, vector<64x128xbf16>, vector<8x128xf32> -> vector<8x128xf32>
    %33 = vector.broadcast %7 : vector<1x128xf32> to vector<8x128xf32>
    %34 = arith.addf %32, %33 : vector<8x128xf32>
    %35 = math.tanh %34 : vector<8x128xf32>
    %36 = arith.mulf %35, %12 : vector<8x128xf32>
    %37 = vector.extract_strided_slice %36 {offsets = [0, 0], sizes = [8, 32], strides = [1, 1]} : vector<8x128xf32> to vector<8x32xf32>
    %38 = vector.extract_strided_slice %36 {offsets = [0, 32], sizes = [8, 32], strides = [1, 1]} : vector<8x128xf32> to vector<8x32xf32>
    %39 = arith.addf %37, %38 : vector<8x32xf32>
    %40 = vector.extract_strided_slice %36 {offsets = [0, 64], sizes = [8, 32], strides = [1, 1]} : vector<8x128xf32> to vector<8x32xf32>
    %41 = arith.addf %39, %40 : vector<8x32xf32>
    %42 = vector.extract_strided_slice %36 {offsets = [0, 96], sizes = [8, 32], strides = [1, 1]} : vector<8x128xf32> to vector<8x32xf32>
    %43 = arith.addf %41, %42 : vector<8x32xf32>
    %cst_30 = arith.constant 0.333333343 : f32
    %44 = vector.broadcast %cst_30 : f32 to vector<8x32xf32>
    %45 = arith.mulf %43, %44 : vector<8x32xf32>
    %46 = arith.addf %10, %45 : vector<8x32xf32>
    %c1 = arith.constant 1 : index
    %c0_31 = arith.constant 0 : index
    %c0_32 = arith.constant 0 : index
    %47 = vector.load %arg1[%c1, %c0_31, %c0_32] : memref<28x8x128xf32, #tpu.memory_space<vmem>>, vector<1x8x128xf32>
    %48 = vector.shape_cast %47 : vector<1x8x128xf32> to vector<8x128xf32>
    %49 = arith.truncf %46 : vector<8x32xf32> to vector<8x32xbf16>
    %cst_33 = arith.constant dense<0.000000e+00> : vector<8x64xf32>
    %50 = tpu.matmul %49, %0, %cst_33 {dimension_numbers = #tpu.dot_dimension_numbers<[1], [0], [0], [1], [0, 0, 1, 1], [], []>} : vector<8x32xbf16>, vector<32x64xbf16>, vector<8x64xf32> -> vector<8x64xf32>
    %51 = vector.broadcast %1 : vector<1x64xf32> to vector<8x64xf32>
    %52 = arith.addf %50, %51 : vector<8x64xf32>
    %cst_34 = arith.constant 0.000000e+00 : f32
    %53 = vector.broadcast %cst_34 : f32 to vector<8x64xf32>
    %54 = arith.maximumf %52, %53 : vector<8x64xf32>
    %55 = arith.truncf %54 : vector<8x64xf32> to vector<8x64xbf16>
    %cst_35 = arith.constant dense<0.000000e+00> : vector<8x64xf32>
    %56 = tpu.matmul %55, %2, %cst_35 {dimension_numbers = #tpu.dot_dimension_numbers<[1], [0], [0], [1], [0, 0, 1, 1], [], []>} : vector<8x64xbf16>, vector<64x64xbf16>, vector<8x64xf32> -> vector<8x64xf32>
    %57 = vector.broadcast %3 : vector<1x64xf32> to vector<8x64xf32>
    %58 = arith.addf %56, %57 : vector<8x64xf32>
    %cst_36 = arith.constant 0.000000e+00 : f32
    %59 = vector.broadcast %cst_36 : f32 to vector<8x64xf32>
    %60 = arith.maximumf %58, %59 : vector<8x64xf32>
    %61 = arith.truncf %60 : vector<8x64xf32> to vector<8x64xbf16>
    %cst_37 = arith.constant dense<0.000000e+00> : vector<8x64xf32>
    %62 = tpu.matmul %61, %4, %cst_37 {dimension_numbers = #tpu.dot_dimension_numbers<[1], [0], [0], [1], [0, 0, 1, 1], [], []>} : vector<8x64xbf16>, vector<64x64xbf16>, vector<8x64xf32> -> vector<8x64xf32>
    %63 = vector.broadcast %5 : vector<1x64xf32> to vector<8x64xf32>
    %64 = arith.addf %62, %63 : vector<8x64xf32>
    %cst_38 = arith.constant 0.000000e+00 : f32
    %65 = vector.broadcast %cst_38 : f32 to vector<8x64xf32>
    %66 = arith.maximumf %64, %65 : vector<8x64xf32>
    %67 = arith.truncf %66 : vector<8x64xf32> to vector<8x64xbf16>
    %cst_39 = arith.constant dense<0.000000e+00> : vector<8x128xf32>
    %68 = tpu.matmul %67, %6, %cst_39 {dimension_numbers = #tpu.dot_dimension_numbers<[1], [0], [0], [1], [0, 0, 1, 1], [], []>} : vector<8x64xbf16>, vector<64x128xbf16>, vector<8x128xf32> -> vector<8x128xf32>
    %69 = vector.broadcast %7 : vector<1x128xf32> to vector<8x128xf32>
    %70 = arith.addf %68, %69 : vector<8x128xf32>
    %71 = math.tanh %70 : vector<8x128xf32>
    %72 = arith.mulf %71, %48 : vector<8x128xf32>
    %73 = vector.extract_strided_slice %72 {offsets = [0, 0], sizes = [8, 32], strides = [1, 1]} : vector<8x128xf32> to vector<8x32xf32>
    %74 = vector.extract_strided_slice %72 {offsets = [0, 32], sizes = [8, 32], strides = [1, 1]} : vector<8x128xf32> to vector<8x32xf32>
    %75 = arith.addf %73, %74 : vector<8x32xf32>
    %76 = vector.extract_strided_slice %72 {offsets = [0, 64], sizes = [8, 32], strides = [1, 1]} : vector<8x128xf32> to vector<8x32xf32>
    %77 = arith.addf %75, %76 : vector<8x32xf32>
    %78 = vector.extract_strided_slice %72 {offsets = [0, 96], sizes = [8, 32], strides = [1, 1]} : vector<8x128xf32> to vector<8x32xf32>
    %79 = arith.addf %77, %78 : vector<8x32xf32>
    %cst_40 = arith.constant 0.333333343 : f32
    %80 = vector.broadcast %cst_40 : f32 to vector<8x32xf32>
    %81 = arith.mulf %43, %80 : vector<8x32xf32>
    %82 = arith.subf %79, %81 : vector<8x32xf32>
    %83 = arith.addf %10, %82 : vector<8x32xf32>
    %c2 = arith.constant 2 : index
    %c0_41 = arith.constant 0 : index
    %c0_42 = arith.constant 0 : index
    %84 = vector.load %arg1[%c2, %c0_41, %c0_42] : memref<28x8x128xf32, #tpu.memory_space<vmem>>, vector<1x8x128xf32>
    %85 = vector.shape_cast %84 : vector<1x8x128xf32> to vector<8x128xf32>
    %86 = arith.truncf %83 : vector<8x32xf32> to vector<8x32xbf16>
    %cst_43 = arith.constant dense<0.000000e+00> : vector<8x64xf32>
    %87 = tpu.matmul %86, %0, %cst_43 {dimension_numbers = #tpu.dot_dimension_numbers<[1], [0], [0], [1], [0, 0, 1, 1], [], []>} : vector<8x32xbf16>, vector<32x64xbf16>, vector<8x64xf32> -> vector<8x64xf32>
    %88 = vector.broadcast %1 : vector<1x64xf32> to vector<8x64xf32>
    %89 = arith.addf %87, %88 : vector<8x64xf32>
    %cst_44 = arith.constant 0.000000e+00 : f32
    %90 = vector.broadcast %cst_44 : f32 to vector<8x64xf32>
    %91 = arith.maximumf %89, %90 : vector<8x64xf32>
    %92 = arith.truncf %91 : vector<8x64xf32> to vector<8x64xbf16>
    %cst_45 = arith.constant dense<0.000000e+00> : vector<8x64xf32>
    %93 = tpu.matmul %92, %2, %cst_45 {dimension_numbers = #tpu.dot_dimension_numbers<[1], [0], [0], [1], [0, 0, 1, 1], [], []>} : vector<8x64xbf16>, vector<64x64xbf16>, vector<8x64xf32> -> vector<8x64xf32>
    %94 = vector.broadcast %3 : vector<1x64xf32> to vector<8x64xf32>
    %95 = arith.addf %93, %94 : vector<8x64xf32>
    %cst_46 = arith.constant 0.000000e+00 : f32
    %96 = vector.broadcast %cst_46 : f32 to vector<8x64xf32>
    %97 = arith.maximumf %95, %96 : vector<8x64xf32>
    %98 = arith.truncf %97 : vector<8x64xf32> to vector<8x64xbf16>
    %cst_47 = arith.constant dense<0.000000e+00> : vector<8x64xf32>
    %99 = tpu.matmul %98, %4, %cst_47 {dimension_numbers = #tpu.dot_dimension_numbers<[1], [0], [0], [1], [0, 0, 1, 1], [], []>} : vector<8x64xbf16>, vector<64x64xbf16>, vector<8x64xf32> -> vector<8x64xf32>
    %100 = vector.broadcast %5 : vector<1x64xf32> to vector<8x64xf32>
    %101 = arith.addf %99, %100 : vector<8x64xf32>
    %cst_48 = arith.constant 0.000000e+00 : f32
    %102 = vector.broadcast %cst_48 : f32 to vector<8x64xf32>
    %103 = arith.maximumf %101, %102 : vector<8x64xf32>
    %104 = arith.truncf %103 : vector<8x64xf32> to vector<8x64xbf16>
    %cst_49 = arith.constant dense<0.000000e+00> : vector<8x128xf32>
    %105 = tpu.matmul %104, %6, %cst_49 {dimension_numbers = #tpu.dot_dimension_numbers<[1], [0], [0], [1], [0, 0, 1, 1], [], []>} : vector<8x64xbf16>, vector<64x128xbf16>, vector<8x128xf32> -> vector<8x128xf32>
    %106 = vector.broadcast %7 : vector<1x128xf32> to vector<8x128xf32>
    %107 = arith.addf %105, %106 : vector<8x128xf32>
    %108 = math.tanh %107 : vector<8x128xf32>
    %109 = arith.mulf %108, %85 : vector<8x128xf32>
    %110 = vector.extract_strided_slice %109 {offsets = [0, 0], sizes = [8, 32], strides = [1, 1]} : vector<8x128xf32> to vector<8x32xf32>
    %111 = vector.extract_strided_slice %109 {offsets = [0, 32], sizes = [8, 32], strides = [1, 1]} : vector<8x128xf32> to vector<8x32xf32>
    %112 = arith.addf %110, %111 : vector<8x32xf32>
    %113 = vector.extract_strided_slice %109 {offsets = [0, 64], sizes = [8, 32], strides = [1, 1]} : vector<8x128xf32> to vector<8x32xf32>
    %114 = arith.addf %112, %113 : vector<8x32xf32>
    %115 = vector.extract_strided_slice %109 {offsets = [0, 96], sizes = [8, 32], strides = [1, 1]} : vector<8x128xf32> to vector<8x32xf32>
    %116 = arith.addf %114, %115 : vector<8x32xf32>
    %117 = arith.subf %43, %79 : vector<8x32xf32>
    %118 = arith.addf %117, %116 : vector<8x32xf32>
    %119 = arith.addf %10, %118 : vector<8x32xf32>
    %c3 = arith.constant 3 : index
    %c0_50 = arith.constant 0 : index
    %c0_51 = arith.constant 0 : index
    %120 = vector.load %arg1[%c3, %c0_50, %c0_51] : memref<28x8x128xf32, #tpu.memory_space<vmem>>, vector<1x8x128xf32>
    %121 = vector.shape_cast %120 : vector<1x8x128xf32> to vector<8x128xf32>
    %122 = arith.truncf %119 : vector<8x32xf32> to vector<8x32xbf16>
    %cst_52 = arith.constant dense<0.000000e+00> : vector<8x64xf32>
    %123 = tpu.matmul %122, %0, %cst_52 {dimension_numbers = #tpu.dot_dimension_numbers<[1], [0], [0], [1], [0, 0, 1, 1], [], []>} : vector<8x32xbf16>, vector<32x64xbf16>, vector<8x64xf32> -> vector<8x64xf32>
    %124 = vector.broadcast %1 : vector<1x64xf32> to vector<8x64xf32>
    %125 = arith.addf %123, %124 : vector<8x64xf32>
    %cst_53 = arith.constant 0.000000e+00 : f32
    %126 = vector.broadcast %cst_53 : f32 to vector<8x64xf32>
    %127 = arith.maximumf %125, %126 : vector<8x64xf32>
    %128 = arith.truncf %127 : vector<8x64xf32> to vector<8x64xbf16>
    %cst_54 = arith.constant dense<0.000000e+00> : vector<8x64xf32>
    %129 = tpu.matmul %128, %2, %cst_54 {dimension_numbers = #tpu.dot_dimension_numbers<[1], [0], [0], [1], [0, 0, 1, 1], [], []>} : vector<8x64xbf16>, vector<64x64xbf16>, vector<8x64xf32> -> vector<8x64xf32>
    %130 = vector.broadcast %3 : vector<1x64xf32> to vector<8x64xf32>
    %131 = arith.addf %129, %130 : vector<8x64xf32>
    %cst_55 = arith.constant 0.000000e+00 : f32
    %132 = vector.broadcast %cst_55 : f32 to vector<8x64xf32>
    %133 = arith.maximumf %131, %132 : vector<8x64xf32>
    %134 = arith.truncf %133 : vector<8x64xf32> to vector<8x64xbf16>
    %cst_56 = arith.constant dense<0.000000e+00> : vector<8x64xf32>
    %135 = tpu.matmul %134, %4, %cst_56 {dimension_numbers = #tpu.dot_dimension_numbers<[1], [0], [0], [1], [0, 0, 1, 1], [], []>} : vector<8x64xbf16>, vector<64x64xbf16>, vector<8x64xf32> -> vector<8x64xf32>
    %136 = vector.broadcast %5 : vector<1x64xf32> to vector<8x64xf32>
    %137 = arith.addf %135, %136 : vector<8x64xf32>
    %cst_57 = arith.constant 0.000000e+00 : f32
    %138 = vector.broadcast %cst_57 : f32 to vector<8x64xf32>
    %139 = arith.maximumf %137, %138 : vector<8x64xf32>
    %140 = arith.truncf %139 : vector<8x64xf32> to vector<8x64xbf16>
    %cst_58 = arith.constant dense<0.000000e+00> : vector<8x128xf32>
    %141 = tpu.matmul %140, %6, %cst_58 {dimension_numbers = #tpu.dot_dimension_numbers<[1], [0], [0], [1], [0, 0, 1, 1], [], []>} : vector<8x64xbf16>, vector<64x128xbf16>, vector<8x128xf32> -> vector<8x128xf32>
    %142 = vector.broadcast %7 : vector<1x128xf32> to vector<8x128xf32>
    %143 = arith.addf %141, %142 : vector<8x128xf32>
    %144 = math.tanh %143 : vector<8x128xf32>
    %145 = arith.mulf %144, %121 : vector<8x128xf32>
    %146 = vector.extract_strided_slice %145 {offsets = [0, 0], sizes = [8, 32], strides = [1, 1]} : vector<8x128xf32> to vector<8x32xf32>
    %147 = vector.extract_strided_slice %145 {offsets = [0, 32], sizes = [8, 32], strides = [1, 1]} : vector<8x128xf32> to vector<8x32xf32>
    %148 = arith.addf %146, %147 : vector<8x32xf32>
    %149 = vector.extract_strided_slice %145 {offsets = [0, 64], sizes = [8, 32], strides = [1, 1]} : vector<8x128xf32> to vector<8x32xf32>
    %150 = arith.addf %148, %149 : vector<8x32xf32>
    %151 = vector.extract_strided_slice %145 {offsets = [0, 96], sizes = [8, 32], strides = [1, 1]} : vector<8x128xf32> to vector<8x32xf32>
    %152 = arith.addf %150, %151 : vector<8x32xf32>
    %153 = arith.addf %79, %116 : vector<8x32xf32>
    %cst_59 = arith.constant 3.000000e+00 : f32
    %154 = vector.broadcast %cst_59 : f32 to vector<8x32xf32>
    %155 = arith.mulf %154, %153 : vector<8x32xf32>
    %156 = arith.addf %43, %155 : vector<8x32xf32>
    %157 = arith.addf %156, %152 : vector<8x32xf32>
    %cst_60 = arith.constant 1.250000e-01 : f32
    %158 = vector.broadcast %cst_60 : f32 to vector<8x32xf32>
    %159 = arith.mulf %157, %158 : vector<8x32xf32>
    %160 = arith.addf %10, %159 : vector<8x32xf32>
    %c4 = arith.constant 4 : index
    %c0_61 = arith.constant 0 : index
    %c0_62 = arith.constant 0 : index
    %161 = vector.load %arg1[%c4, %c0_61, %c0_62] : memref<28x8x128xf32, #tpu.memory_space<vmem>>, vector<1x8x128xf32>
    %162 = vector.shape_cast %161 : vector<1x8x128xf32> to vector<8x128xf32>
    %163 = arith.truncf %160 : vector<8x32xf32> to vector<8x32xbf16>
    %cst_63 = arith.constant dense<0.000000e+00> : vector<8x64xf32>
    %164 = tpu.matmul %163, %0, %cst_63 {dimension_numbers = #tpu.dot_dimension_numbers<[1], [0], [0], [1], [0, 0, 1, 1], [], []>} : vector<8x32xbf16>, vector<32x64xbf16>, vector<8x64xf32> -> vector<8x64xf32>
    %165 = vector.broadcast %1 : vector<1x64xf32> to vector<8x64xf32>
    %166 = arith.addf %164, %165 : vector<8x64xf32>
    %cst_64 = arith.constant 0.000000e+00 : f32
    %167 = vector.broadcast %cst_64 : f32 to vector<8x64xf32>
    %168 = arith.maximumf %166, %167 : vector<8x64xf32>
    %169 = arith.truncf %168 : vector<8x64xf32> to vector<8x64xbf16>
    %cst_65 = arith.constant dense<0.000000e+00> : vector<8x64xf32>
    %170 = tpu.matmul %169, %2, %cst_65 {dimension_numbers = #tpu.dot_dimension_numbers<[1], [0], [0], [1], [0, 0, 1, 1], [], []>} : vector<8x64xbf16>, vector<64x64xbf16>, vector<8x64xf32> -> vector<8x64xf32>
    %171 = vector.broadcast %3 : vector<1x64xf32> to vector<8x64xf32>
    %172 = arith.addf %170, %171 : vector<8x64xf32>
    %cst_66 = arith.constant 0.000000e+00 : f32
    %173 = vector.broadcast %cst_66 : f32 to vector<8x64xf32>
    %174 = arith.maximumf %172, %173 : vector<8x64xf32>
    %175 = arith.truncf %174 : vector<8x64xf32> to vector<8x64xbf16>
    %cst_67 = arith.constant dense<0.000000e+00> : vector<8x64xf32>
    %176 = tpu.matmul %175, %4, %cst_67 {dimension_numbers = #tpu.dot_dimension_numbers<[1], [0], [0], [1], [0, 0, 1, 1], [], []>} : vector<8x64xbf16>, vector<64x64xbf16>, vector<8x64xf32> -> vector<8x64xf32>
    %177 = vector.broadcast %5 : vector<1x64xf32> to vector<8x64xf32>
    %178 = arith.addf %176, %177 : vector<8x64xf32>
    %cst_68 = arith.constant 0.000000e+00 : f32
    %179 = vector.broadcast %cst_68 : f32 to vector<8x64xf32>
    %180 = arith.maximumf %178, %179 : vector<8x64xf32>
    %181 = arith.truncf %180 : vector<8x64xf32> to vector<8x64xbf16>
    %cst_69 = arith.constant dense<0.000000e+00> : vector<8x128xf32>
    %182 = tpu.matmul %181, %6, %cst_69 {dimension_numbers = #tpu.dot_dimension_numbers<[1], [0], [0], [1], [0, 0, 1, 1], [], []>} : vector<8x64xbf16>, vector<64x128xbf16>, vector<8x128xf32> -> vector<8x128xf32>
    %183 = vector.broadcast %7 : vector<1x128xf32> to vector<8x128xf32>
    %184 = arith.addf %182, %183 : vector<8x128xf32>
    %185 = math.tanh %184 : vector<8x128xf32>
    %186 = arith.mulf %185, %162 : vector<8x128xf32>
    %187 = vector.extract_strided_slice %186 {offsets = [0, 0], sizes = [8, 32], strides = [1, 1]} : vector<8x128xf32> to vector<8x32xf32>
    %188 = vector.extract_strided_slice %186 {offsets = [0, 32], sizes = [8, 32], strides = [1, 1]} : vector<8x128xf32> to vector<8x32xf32>
    %189 = arith.addf %187, %188 : vector<8x32xf32>
    %190 = vector.extract_strided_slice %186 {offsets = [0, 64], sizes = [8, 32], strides = [1, 1]} : vector<8x128xf32> to vector<8x32xf32>
    %191 = arith.addf %189, %190 : vector<8x32xf32>
    %192 = vector.extract_strided_slice %186 {offsets = [0, 96], sizes = [8, 32], strides = [1, 1]} : vector<8x128xf32> to vector<8x32xf32>
    %193 = arith.addf %191, %192 : vector<8x32xf32>
    %cst_70 = arith.constant 0.333333343 : f32
    %194 = vector.broadcast %cst_70 : f32 to vector<8x32xf32>
    %195 = arith.mulf %193, %194 : vector<8x32xf32>
    %196 = arith.addf %160, %195 : vector<8x32xf32>
    %c5 = arith.constant 5 : index
    %c0_71 = arith.constant 0 : index
    %c0_72 = arith.constant 0 : index
    %197 = vector.load %arg1[%c5, %c0_71, %c0_72] : memref<28x8x128xf32, #tpu.memory_space<vmem>>, vector<1x8x128xf32>
    %198 = vector.shape_cast %197 : vector<1x8x128xf32> to vector<8x128xf32>
    %199 = arith.truncf %196 : vector<8x32xf32> to vector<8x32xbf16>
    %cst_73 = arith.constant dense<0.000000e+00> : vector<8x64xf32>
    %200 = tpu.matmul %199, %0, %cst_73 {dimension_numbers = #tpu.dot_dimension_numbers<[1], [0], [0], [1], [0, 0, 1, 1], [], []>} : vector<8x32xbf16>, vector<32x64xbf16>, vector<8x64xf32> -> vector<8x64xf32>
    %201 = vector.broadcast %1 : vector<1x64xf32> to vector<8x64xf32>
    %202 = arith.addf %200, %201 : vector<8x64xf32>
    %cst_74 = arith.constant 0.000000e+00 : f32
    %203 = vector.broadcast %cst_74 : f32 to vector<8x64xf32>
    %204 = arith.maximumf %202, %203 : vector<8x64xf32>
    %205 = arith.truncf %204 : vector<8x64xf32> to vector<8x64xbf16>
    %cst_75 = arith.constant dense<0.000000e+00> : vector<8x64xf32>
    %206 = tpu.matmul %205, %2, %cst_75 {dimension_numbers = #tpu.dot_dimension_numbers<[1], [0], [0], [1], [0, 0, 1, 1], [], []>} : vector<8x64xbf16>, vector<64x64xbf16>, vector<8x64xf32> -> vector<8x64xf32>
    %207 = vector.broadcast %3 : vector<1x64xf32> to vector<8x64xf32>
    %208 = arith.addf %206, %207 : vector<8x64xf32>
    %cst_76 = arith.constant 0.000000e+00 : f32
    %209 = vector.broadcast %cst_76 : f32 to vector<8x64xf32>
    %210 = arith.maximumf %208, %209 : vector<8x64xf32>
    %211 = arith.truncf %210 : vector<8x64xf32> to vector<8x64xbf16>
    %cst_77 = arith.constant dense<0.000000e+00> : vector<8x64xf32>
    %212 = tpu.matmul %211, %4, %cst_77 {dimension_numbers = #tpu.dot_dimension_numbers<[1], [0], [0], [1], [0, 0, 1, 1], [], []>} : vector<8x64xbf16>, vector<64x64xbf16>, vector<8x64xf32> -> vector<8x64xf32>
    %213 = vector.broadcast %5 : vector<1x64xf32> to vector<8x64xf32>
    %214 = arith.addf %212, %213 : vector<8x64xf32>
    %cst_78 = arith.constant 0.000000e+00 : f32
    %215 = vector.broadcast %cst_78 : f32 to vector<8x64xf32>
    %216 = arith.maximumf %214, %215 : vector<8x64xf32>
    %217 = arith.truncf %216 : vector<8x64xf32> to vector<8x64xbf16>
    %cst_79 = arith.constant dense<0.000000e+00> : vector<8x128xf32>
    %218 = tpu.matmul %217, %6, %cst_79 {dimension_numbers = #tpu.dot_dimension_numbers<[1], [0], [0], [1], [0, 0, 1, 1], [], []>} : vector<8x64xbf16>, vector<64x128xbf16>, vector<8x128xf32> -> vector<8x128xf32>
    %219 = vector.broadcast %7 : vector<1x128xf32> to vector<8x128xf32>
    %220 = arith.addf %218, %219 : vector<8x128xf32>
    %221 = math.tanh %220 : vector<8x128xf32>
    %222 = arith.mulf %221, %198 : vector<8x128xf32>
    %223 = vector.extract_strided_slice %222 {offsets = [0, 0], sizes = [8, 32], strides = [1, 1]} : vector<8x128xf32> to vector<8x32xf32>
    %224 = vector.extract_strided_slice %222 {offsets = [0, 32], sizes = [8, 32], strides = [1, 1]} : vector<8x128xf32> to vector<8x32xf32>
    %225 = arith.addf %223, %224 : vector<8x32xf32>
    %226 = vector.extract_strided_slice %222 {offsets = [0, 64], sizes = [8, 32], strides = [1, 1]} : vector<8x128xf32> to vector<8x32xf32>
    %227 = arith.addf %225, %226 : vector<8x32xf32>
    %228 = vector.extract_strided_slice %222 {offsets = [0, 96], sizes = [8, 32], strides = [1, 1]} : vector<8x128xf32> to vector<8x32xf32>
    %229 = arith.addf %227, %228 : vector<8x32xf32>
    %cst_80 = arith.constant 0.333333343 : f32
    %230 = vector.broadcast %cst_80 : f32 to vector<8x32xf32>
    %231 = arith.mulf %193, %230 : vector<8x32xf32>
    %232 = arith.subf %229, %231 : vector<8x32xf32>
    %233 = arith.addf %160, %232 : vector<8x32xf32>
    %c6 = arith.constant 6 : index
    %c0_81 = arith.constant 0 : index
    %c0_82 = arith.constant 0 : index
    %234 = vector.load %arg1[%c6, %c0_81, %c0_82] : memref<28x8x128xf32, #tpu.memory_space<vmem>>, vector<1x8x128xf32>
    %235 = vector.shape_cast %234 : vector<1x8x128xf32> to vector<8x128xf32>
    %236 = arith.truncf %233 : vector<8x32xf32> to vector<8x32xbf16>
    %cst_83 = arith.constant dense<0.000000e+00> : vector<8x64xf32>
    %237 = tpu.matmul %236, %0, %cst_83 {dimension_numbers = #tpu.dot_dimension_numbers<[1], [0], [0], [1], [0, 0, 1, 1], [], []>} : vector<8x32xbf16>, vector<32x64xbf16>, vector<8x64xf32> -> vector<8x64xf32>
    %238 = vector.broadcast %1 : vector<1x64xf32> to vector<8x64xf32>
    %239 = arith.addf %237, %238 : vector<8x64xf32>
    %cst_84 = arith.constant 0.000000e+00 : f32
    %240 = vector.broadcast %cst_84 : f32 to vector<8x64xf32>
    %241 = arith.maximumf %239, %240 : vector<8x64xf32>
    %242 = arith.truncf %241 : vector<8x64xf32> to vector<8x64xbf16>
    %cst_85 = arith.constant dense<0.000000e+00> : vector<8x64xf32>
    %243 = tpu.matmul %242, %2, %cst_85 {dimension_numbers = #tpu.dot_dimension_numbers<[1], [0], [0], [1], [0, 0, 1, 1], [], []>} : vector<8x64xbf16>, vector<64x64xbf16>, vector<8x64xf32> -> vector<8x64xf32>
    %244 = vector.broadcast %3 : vector<1x64xf32> to vector<8x64xf32>
    %245 = arith.addf %243, %244 : vector<8x64xf32>
    %cst_86 = arith.constant 0.000000e+00 : f32
    %246 = vector.broadcast %cst_86 : f32 to vector<8x64xf32>
    %247 = arith.maximumf %245, %246 : vector<8x64xf32>
    %248 = arith.truncf %247 : vector<8x64xf32> to vector<8x64xbf16>
    %cst_87 = arith.constant dense<0.000000e+00> : vector<8x64xf32>
    %249 = tpu.matmul %248, %4, %cst_87 {dimension_numbers = #tpu.dot_dimension_numbers<[1], [0], [0], [1], [0, 0, 1, 1], [], []>} : vector<8x64xbf16>, vector<64x64xbf16>, vector<8x64xf32> -> vector<8x64xf32>
    %250 = vector.broadcast %5 : vector<1x64xf32> to vector<8x64xf32>
    %251 = arith.addf %249, %250 : vector<8x64xf32>
    %cst_88 = arith.constant 0.000000e+00 : f32
    %252 = vector.broadcast %cst_88 : f32 to vector<8x64xf32>
    %253 = arith.maximumf %251, %252 : vector<8x64xf32>
    %254 = arith.truncf %253 : vector<8x64xf32> to vector<8x64xbf16>
    %cst_89 = arith.constant dense<0.000000e+00> : vector<8x128xf32>
    %255 = tpu.matmul %254, %6, %cst_89 {dimension_numbers = #tpu.dot_dimension_numbers<[1], [0], [0], [1], [0, 0, 1, 1], [], []>} : vector<8x64xbf16>, vector<64x128xbf16>, vector<8x128xf32> -> vector<8x128xf32>
    %256 = vector.broadcast %7 : vector<1x128xf32> to vector<8x128xf32>
    %257 = arith.addf %255, %256 : vector<8x128xf32>
    %258 = math.tanh %257 : vector<8x128xf32>
    %259 = arith.mulf %258, %235 : vector<8x128xf32>
    %260 = vector.extract_strided_slice %259 {offsets = [0, 0], sizes = [8, 32], strides = [1, 1]} : vector<8x128xf32> to vector<8x32xf32>
    %261 = vector.extract_strided_slice %259 {offsets = [0, 32], sizes = [8, 32], strides = [1, 1]} : vector<8x128xf32> to vector<8x32xf32>
    %262 = arith.addf %260, %261 : vector<8x32xf32>
    %263 = vector.extract_strided_slice %259 {offsets = [0, 64], sizes = [8, 32], strides = [1, 1]} : vector<8x128xf32> to vector<8x32xf32>
    %264 = arith.addf %262, %263 : vector<8x32xf32>
    %265 = vector.extract_strided_slice %259 {offsets = [0, 96], sizes = [8, 32], strides = [1, 1]} : vector<8x128xf32> to vector<8x32xf32>
    %266 = arith.addf %264, %265 : vector<8x32xf32>
    %267 = arith.subf %193, %229 : vector<8x32xf32>
    %268 = arith.addf %267, %266 : vector<8x32xf32>
    %269 = arith.addf %160, %268 : vector<8x32xf32>
    %c7 = arith.constant 7 : index
    %c0_90 = arith.constant 0 : index
    %c0_91 = arith.constant 0 : index
    %270 = vector.load %arg1[%c7, %c0_90, %c0_91] : memref<28x8x128xf32, #tpu.memory_space<vmem>>, vector<1x8x128xf32>
    %271 = vector.shape_cast %270 : vector<1x8x128xf32> to vector<8x128xf32>
    %272 = arith.truncf %269 : vector<8x32xf32> to vector<8x32xbf16>
    %cst_92 = arith.constant dense<0.000000e+00> : vector<8x64xf32>
    %273 = tpu.matmul %272, %0, %cst_92 {dimension_numbers = #tpu.dot_dimension_numbers<[1], [0], [0], [1], [0, 0, 1, 1], [], []>} : vector<8x32xbf16>, vector<32x64xbf16>, vector<8x64xf32> -> vector<8x64xf32>
    %274 = vector.broadcast %1 : vector<1x64xf32> to vector<8x64xf32>
    %275 = arith.addf %273, %274 : vector<8x64xf32>
    %cst_93 = arith.constant 0.000000e+00 : f32
    %276 = vector.broadcast %cst_93 : f32 to vector<8x64xf32>
    %277 = arith.maximumf %275, %276 : vector<8x64xf32>
    %278 = arith.truncf %277 : vector<8x64xf32> to vector<8x64xbf16>
    %cst_94 = arith.constant dense<0.000000e+00> : vector<8x64xf32>
    %279 = tpu.matmul %278, %2, %cst_94 {dimension_numbers = #tpu.dot_dimension_numbers<[1], [0], [0], [1], [0, 0, 1, 1], [], []>} : vector<8x64xbf16>, vector<64x64xbf16>, vector<8x64xf32> -> vector<8x64xf32>
    %280 = vector.broadcast %3 : vector<1x64xf32> to vector<8x64xf32>
    %281 = arith.addf %279, %280 : vector<8x64xf32>
    %cst_95 = arith.constant 0.000000e+00 : f32
    %282 = vector.broadcast %cst_95 : f32 to vector<8x64xf32>
    %283 = arith.maximumf %281, %282 : vector<8x64xf32>
    %284 = arith.truncf %283 : vector<8x64xf32> to vector<8x64xbf16>
    %cst_96 = arith.constant dense<0.000000e+00> : vector<8x64xf32>
    %285 = tpu.matmul %284, %4, %cst_96 {dimension_numbers = #tpu.dot_dimension_numbers<[1], [0], [0], [1], [0, 0, 1, 1], [], []>} : vector<8x64xbf16>, vector<64x64xbf16>, vector<8x64xf32> -> vector<8x64xf32>
    %286 = vector.broadcast %5 : vector<1x64xf32> to vector<8x64xf32>
    %287 = arith.addf %285, %286 : vector<8x64xf32>
    %cst_97 = arith.constant 0.000000e+00 : f32
    %288 = vector.broadcast %cst_97 : f32 to vector<8x64xf32>
    %289 = arith.maximumf %287, %288 : vector<8x64xf32>
    %290 = arith.truncf %289 : vector<8x64xf32> to vector<8x64xbf16>
    %cst_98 = arith.constant dense<0.000000e+00> : vector<8x128xf32>
    %291 = tpu.matmul %290, %6, %cst_98 {dimension_numbers = #tpu.dot_dimension_numbers<[1], [0], [0], [1], [0, 0, 1, 1], [], []>} : vector<8x64xbf16>, vector<64x128xbf16>, vector<8x128xf32> -> vector<8x128xf32>
    %292 = vector.broadcast %7 : vector<1x128xf32> to vector<8x128xf32>
    %293 = arith.addf %291, %292 : vector<8x128xf32>
    %294 = math.tanh %293 : vector<8x128xf32>
    %295 = arith.mulf %294, %271 : vector<8x128xf32>
    %296 = vector.extract_strided_slice %295 {offsets = [0, 0], sizes = [8, 32], strides = [1, 1]} : vector<8x128xf32> to vector<8x32xf32>
    %297 = vector.extract_strided_slice %295 {offsets = [0, 32], sizes = [8, 32], strides = [1, 1]} : vector<8x128xf32> to vector<8x32xf32>
    %298 = arith.addf %296, %297 : vector<8x32xf32>
    %299 = vector.extract_strided_slice %295 {offsets = [0, 64], sizes = [8, 32], strides = [1, 1]} : vector<8x128xf32> to vector<8x32xf32>
    %300 = arith.addf %298, %299 : vector<8x32xf32>
    %301 = vector.extract_strided_slice %295 {offsets = [0, 96], sizes = [8, 32], strides = [1, 1]} : vector<8x128xf32> to vector<8x32xf32>
    %302 = arith.addf %300, %301 : vector<8x32xf32>
    %303 = arith.addf %229, %266 : vector<8x32xf32>
    %cst_99 = arith.constant 3.000000e+00 : f32
    %304 = vector.broadcast %cst_99 : f32 to vector<8x32xf32>
    %305 = arith.mulf %304, %303 : vector<8x32xf32>
    %306 = arith.addf %193, %305 : vector<8x32xf32>
    %307 = arith.addf %306, %302 : vector<8x32xf32>
    %cst_100 = arith.constant 1.250000e-01 : f32
    %308 = vector.broadcast %cst_100 : f32 to vector<8x32xf32>
    %309 = arith.mulf %307, %308 : vector<8x32xf32>
    %310 = arith.addf %160, %309 : vector<8x32xf32>
    %c8 = arith.constant 8 : index
    %c0_101 = arith.constant 0 : index
    %c0_102 = arith.constant 0 : index
    %311 = vector.load %arg1[%c8, %c0_101, %c0_102] : memref<28x8x128xf32, #tpu.memory_space<vmem>>, vector<1x8x128xf32>
    %312 = vector.shape_cast %311 : vector<1x8x128xf32> to vector<8x128xf32>
    %313 = arith.truncf %310 : vector<8x32xf32> to vector<8x32xbf16>
    %cst_103 = arith.constant dense<0.000000e+00> : vector<8x64xf32>
    %314 = tpu.matmul %313, %0, %cst_103 {dimension_numbers = #tpu.dot_dimension_numbers<[1], [0], [0], [1], [0, 0, 1, 1], [], []>} : vector<8x32xbf16>, vector<32x64xbf16>, vector<8x64xf32> -> vector<8x64xf32>
    %315 = vector.broadcast %1 : vector<1x64xf32> to vector<8x64xf32>
    %316 = arith.addf %314, %315 : vector<8x64xf32>
    %cst_104 = arith.constant 0.000000e+00 : f32
    %317 = vector.broadcast %cst_104 : f32 to vector<8x64xf32>
    %318 = arith.maximumf %316, %317 : vector<8x64xf32>
    %319 = arith.truncf %318 : vector<8x64xf32> to vector<8x64xbf16>
    %cst_105 = arith.constant dense<0.000000e+00> : vector<8x64xf32>
    %320 = tpu.matmul %319, %2, %cst_105 {dimension_numbers = #tpu.dot_dimension_numbers<[1], [0], [0], [1], [0, 0, 1, 1], [], []>} : vector<8x64xbf16>, vector<64x64xbf16>, vector<8x64xf32> -> vector<8x64xf32>
    %321 = vector.broadcast %3 : vector<1x64xf32> to vector<8x64xf32>
    %322 = arith.addf %320, %321 : vector<8x64xf32>
    %cst_106 = arith.constant 0.000000e+00 : f32
    %323 = vector.broadcast %cst_106 : f32 to vector<8x64xf32>
    %324 = arith.maximumf %322, %323 : vector<8x64xf32>
    %325 = arith.truncf %324 : vector<8x64xf32> to vector<8x64xbf16>
    %cst_107 = arith.constant dense<0.000000e+00> : vector<8x64xf32>
    %326 = tpu.matmul %325, %4, %cst_107 {dimension_numbers = #tpu.dot_dimension_numbers<[1], [0], [0], [1], [0, 0, 1, 1], [], []>} : vector<8x64xbf16>, vector<64x64xbf16>, vector<8x64xf32> -> vector<8x64xf32>
    %327 = vector.broadcast %5 : vector<1x64xf32> to vector<8x64xf32>
    %328 = arith.addf %326, %327 : vector<8x64xf32>
    %cst_108 = arith.constant 0.000000e+00 : f32
    %329 = vector.broadcast %cst_108 : f32 to vector<8x64xf32>
    %330 = arith.maximumf %328, %329 : vector<8x64xf32>
    %331 = arith.truncf %330 : vector<8x64xf32> to vector<8x64xbf16>
    %cst_109 = arith.constant dense<0.000000e+00> : vector<8x128xf32>
    %332 = tpu.matmul %331, %6, %cst_109 {dimension_numbers = #tpu.dot_dimension_numbers<[1], [0], [0], [1], [0, 0, 1, 1], [], []>} : vector<8x64xbf16>, vector<64x128xbf16>, vector<8x128xf32> -> vector<8x128xf32>
    %333 = vector.broadcast %7 : vector<1x128xf32> to vector<8x128xf32>
    %334 = arith.addf %332, %333 : vector<8x128xf32>
    %335 = math.tanh %334 : vector<8x128xf32>
    %336 = arith.mulf %335, %312 : vector<8x128xf32>
    %337 = vector.extract_strided_slice %336 {offsets = [0, 0], sizes = [8, 32], strides = [1, 1]} : vector<8x128xf32> to vector<8x32xf32>
    %338 = vector.extract_strided_slice %336 {offsets = [0, 32], sizes = [8, 32], strides = [1, 1]} : vector<8x128xf32> to vector<8x32xf32>
    %339 = arith.addf %337, %338 : vector<8x32xf32>
    %340 = vector.extract_strided_slice %336 {offsets = [0, 64], sizes = [8, 32], strides = [1, 1]} : vector<8x128xf32> to vector<8x32xf32>
    %341 = arith.addf %339, %340 : vector<8x32xf32>
    %342 = vector.extract_strided_slice %336 {offsets = [0, 96], sizes = [8, 32], strides = [1, 1]} : vector<8x128xf32> to vector<8x32xf32>
    %343 = arith.addf %341, %342 : vector<8x32xf32>
    %cst_110 = arith.constant 0.333333343 : f32
    %344 = vector.broadcast %cst_110 : f32 to vector<8x32xf32>
    %345 = arith.mulf %343, %344 : vector<8x32xf32>
    %346 = arith.addf %310, %345 : vector<8x32xf32>
    %c9 = arith.constant 9 : index
    %c0_111 = arith.constant 0 : index
    %c0_112 = arith.constant 0 : index
    %347 = vector.load %arg1[%c9, %c0_111, %c0_112] : memref<28x8x128xf32, #tpu.memory_space<vmem>>, vector<1x8x128xf32>
    %348 = vector.shape_cast %347 : vector<1x8x128xf32> to vector<8x128xf32>
    %349 = arith.truncf %346 : vector<8x32xf32> to vector<8x32xbf16>
    %cst_113 = arith.constant dense<0.000000e+00> : vector<8x64xf32>
    %350 = tpu.matmul %349, %0, %cst_113 {dimension_numbers = #tpu.dot_dimension_numbers<[1], [0], [0], [1], [0, 0, 1, 1], [], []>} : vector<8x32xbf16>, vector<32x64xbf16>, vector<8x64xf32> -> vector<8x64xf32>
    %351 = vector.broadcast %1 : vector<1x64xf32> to vector<8x64xf32>
    %352 = arith.addf %350, %351 : vector<8x64xf32>
    %cst_114 = arith.constant 0.000000e+00 : f32
    %353 = vector.broadcast %cst_114 : f32 to vector<8x64xf32>
    %354 = arith.maximumf %352, %353 : vector<8x64xf32>
    %355 = arith.truncf %354 : vector<8x64xf32> to vector<8x64xbf16>
    %cst_115 = arith.constant dense<0.000000e+00> : vector<8x64xf32>
    %356 = tpu.matmul %355, %2, %cst_115 {dimension_numbers = #tpu.dot_dimension_numbers<[1], [0], [0], [1], [0, 0, 1, 1], [], []>} : vector<8x64xbf16>, vector<64x64xbf16>, vector<8x64xf32> -> vector<8x64xf32>
    %357 = vector.broadcast %3 : vector<1x64xf32> to vector<8x64xf32>
    %358 = arith.addf %356, %357 : vector<8x64xf32>
    %cst_116 = arith.constant 0.000000e+00 : f32
    %359 = vector.broadcast %cst_116 : f32 to vector<8x64xf32>
    %360 = arith.maximumf %358, %359 : vector<8x64xf32>
    %361 = arith.truncf %360 : vector<8x64xf32> to vector<8x64xbf16>
    %cst_117 = arith.constant dense<0.000000e+00> : vector<8x64xf32>
    %362 = tpu.matmul %361, %4, %cst_117 {dimension_numbers = #tpu.dot_dimension_numbers<[1], [0], [0], [1], [0, 0, 1, 1], [], []>} : vector<8x64xbf16>, vector<64x64xbf16>, vector<8x64xf32> -> vector<8x64xf32>
    %363 = vector.broadcast %5 : vector<1x64xf32> to vector<8x64xf32>
    %364 = arith.addf %362, %363 : vector<8x64xf32>
    %cst_118 = arith.constant 0.000000e+00 : f32
    %365 = vector.broadcast %cst_118 : f32 to vector<8x64xf32>
    %366 = arith.maximumf %364, %365 : vector<8x64xf32>
    %367 = arith.truncf %366 : vector<8x64xf32> to vector<8x64xbf16>
    %cst_119 = arith.constant dense<0.000000e+00> : vector<8x128xf32>
    %368 = tpu.matmul %367, %6, %cst_119 {dimension_numbers = #tpu.dot_dimension_numbers<[1], [0], [0], [1], [0, 0, 1, 1], [], []>} : vector<8x64xbf16>, vector<64x128xbf16>, vector<8x128xf32> -> vector<8x128xf32>
    %369 = vector.broadcast %7 : vector<1x128xf32> to vector<8x128xf32>
    %370 = arith.addf %368, %369 : vector<8x128xf32>
    %371 = math.tanh %370 : vector<8x128xf32>
    %372 = arith.mulf %371, %348 : vector<8x128xf32>
    %373 = vector.extract_strided_slice %372 {offsets = [0, 0], sizes = [8, 32], strides = [1, 1]} : vector<8x128xf32> to vector<8x32xf32>
    %374 = vector.extract_strided_slice %372 {offsets = [0, 32], sizes = [8, 32], strides = [1, 1]} : vector<8x128xf32> to vector<8x32xf32>
    %375 = arith.addf %373, %374 : vector<8x32xf32>
    %376 = vector.extract_strided_slice %372 {offsets = [0, 64], sizes = [8, 32], strides = [1, 1]} : vector<8x128xf32> to vector<8x32xf32>
    %377 = arith.addf %375, %376 : vector<8x32xf32>
    %378 = vector.extract_strided_slice %372 {offsets = [0, 96], sizes = [8, 32], strides = [1, 1]} : vector<8x128xf32> to vector<8x32xf32>
    %379 = arith.addf %377, %378 : vector<8x32xf32>
    %cst_120 = arith.constant 0.333333343 : f32
    %380 = vector.broadcast %cst_120 : f32 to vector<8x32xf32>
    %381 = arith.mulf %343, %380 : vector<8x32xf32>
    %382 = arith.subf %379, %381 : vector<8x32xf32>
    %383 = arith.addf %310, %382 : vector<8x32xf32>
    %c10 = arith.constant 10 : index
    %c0_121 = arith.constant 0 : index
    %c0_122 = arith.constant 0 : index
    %384 = vector.load %arg1[%c10, %c0_121, %c0_122] : memref<28x8x128xf32, #tpu.memory_space<vmem>>, vector<1x8x128xf32>
    %385 = vector.shape_cast %384 : vector<1x8x128xf32> to vector<8x128xf32>
    %386 = arith.truncf %383 : vector<8x32xf32> to vector<8x32xbf16>
    %cst_123 = arith.constant dense<0.000000e+00> : vector<8x64xf32>
    %387 = tpu.matmul %386, %0, %cst_123 {dimension_numbers = #tpu.dot_dimension_numbers<[1], [0], [0], [1], [0, 0, 1, 1], [], []>} : vector<8x32xbf16>, vector<32x64xbf16>, vector<8x64xf32> -> vector<8x64xf32>
    %388 = vector.broadcast %1 : vector<1x64xf32> to vector<8x64xf32>
    %389 = arith.addf %387, %388 : vector<8x64xf32>
    %cst_124 = arith.constant 0.000000e+00 : f32
    %390 = vector.broadcast %cst_124 : f32 to vector<8x64xf32>
    %391 = arith.maximumf %389, %390 : vector<8x64xf32>
    %392 = arith.truncf %391 : vector<8x64xf32> to vector<8x64xbf16>
    %cst_125 = arith.constant dense<0.000000e+00> : vector<8x64xf32>
    %393 = tpu.matmul %392, %2, %cst_125 {dimension_numbers = #tpu.dot_dimension_numbers<[1], [0], [0], [1], [0, 0, 1, 1], [], []>} : vector<8x64xbf16>, vector<64x64xbf16>, vector<8x64xf32> -> vector<8x64xf32>
    %394 = vector.broadcast %3 : vector<1x64xf32> to vector<8x64xf32>
    %395 = arith.addf %393, %394 : vector<8x64xf32>
    %cst_126 = arith.constant 0.000000e+00 : f32
    %396 = vector.broadcast %cst_126 : f32 to vector<8x64xf32>
    %397 = arith.maximumf %395, %396 : vector<8x64xf32>
    %398 = arith.truncf %397 : vector<8x64xf32> to vector<8x64xbf16>
    %cst_127 = arith.constant dense<0.000000e+00> : vector<8x64xf32>
    %399 = tpu.matmul %398, %4, %cst_127 {dimension_numbers = #tpu.dot_dimension_numbers<[1], [0], [0], [1], [0, 0, 1, 1], [], []>} : vector<8x64xbf16>, vector<64x64xbf16>, vector<8x64xf32> -> vector<8x64xf32>
    %400 = vector.broadcast %5 : vector<1x64xf32> to vector<8x64xf32>
    %401 = arith.addf %399, %400 : vector<8x64xf32>
    %cst_128 = arith.constant 0.000000e+00 : f32
    %402 = vector.broadcast %cst_128 : f32 to vector<8x64xf32>
    %403 = arith.maximumf %401, %402 : vector<8x64xf32>
    %404 = arith.truncf %403 : vector<8x64xf32> to vector<8x64xbf16>
    %cst_129 = arith.constant dense<0.000000e+00> : vector<8x128xf32>
    %405 = tpu.matmul %404, %6, %cst_129 {dimension_numbers = #tpu.dot_dimension_numbers<[1], [0], [0], [1], [0, 0, 1, 1], [], []>} : vector<8x64xbf16>, vector<64x128xbf16>, vector<8x128xf32> -> vector<8x128xf32>
    %406 = vector.broadcast %7 : vector<1x128xf32> to vector<8x128xf32>
    %407 = arith.addf %405, %406 : vector<8x128xf32>
    %408 = math.tanh %407 : vector<8x128xf32>
    %409 = arith.mulf %408, %385 : vector<8x128xf32>
    %410 = vector.extract_strided_slice %409 {offsets = [0, 0], sizes = [8, 32], strides = [1, 1]} : vector<8x128xf32> to vector<8x32xf32>
    %411 = vector.extract_strided_slice %409 {offsets = [0, 32], sizes = [8, 32], strides = [1, 1]} : vector<8x128xf32> to vector<8x32xf32>
    %412 = arith.addf %410, %411 : vector<8x32xf32>
    %413 = vector.extract_strided_slice %409 {offsets = [0, 64], sizes = [8, 32], strides = [1, 1]} : vector<8x128xf32> to vector<8x32xf32>
    %414 = arith.addf %412, %413 : vector<8x32xf32>
    %415 = vector.extract_strided_slice %409 {offsets = [0, 96], sizes = [8, 32], strides = [1, 1]} : vector<8x128xf32> to vector<8x32xf32>
    %416 = arith.addf %414, %415 : vector<8x32xf32>
    %417 = arith.subf %343, %379 : vector<8x32xf32>
    %418 = arith.addf %417, %416 : vector<8x32xf32>
    %419 = arith.addf %310, %418 : vector<8x32xf32>
    %c11 = arith.constant 11 : index
    %c0_130 = arith.constant 0 : index
    %c0_131 = arith.constant 0 : index
    %420 = vector.load %arg1[%c11, %c0_130, %c0_131] : memref<28x8x128xf32, #tpu.memory_space<vmem>>, vector<1x8x128xf32>
    %421 = vector.shape_cast %420 : vector<1x8x128xf32> to vector<8x128xf32>
    %422 = arith.truncf %419 : vector<8x32xf32> to vector<8x32xbf16>
    %cst_132 = arith.constant dense<0.000000e+00> : vector<8x64xf32>
    %423 = tpu.matmul %422, %0, %cst_132 {dimension_numbers = #tpu.dot_dimension_numbers<[1], [0], [0], [1], [0, 0, 1, 1], [], []>} : vector<8x32xbf16>, vector<32x64xbf16>, vector<8x64xf32> -> vector<8x64xf32>
    %424 = vector.broadcast %1 : vector<1x64xf32> to vector<8x64xf32>
    %425 = arith.addf %423, %424 : vector<8x64xf32>
    %cst_133 = arith.constant 0.000000e+00 : f32
    %426 = vector.broadcast %cst_133 : f32 to vector<8x64xf32>
    %427 = arith.maximumf %425, %426 : vector<8x64xf32>
    %428 = arith.truncf %427 : vector<8x64xf32> to vector<8x64xbf16>
    %cst_134 = arith.constant dense<0.000000e+00> : vector<8x64xf32>
    %429 = tpu.matmul %428, %2, %cst_134 {dimension_numbers = #tpu.dot_dimension_numbers<[1], [0], [0], [1], [0, 0, 1, 1], [], []>} : vector<8x64xbf16>, vector<64x64xbf16>, vector<8x64xf32> -> vector<8x64xf32>
    %430 = vector.broadcast %3 : vector<1x64xf32> to vector<8x64xf32>
    %431 = arith.addf %429, %430 : vector<8x64xf32>
    %cst_135 = arith.constant 0.000000e+00 : f32
    %432 = vector.broadcast %cst_135 : f32 to vector<8x64xf32>
    %433 = arith.maximumf %431, %432 : vector<8x64xf32>
    %434 = arith.truncf %433 : vector<8x64xf32> to vector<8x64xbf16>
    %cst_136 = arith.constant dense<0.000000e+00> : vector<8x64xf32>
    %435 = tpu.matmul %434, %4, %cst_136 {dimension_numbers = #tpu.dot_dimension_numbers<[1], [0], [0], [1], [0, 0, 1, 1], [], []>} : vector<8x64xbf16>, vector<64x64xbf16>, vector<8x64xf32> -> vector<8x64xf32>
    %436 = vector.broadcast %5 : vector<1x64xf32> to vector<8x64xf32>
    %437 = arith.addf %435, %436 : vector<8x64xf32>
    %cst_137 = arith.constant 0.000000e+00 : f32
    %438 = vector.broadcast %cst_137 : f32 to vector<8x64xf32>
    %439 = arith.maximumf %437, %438 : vector<8x64xf32>
    %440 = arith.truncf %439 : vector<8x64xf32> to vector<8x64xbf16>
    %cst_138 = arith.constant dense<0.000000e+00> : vector<8x128xf32>
    %441 = tpu.matmul %440, %6, %cst_138 {dimension_numbers = #tpu.dot_dimension_numbers<[1], [0], [0], [1], [0, 0, 1, 1], [], []>} : vector<8x64xbf16>, vector<64x128xbf16>, vector<8x128xf32> -> vector<8x128xf32>
    %442 = vector.broadcast %7 : vector<1x128xf32> to vector<8x128xf32>
    %443 = arith.addf %441, %442 : vector<8x128xf32>
    %444 = math.tanh %443 : vector<8x128xf32>
    %445 = arith.mulf %444, %421 : vector<8x128xf32>
    %446 = vector.extract_strided_slice %445 {offsets = [0, 0], sizes = [8, 32], strides = [1, 1]} : vector<8x128xf32> to vector<8x32xf32>
    %447 = vector.extract_strided_slice %445 {offsets = [0, 32], sizes = [8, 32], strides = [1, 1]} : vector<8x128xf32> to vector<8x32xf32>
    %448 = arith.addf %446, %447 : vector<8x32xf32>
    %449 = vector.extract_strided_slice %445 {offsets = [0, 64], sizes = [8, 32], strides = [1, 1]} : vector<8x128xf32> to vector<8x32xf32>
    %450 = arith.addf %448, %449 : vector<8x32xf32>
    %451 = vector.extract_strided_slice %445 {offsets = [0, 96], sizes = [8, 32], strides = [1, 1]} : vector<8x128xf32> to vector<8x32xf32>
    %452 = arith.addf %450, %451 : vector<8x32xf32>
    %453 = arith.addf %379, %416 : vector<8x32xf32>
    %cst_139 = arith.constant 3.000000e+00 : f32
    %454 = vector.broadcast %cst_139 : f32 to vector<8x32xf32>
    %455 = arith.mulf %454, %453 : vector<8x32xf32>
    %456 = arith.addf %343, %455 : vector<8x32xf32>
    %457 = arith.addf %456, %452 : vector<8x32xf32>
    %cst_140 = arith.constant 1.250000e-01 : f32
    %458 = vector.broadcast %cst_140 : f32 to vector<8x32xf32>
    %459 = arith.mulf %457, %458 : vector<8x32xf32>
    %460 = arith.addf %310, %459 : vector<8x32xf32>
    %c12 = arith.constant 12 : index
    %c0_141 = arith.constant 0 : index
    %c0_142 = arith.constant 0 : index
    %461 = vector.load %arg1[%c12, %c0_141, %c0_142] : memref<28x8x128xf32, #tpu.memory_space<vmem>>, vector<1x8x128xf32>
    %462 = vector.shape_cast %461 : vector<1x8x128xf32> to vector<8x128xf32>
    %463 = arith.truncf %460 : vector<8x32xf32> to vector<8x32xbf16>
    %cst_143 = arith.constant dense<0.000000e+00> : vector<8x64xf32>
    %464 = tpu.matmul %463, %0, %cst_143 {dimension_numbers = #tpu.dot_dimension_numbers<[1], [0], [0], [1], [0, 0, 1, 1], [], []>} : vector<8x32xbf16>, vector<32x64xbf16>, vector<8x64xf32> -> vector<8x64xf32>
    %465 = vector.broadcast %1 : vector<1x64xf32> to vector<8x64xf32>
    %466 = arith.addf %464, %465 : vector<8x64xf32>
    %cst_144 = arith.constant 0.000000e+00 : f32
    %467 = vector.broadcast %cst_144 : f32 to vector<8x64xf32>
    %468 = arith.maximumf %466, %467 : vector<8x64xf32>
    %469 = arith.truncf %468 : vector<8x64xf32> to vector<8x64xbf16>
    %cst_145 = arith.constant dense<0.000000e+00> : vector<8x64xf32>
    %470 = tpu.matmul %469, %2, %cst_145 {dimension_numbers = #tpu.dot_dimension_numbers<[1], [0], [0], [1], [0, 0, 1, 1], [], []>} : vector<8x64xbf16>, vector<64x64xbf16>, vector<8x64xf32> -> vector<8x64xf32>
    %471 = vector.broadcast %3 : vector<1x64xf32> to vector<8x64xf32>
    %472 = arith.addf %470, %471 : vector<8x64xf32>
    %cst_146 = arith.constant 0.000000e+00 : f32
    %473 = vector.broadcast %cst_146 : f32 to vector<8x64xf32>
    %474 = arith.maximumf %472, %473 : vector<8x64xf32>
    %475 = arith.truncf %474 : vector<8x64xf32> to vector<8x64xbf16>
    %cst_147 = arith.constant dense<0.000000e+00> : vector<8x64xf32>
    %476 = tpu.matmul %475, %4, %cst_147 {dimension_numbers = #tpu.dot_dimension_numbers<[1], [0], [0], [1], [0, 0, 1, 1], [], []>} : vector<8x64xbf16>, vector<64x64xbf16>, vector<8x64xf32> -> vector<8x64xf32>
    %477 = vector.broadcast %5 : vector<1x64xf32> to vector<8x64xf32>
    %478 = arith.addf %476, %477 : vector<8x64xf32>
    %cst_148 = arith.constant 0.000000e+00 : f32
    %479 = vector.broadcast %cst_148 : f32 to vector<8x64xf32>
    %480 = arith.maximumf %478, %479 : vector<8x64xf32>
    %481 = arith.truncf %480 : vector<8x64xf32> to vector<8x64xbf16>
    %cst_149 = arith.constant dense<0.000000e+00> : vector<8x128xf32>
    %482 = tpu.matmul %481, %6, %cst_149 {dimension_numbers = #tpu.dot_dimension_numbers<[1], [0], [0], [1], [0, 0, 1, 1], [], []>} : vector<8x64xbf16>, vector<64x128xbf16>, vector<8x128xf32> -> vector<8x128xf32>
    %483 = vector.broadcast %7 : vector<1x128xf32> to vector<8x128xf32>
    %484 = arith.addf %482, %483 : vector<8x128xf32>
    %485 = math.tanh %484 : vector<8x128xf32>
    %486 = arith.mulf %485, %462 : vector<8x128xf32>
    %487 = vector.extract_strided_slice %486 {offsets = [0, 0], sizes = [8, 32], strides = [1, 1]} : vector<8x128xf32> to vector<8x32xf32>
    %488 = vector.extract_strided_slice %486 {offsets = [0, 32], sizes = [8, 32], strides = [1, 1]} : vector<8x128xf32> to vector<8x32xf32>
    %489 = arith.addf %487, %488 : vector<8x32xf32>
    %490 = vector.extract_strided_slice %486 {offsets = [0, 64], sizes = [8, 32], strides = [1, 1]} : vector<8x128xf32> to vector<8x32xf32>
    %491 = arith.addf %489, %490 : vector<8x32xf32>
    %492 = vector.extract_strided_slice %486 {offsets = [0, 96], sizes = [8, 32], strides = [1, 1]} : vector<8x128xf32> to vector<8x32xf32>
    %493 = arith.addf %491, %492 : vector<8x32xf32>
    %cst_150 = arith.constant 0.333333343 : f32
    %494 = vector.broadcast %cst_150 : f32 to vector<8x32xf32>
    %495 = arith.mulf %493, %494 : vector<8x32xf32>
    %496 = arith.addf %460, %495 : vector<8x32xf32>
    %c13 = arith.constant 13 : index
    %c0_151 = arith.constant 0 : index
    %c0_152 = arith.constant 0 : index
    %497 = vector.load %arg1[%c13, %c0_151, %c0_152] : memref<28x8x128xf32, #tpu.memory_space<vmem>>, vector<1x8x128xf32>
    %498 = vector.shape_cast %497 : vector<1x8x128xf32> to vector<8x128xf32>
    %499 = arith.truncf %496 : vector<8x32xf32> to vector<8x32xbf16>
    %cst_153 = arith.constant dense<0.000000e+00> : vector<8x64xf32>
    %500 = tpu.matmul %499, %0, %cst_153 {dimension_numbers = #tpu.dot_dimension_numbers<[1], [0], [0], [1], [0, 0, 1, 1], [], []>} : vector<8x32xbf16>, vector<32x64xbf16>, vector<8x64xf32> -> vector<8x64xf32>
    %501 = vector.broadcast %1 : vector<1x64xf32> to vector<8x64xf32>
    %502 = arith.addf %500, %501 : vector<8x64xf32>
    %cst_154 = arith.constant 0.000000e+00 : f32
    %503 = vector.broadcast %cst_154 : f32 to vector<8x64xf32>
    %504 = arith.maximumf %502, %503 : vector<8x64xf32>
    %505 = arith.truncf %504 : vector<8x64xf32> to vector<8x64xbf16>
    %cst_155 = arith.constant dense<0.000000e+00> : vector<8x64xf32>
    %506 = tpu.matmul %505, %2, %cst_155 {dimension_numbers = #tpu.dot_dimension_numbers<[1], [0], [0], [1], [0, 0, 1, 1], [], []>} : vector<8x64xbf16>, vector<64x64xbf16>, vector<8x64xf32> -> vector<8x64xf32>
    %507 = vector.broadcast %3 : vector<1x64xf32> to vector<8x64xf32>
    %508 = arith.addf %506, %507 : vector<8x64xf32>
    %cst_156 = arith.constant 0.000000e+00 : f32
    %509 = vector.broadcast %cst_156 : f32 to vector<8x64xf32>
    %510 = arith.maximumf %508, %509 : vector<8x64xf32>
    %511 = arith.truncf %510 : vector<8x64xf32> to vector<8x64xbf16>
    %cst_157 = arith.constant dense<0.000000e+00> : vector<8x64xf32>
    %512 = tpu.matmul %511, %4, %cst_157 {dimension_numbers = #tpu.dot_dimension_numbers<[1], [0], [0], [1], [0, 0, 1, 1], [], []>} : vector<8x64xbf16>, vector<64x64xbf16>, vector<8x64xf32> -> vector<8x64xf32>
    %513 = vector.broadcast %5 : vector<1x64xf32> to vector<8x64xf32>
    %514 = arith.addf %512, %513 : vector<8x64xf32>
    %cst_158 = arith.constant 0.000000e+00 : f32
    %515 = vector.broadcast %cst_158 : f32 to vector<8x64xf32>
    %516 = arith.maximumf %514, %515 : vector<8x64xf32>
    %517 = arith.truncf %516 : vector<8x64xf32> to vector<8x64xbf16>
    %cst_159 = arith.constant dense<0.000000e+00> : vector<8x128xf32>
    %518 = tpu.matmul %517, %6, %cst_159 {dimension_numbers = #tpu.dot_dimension_numbers<[1], [0], [0], [1], [0, 0, 1, 1], [], []>} : vector<8x64xbf16>, vector<64x128xbf16>, vector<8x128xf32> -> vector<8x128xf32>
    %519 = vector.broadcast %7 : vector<1x128xf32> to vector<8x128xf32>
    %520 = arith.addf %518, %519 : vector<8x128xf32>
    %521 = math.tanh %520 : vector<8x128xf32>
    %522 = arith.mulf %521, %498 : vector<8x128xf32>
    %523 = vector.extract_strided_slice %522 {offsets = [0, 0], sizes = [8, 32], strides = [1, 1]} : vector<8x128xf32> to vector<8x32xf32>
    %524 = vector.extract_strided_slice %522 {offsets = [0, 32], sizes = [8, 32], strides = [1, 1]} : vector<8x128xf32> to vector<8x32xf32>
    %525 = arith.addf %523, %524 : vector<8x32xf32>
    %526 = vector.extract_strided_slice %522 {offsets = [0, 64], sizes = [8, 32], strides = [1, 1]} : vector<8x128xf32> to vector<8x32xf32>
    %527 = arith.addf %525, %526 : vector<8x32xf32>
    %528 = vector.extract_strided_slice %522 {offsets = [0, 96], sizes = [8, 32], strides = [1, 1]} : vector<8x128xf32> to vector<8x32xf32>
    %529 = arith.addf %527, %528 : vector<8x32xf32>
    %cst_160 = arith.constant 0.333333343 : f32
    %530 = vector.broadcast %cst_160 : f32 to vector<8x32xf32>
    %531 = arith.mulf %493, %530 : vector<8x32xf32>
    %532 = arith.subf %529, %531 : vector<8x32xf32>
    %533 = arith.addf %460, %532 : vector<8x32xf32>
    %c14 = arith.constant 14 : index
    %c0_161 = arith.constant 0 : index
    %c0_162 = arith.constant 0 : index
    %534 = vector.load %arg1[%c14, %c0_161, %c0_162] : memref<28x8x128xf32, #tpu.memory_space<vmem>>, vector<1x8x128xf32>
    %535 = vector.shape_cast %534 : vector<1x8x128xf32> to vector<8x128xf32>
    %536 = arith.truncf %533 : vector<8x32xf32> to vector<8x32xbf16>
    %cst_163 = arith.constant dense<0.000000e+00> : vector<8x64xf32>
    %537 = tpu.matmul %536, %0, %cst_163 {dimension_numbers = #tpu.dot_dimension_numbers<[1], [0], [0], [1], [0, 0, 1, 1], [], []>} : vector<8x32xbf16>, vector<32x64xbf16>, vector<8x64xf32> -> vector<8x64xf32>
    %538 = vector.broadcast %1 : vector<1x64xf32> to vector<8x64xf32>
    %539 = arith.addf %537, %538 : vector<8x64xf32>
    %cst_164 = arith.constant 0.000000e+00 : f32
    %540 = vector.broadcast %cst_164 : f32 to vector<8x64xf32>
    %541 = arith.maximumf %539, %540 : vector<8x64xf32>
    %542 = arith.truncf %541 : vector<8x64xf32> to vector<8x64xbf16>
    %cst_165 = arith.constant dense<0.000000e+00> : vector<8x64xf32>
    %543 = tpu.matmul %542, %2, %cst_165 {dimension_numbers = #tpu.dot_dimension_numbers<[1], [0], [0], [1], [0, 0, 1, 1], [], []>} : vector<8x64xbf16>, vector<64x64xbf16>, vector<8x64xf32> -> vector<8x64xf32>
    %544 = vector.broadcast %3 : vector<1x64xf32> to vector<8x64xf32>
    %545 = arith.addf %543, %544 : vector<8x64xf32>
    %cst_166 = arith.constant 0.000000e+00 : f32
    %546 = vector.broadcast %cst_166 : f32 to vector<8x64xf32>
    %547 = arith.maximumf %545, %546 : vector<8x64xf32>
    %548 = arith.truncf %547 : vector<8x64xf32> to vector<8x64xbf16>
    %cst_167 = arith.constant dense<0.000000e+00> : vector<8x64xf32>
    %549 = tpu.matmul %548, %4, %cst_167 {dimension_numbers = #tpu.dot_dimension_numbers<[1], [0], [0], [1], [0, 0, 1, 1], [], []>} : vector<8x64xbf16>, vector<64x64xbf16>, vector<8x64xf32> -> vector<8x64xf32>
    %550 = vector.broadcast %5 : vector<1x64xf32> to vector<8x64xf32>
    %551 = arith.addf %549, %550 : vector<8x64xf32>
    %cst_168 = arith.constant 0.000000e+00 : f32
    %552 = vector.broadcast %cst_168 : f32 to vector<8x64xf32>
    %553 = arith.maximumf %551, %552 : vector<8x64xf32>
    %554 = arith.truncf %553 : vector<8x64xf32> to vector<8x64xbf16>
    %cst_169 = arith.constant dense<0.000000e+00> : vector<8x128xf32>
    %555 = tpu.matmul %554, %6, %cst_169 {dimension_numbers = #tpu.dot_dimension_numbers<[1], [0], [0], [1], [0, 0, 1, 1], [], []>} : vector<8x64xbf16>, vector<64x128xbf16>, vector<8x128xf32> -> vector<8x128xf32>
    %556 = vector.broadcast %7 : vector<1x128xf32> to vector<8x128xf32>
    %557 = arith.addf %555, %556 : vector<8x128xf32>
    %558 = math.tanh %557 : vector<8x128xf32>
    %559 = arith.mulf %558, %535 : vector<8x128xf32>
    %560 = vector.extract_strided_slice %559 {offsets = [0, 0], sizes = [8, 32], strides = [1, 1]} : vector<8x128xf32> to vector<8x32xf32>
    %561 = vector.extract_strided_slice %559 {offsets = [0, 32], sizes = [8, 32], strides = [1, 1]} : vector<8x128xf32> to vector<8x32xf32>
    %562 = arith.addf %560, %561 : vector<8x32xf32>
    %563 = vector.extract_strided_slice %559 {offsets = [0, 64], sizes = [8, 32], strides = [1, 1]} : vector<8x128xf32> to vector<8x32xf32>
    %564 = arith.addf %562, %563 : vector<8x32xf32>
    %565 = vector.extract_strided_slice %559 {offsets = [0, 96], sizes = [8, 32], strides = [1, 1]} : vector<8x128xf32> to vector<8x32xf32>
    %566 = arith.addf %564, %565 : vector<8x32xf32>
    %567 = arith.subf %493, %529 : vector<8x32xf32>
    %568 = arith.addf %567, %566 : vector<8x32xf32>
    %569 = arith.addf %460, %568 : vector<8x32xf32>
    %c15 = arith.constant 15 : index
    %c0_170 = arith.constant 0 : index
    %c0_171 = arith.constant 0 : index
    %570 = vector.load %arg1[%c15, %c0_170, %c0_171] : memref<28x8x128xf32, #tpu.memory_space<vmem>>, vector<1x8x128xf32>
    %571 = vector.shape_cast %570 : vector<1x8x128xf32> to vector<8x128xf32>
    %572 = arith.truncf %569 : vector<8x32xf32> to vector<8x32xbf16>
    %cst_172 = arith.constant dense<0.000000e+00> : vector<8x64xf32>
    %573 = tpu.matmul %572, %0, %cst_172 {dimension_numbers = #tpu.dot_dimension_numbers<[1], [0], [0], [1], [0, 0, 1, 1], [], []>} : vector<8x32xbf16>, vector<32x64xbf16>, vector<8x64xf32> -> vector<8x64xf32>
    %574 = vector.broadcast %1 : vector<1x64xf32> to vector<8x64xf32>
    %575 = arith.addf %573, %574 : vector<8x64xf32>
    %cst_173 = arith.constant 0.000000e+00 : f32
    %576 = vector.broadcast %cst_173 : f32 to vector<8x64xf32>
    %577 = arith.maximumf %575, %576 : vector<8x64xf32>
    %578 = arith.truncf %577 : vector<8x64xf32> to vector<8x64xbf16>
    %cst_174 = arith.constant dense<0.000000e+00> : vector<8x64xf32>
    %579 = tpu.matmul %578, %2, %cst_174 {dimension_numbers = #tpu.dot_dimension_numbers<[1], [0], [0], [1], [0, 0, 1, 1], [], []>} : vector<8x64xbf16>, vector<64x64xbf16>, vector<8x64xf32> -> vector<8x64xf32>
    %580 = vector.broadcast %3 : vector<1x64xf32> to vector<8x64xf32>
    %581 = arith.addf %579, %580 : vector<8x64xf32>
    %cst_175 = arith.constant 0.000000e+00 : f32
    %582 = vector.broadcast %cst_175 : f32 to vector<8x64xf32>
    %583 = arith.maximumf %581, %582 : vector<8x64xf32>
    %584 = arith.truncf %583 : vector<8x64xf32> to vector<8x64xbf16>
    %cst_176 = arith.constant dense<0.000000e+00> : vector<8x64xf32>
    %585 = tpu.matmul %584, %4, %cst_176 {dimension_numbers = #tpu.dot_dimension_numbers<[1], [0], [0], [1], [0, 0, 1, 1], [], []>} : vector<8x64xbf16>, vector<64x64xbf16>, vector<8x64xf32> -> vector<8x64xf32>
    %586 = vector.broadcast %5 : vector<1x64xf32> to vector<8x64xf32>
    %587 = arith.addf %585, %586 : vector<8x64xf32>
    %cst_177 = arith.constant 0.000000e+00 : f32
    %588 = vector.broadcast %cst_177 : f32 to vector<8x64xf32>
    %589 = arith.maximumf %587, %588 : vector<8x64xf32>
    %590 = arith.truncf %589 : vector<8x64xf32> to vector<8x64xbf16>
    %cst_178 = arith.constant dense<0.000000e+00> : vector<8x128xf32>
    %591 = tpu.matmul %590, %6, %cst_178 {dimension_numbers = #tpu.dot_dimension_numbers<[1], [0], [0], [1], [0, 0, 1, 1], [], []>} : vector<8x64xbf16>, vector<64x128xbf16>, vector<8x128xf32> -> vector<8x128xf32>
    %592 = vector.broadcast %7 : vector<1x128xf32> to vector<8x128xf32>
    %593 = arith.addf %591, %592 : vector<8x128xf32>
    %594 = math.tanh %593 : vector<8x128xf32>
    %595 = arith.mulf %594, %571 : vector<8x128xf32>
    %596 = vector.extract_strided_slice %595 {offsets = [0, 0], sizes = [8, 32], strides = [1, 1]} : vector<8x128xf32> to vector<8x32xf32>
    %597 = vector.extract_strided_slice %595 {offsets = [0, 32], sizes = [8, 32], strides = [1, 1]} : vector<8x128xf32> to vector<8x32xf32>
    %598 = arith.addf %596, %597 : vector<8x32xf32>
    %599 = vector.extract_strided_slice %595 {offsets = [0, 64], sizes = [8, 32], strides = [1, 1]} : vector<8x128xf32> to vector<8x32xf32>
    %600 = arith.addf %598, %599 : vector<8x32xf32>
    %601 = vector.extract_strided_slice %595 {offsets = [0, 96], sizes = [8, 32], strides = [1, 1]} : vector<8x128xf32> to vector<8x32xf32>
    %602 = arith.addf %600, %601 : vector<8x32xf32>
    %603 = arith.addf %529, %566 : vector<8x32xf32>
    %cst_179 = arith.constant 3.000000e+00 : f32
    %604 = vector.broadcast %cst_179 : f32 to vector<8x32xf32>
    %605 = arith.mulf %604, %603 : vector<8x32xf32>
    %606 = arith.addf %493, %605 : vector<8x32xf32>
    %607 = arith.addf %606, %602 : vector<8x32xf32>
    %cst_180 = arith.constant 1.250000e-01 : f32
    %608 = vector.broadcast %cst_180 : f32 to vector<8x32xf32>
    %609 = arith.mulf %607, %608 : vector<8x32xf32>
    %610 = arith.addf %460, %609 : vector<8x32xf32>
    %c16 = arith.constant 16 : index
    %c0_181 = arith.constant 0 : index
    %c0_182 = arith.constant 0 : index
    %611 = vector.load %arg1[%c16, %c0_181, %c0_182] : memref<28x8x128xf32, #tpu.memory_space<vmem>>, vector<1x8x128xf32>
    %612 = vector.shape_cast %611 : vector<1x8x128xf32> to vector<8x128xf32>
    %613 = arith.truncf %610 : vector<8x32xf32> to vector<8x32xbf16>
    %cst_183 = arith.constant dense<0.000000e+00> : vector<8x64xf32>
    %614 = tpu.matmul %613, %0, %cst_183 {dimension_numbers = #tpu.dot_dimension_numbers<[1], [0], [0], [1], [0, 0, 1, 1], [], []>} : vector<8x32xbf16>, vector<32x64xbf16>, vector<8x64xf32> -> vector<8x64xf32>
    %615 = vector.broadcast %1 : vector<1x64xf32> to vector<8x64xf32>
    %616 = arith.addf %614, %615 : vector<8x64xf32>
    %cst_184 = arith.constant 0.000000e+00 : f32
    %617 = vector.broadcast %cst_184 : f32 to vector<8x64xf32>
    %618 = arith.maximumf %616, %617 : vector<8x64xf32>
    %619 = arith.truncf %618 : vector<8x64xf32> to vector<8x64xbf16>
    %cst_185 = arith.constant dense<0.000000e+00> : vector<8x64xf32>
    %620 = tpu.matmul %619, %2, %cst_185 {dimension_numbers = #tpu.dot_dimension_numbers<[1], [0], [0], [1], [0, 0, 1, 1], [], []>} : vector<8x64xbf16>, vector<64x64xbf16>, vector<8x64xf32> -> vector<8x64xf32>
    %621 = vector.broadcast %3 : vector<1x64xf32> to vector<8x64xf32>
    %622 = arith.addf %620, %621 : vector<8x64xf32>
    %cst_186 = arith.constant 0.000000e+00 : f32
    %623 = vector.broadcast %cst_186 : f32 to vector<8x64xf32>
    %624 = arith.maximumf %622, %623 : vector<8x64xf32>
    %625 = arith.truncf %624 : vector<8x64xf32> to vector<8x64xbf16>
    %cst_187 = arith.constant dense<0.000000e+00> : vector<8x64xf32>
    %626 = tpu.matmul %625, %4, %cst_187 {dimension_numbers = #tpu.dot_dimension_numbers<[1], [0], [0], [1], [0, 0, 1, 1], [], []>} : vector<8x64xbf16>, vector<64x64xbf16>, vector<8x64xf32> -> vector<8x64xf32>
    %627 = vector.broadcast %5 : vector<1x64xf32> to vector<8x64xf32>
    %628 = arith.addf %626, %627 : vector<8x64xf32>
    %cst_188 = arith.constant 0.000000e+00 : f32
    %629 = vector.broadcast %cst_188 : f32 to vector<8x64xf32>
    %630 = arith.maximumf %628, %629 : vector<8x64xf32>
    %631 = arith.truncf %630 : vector<8x64xf32> to vector<8x64xbf16>
    %cst_189 = arith.constant dense<0.000000e+00> : vector<8x128xf32>
    %632 = tpu.matmul %631, %6, %cst_189 {dimension_numbers = #tpu.dot_dimension_numbers<[1], [0], [0], [1], [0, 0, 1, 1], [], []>} : vector<8x64xbf16>, vector<64x128xbf16>, vector<8x128xf32> -> vector<8x128xf32>
    %633 = vector.broadcast %7 : vector<1x128xf32> to vector<8x128xf32>
    %634 = arith.addf %632, %633 : vector<8x128xf32>
    %635 = math.tanh %634 : vector<8x128xf32>
    %636 = arith.mulf %635, %612 : vector<8x128xf32>
    %637 = vector.extract_strided_slice %636 {offsets = [0, 0], sizes = [8, 32], strides = [1, 1]} : vector<8x128xf32> to vector<8x32xf32>
    %638 = vector.extract_strided_slice %636 {offsets = [0, 32], sizes = [8, 32], strides = [1, 1]} : vector<8x128xf32> to vector<8x32xf32>
    %639 = arith.addf %637, %638 : vector<8x32xf32>
    %640 = vector.extract_strided_slice %636 {offsets = [0, 64], sizes = [8, 32], strides = [1, 1]} : vector<8x128xf32> to vector<8x32xf32>
    %641 = arith.addf %639, %640 : vector<8x32xf32>
    %642 = vector.extract_strided_slice %636 {offsets = [0, 96], sizes = [8, 32], strides = [1, 1]} : vector<8x128xf32> to vector<8x32xf32>
    %643 = arith.addf %641, %642 : vector<8x32xf32>
    %cst_190 = arith.constant 0.333333343 : f32
    %644 = vector.broadcast %cst_190 : f32 to vector<8x32xf32>
    %645 = arith.mulf %643, %644 : vector<8x32xf32>
    %646 = arith.addf %610, %645 : vector<8x32xf32>
    %c17 = arith.constant 17 : index
    %c0_191 = arith.constant 0 : index
    %c0_192 = arith.constant 0 : index
    %647 = vector.load %arg1[%c17, %c0_191, %c0_192] : memref<28x8x128xf32, #tpu.memory_space<vmem>>, vector<1x8x128xf32>
    %648 = vector.shape_cast %647 : vector<1x8x128xf32> to vector<8x128xf32>
    %649 = arith.truncf %646 : vector<8x32xf32> to vector<8x32xbf16>
    %cst_193 = arith.constant dense<0.000000e+00> : vector<8x64xf32>
    %650 = tpu.matmul %649, %0, %cst_193 {dimension_numbers = #tpu.dot_dimension_numbers<[1], [0], [0], [1], [0, 0, 1, 1], [], []>} : vector<8x32xbf16>, vector<32x64xbf16>, vector<8x64xf32> -> vector<8x64xf32>
    %651 = vector.broadcast %1 : vector<1x64xf32> to vector<8x64xf32>
    %652 = arith.addf %650, %651 : vector<8x64xf32>
    %cst_194 = arith.constant 0.000000e+00 : f32
    %653 = vector.broadcast %cst_194 : f32 to vector<8x64xf32>
    %654 = arith.maximumf %652, %653 : vector<8x64xf32>
    %655 = arith.truncf %654 : vector<8x64xf32> to vector<8x64xbf16>
    %cst_195 = arith.constant dense<0.000000e+00> : vector<8x64xf32>
    %656 = tpu.matmul %655, %2, %cst_195 {dimension_numbers = #tpu.dot_dimension_numbers<[1], [0], [0], [1], [0, 0, 1, 1], [], []>} : vector<8x64xbf16>, vector<64x64xbf16>, vector<8x64xf32> -> vector<8x64xf32>
    %657 = vector.broadcast %3 : vector<1x64xf32> to vector<8x64xf32>
    %658 = arith.addf %656, %657 : vector<8x64xf32>
    %cst_196 = arith.constant 0.000000e+00 : f32
    %659 = vector.broadcast %cst_196 : f32 to vector<8x64xf32>
    %660 = arith.maximumf %658, %659 : vector<8x64xf32>
    %661 = arith.truncf %660 : vector<8x64xf32> to vector<8x64xbf16>
    %cst_197 = arith.constant dense<0.000000e+00> : vector<8x64xf32>
    %662 = tpu.matmul %661, %4, %cst_197 {dimension_numbers = #tpu.dot_dimension_numbers<[1], [0], [0], [1], [0, 0, 1, 1], [], []>} : vector<8x64xbf16>, vector<64x64xbf16>, vector<8x64xf32> -> vector<8x64xf32>
    %663 = vector.broadcast %5 : vector<1x64xf32> to vector<8x64xf32>
    %664 = arith.addf %662, %663 : vector<8x64xf32>
    %cst_198 = arith.constant 0.000000e+00 : f32
    %665 = vector.broadcast %cst_198 : f32 to vector<8x64xf32>
    %666 = arith.maximumf %664, %665 : vector<8x64xf32>
    %667 = arith.truncf %666 : vector<8x64xf32> to vector<8x64xbf16>
    %cst_199 = arith.constant dense<0.000000e+00> : vector<8x128xf32>
    %668 = tpu.matmul %667, %6, %cst_199 {dimension_numbers = #tpu.dot_dimension_numbers<[1], [0], [0], [1], [0, 0, 1, 1], [], []>} : vector<8x64xbf16>, vector<64x128xbf16>, vector<8x128xf32> -> vector<8x128xf32>
    %669 = vector.broadcast %7 : vector<1x128xf32> to vector<8x128xf32>
    %670 = arith.addf %668, %669 : vector<8x128xf32>
    %671 = math.tanh %670 : vector<8x128xf32>
    %672 = arith.mulf %671, %648 : vector<8x128xf32>
    %673 = vector.extract_strided_slice %672 {offsets = [0, 0], sizes = [8, 32], strides = [1, 1]} : vector<8x128xf32> to vector<8x32xf32>
    %674 = vector.extract_strided_slice %672 {offsets = [0, 32], sizes = [8, 32], strides = [1, 1]} : vector<8x128xf32> to vector<8x32xf32>
    %675 = arith.addf %673, %674 : vector<8x32xf32>
    %676 = vector.extract_strided_slice %672 {offsets = [0, 64], sizes = [8, 32], strides = [1, 1]} : vector<8x128xf32> to vector<8x32xf32>
    %677 = arith.addf %675, %676 : vector<8x32xf32>
    %678 = vector.extract_strided_slice %672 {offsets = [0, 96], sizes = [8, 32], strides = [1, 1]} : vector<8x128xf32> to vector<8x32xf32>
    %679 = arith.addf %677, %678 : vector<8x32xf32>
    %cst_200 = arith.constant 0.333333343 : f32
    %680 = vector.broadcast %cst_200 : f32 to vector<8x32xf32>
    %681 = arith.mulf %643, %680 : vector<8x32xf32>
    %682 = arith.subf %679, %681 : vector<8x32xf32>
    %683 = arith.addf %610, %682 : vector<8x32xf32>
    %c18 = arith.constant 18 : index
    %c0_201 = arith.constant 0 : index
    %c0_202 = arith.constant 0 : index
    %684 = vector.load %arg1[%c18, %c0_201, %c0_202] : memref<28x8x128xf32, #tpu.memory_space<vmem>>, vector<1x8x128xf32>
    %685 = vector.shape_cast %684 : vector<1x8x128xf32> to vector<8x128xf32>
    %686 = arith.truncf %683 : vector<8x32xf32> to vector<8x32xbf16>
    %cst_203 = arith.constant dense<0.000000e+00> : vector<8x64xf32>
    %687 = tpu.matmul %686, %0, %cst_203 {dimension_numbers = #tpu.dot_dimension_numbers<[1], [0], [0], [1], [0, 0, 1, 1], [], []>} : vector<8x32xbf16>, vector<32x64xbf16>, vector<8x64xf32> -> vector<8x64xf32>
    %688 = vector.broadcast %1 : vector<1x64xf32> to vector<8x64xf32>
    %689 = arith.addf %687, %688 : vector<8x64xf32>
    %cst_204 = arith.constant 0.000000e+00 : f32
    %690 = vector.broadcast %cst_204 : f32 to vector<8x64xf32>
    %691 = arith.maximumf %689, %690 : vector<8x64xf32>
    %692 = arith.truncf %691 : vector<8x64xf32> to vector<8x64xbf16>
    %cst_205 = arith.constant dense<0.000000e+00> : vector<8x64xf32>
    %693 = tpu.matmul %692, %2, %cst_205 {dimension_numbers = #tpu.dot_dimension_numbers<[1], [0], [0], [1], [0, 0, 1, 1], [], []>} : vector<8x64xbf16>, vector<64x64xbf16>, vector<8x64xf32> -> vector<8x64xf32>
    %694 = vector.broadcast %3 : vector<1x64xf32> to vector<8x64xf32>
    %695 = arith.addf %693, %694 : vector<8x64xf32>
    %cst_206 = arith.constant 0.000000e+00 : f32
    %696 = vector.broadcast %cst_206 : f32 to vector<8x64xf32>
    %697 = arith.maximumf %695, %696 : vector<8x64xf32>
    %698 = arith.truncf %697 : vector<8x64xf32> to vector<8x64xbf16>
    %cst_207 = arith.constant dense<0.000000e+00> : vector<8x64xf32>
    %699 = tpu.matmul %698, %4, %cst_207 {dimension_numbers = #tpu.dot_dimension_numbers<[1], [0], [0], [1], [0, 0, 1, 1], [], []>} : vector<8x64xbf16>, vector<64x64xbf16>, vector<8x64xf32> -> vector<8x64xf32>
    %700 = vector.broadcast %5 : vector<1x64xf32> to vector<8x64xf32>
    %701 = arith.addf %699, %700 : vector<8x64xf32>
    %cst_208 = arith.constant 0.000000e+00 : f32
    %702 = vector.broadcast %cst_208 : f32 to vector<8x64xf32>
    %703 = arith.maximumf %701, %702 : vector<8x64xf32>
    %704 = arith.truncf %703 : vector<8x64xf32> to vector<8x64xbf16>
    %cst_209 = arith.constant dense<0.000000e+00> : vector<8x128xf32>
    %705 = tpu.matmul %704, %6, %cst_209 {dimension_numbers = #tpu.dot_dimension_numbers<[1], [0], [0], [1], [0, 0, 1, 1], [], []>} : vector<8x64xbf16>, vector<64x128xbf16>, vector<8x128xf32> -> vector<8x128xf32>
    %706 = vector.broadcast %7 : vector<1x128xf32> to vector<8x128xf32>
    %707 = arith.addf %705, %706 : vector<8x128xf32>
    %708 = math.tanh %707 : vector<8x128xf32>
    %709 = arith.mulf %708, %685 : vector<8x128xf32>
    %710 = vector.extract_strided_slice %709 {offsets = [0, 0], sizes = [8, 32], strides = [1, 1]} : vector<8x128xf32> to vector<8x32xf32>
    %711 = vector.extract_strided_slice %709 {offsets = [0, 32], sizes = [8, 32], strides = [1, 1]} : vector<8x128xf32> to vector<8x32xf32>
    %712 = arith.addf %710, %711 : vector<8x32xf32>
    %713 = vector.extract_strided_slice %709 {offsets = [0, 64], sizes = [8, 32], strides = [1, 1]} : vector<8x128xf32> to vector<8x32xf32>
    %714 = arith.addf %712, %713 : vector<8x32xf32>
    %715 = vector.extract_strided_slice %709 {offsets = [0, 96], sizes = [8, 32], strides = [1, 1]} : vector<8x128xf32> to vector<8x32xf32>
    %716 = arith.addf %714, %715 : vector<8x32xf32>
    %717 = arith.subf %643, %679 : vector<8x32xf32>
    %718 = arith.addf %717, %716 : vector<8x32xf32>
    %719 = arith.addf %610, %718 : vector<8x32xf32>
    %c19 = arith.constant 19 : index
    %c0_210 = arith.constant 0 : index
    %c0_211 = arith.constant 0 : index
    %720 = vector.load %arg1[%c19, %c0_210, %c0_211] : memref<28x8x128xf32, #tpu.memory_space<vmem>>, vector<1x8x128xf32>
    %721 = vector.shape_cast %720 : vector<1x8x128xf32> to vector<8x128xf32>
    %722 = arith.truncf %719 : vector<8x32xf32> to vector<8x32xbf16>
    %cst_212 = arith.constant dense<0.000000e+00> : vector<8x64xf32>
    %723 = tpu.matmul %722, %0, %cst_212 {dimension_numbers = #tpu.dot_dimension_numbers<[1], [0], [0], [1], [0, 0, 1, 1], [], []>} : vector<8x32xbf16>, vector<32x64xbf16>, vector<8x64xf32> -> vector<8x64xf32>
    %724 = vector.broadcast %1 : vector<1x64xf32> to vector<8x64xf32>
    %725 = arith.addf %723, %724 : vector<8x64xf32>
    %cst_213 = arith.constant 0.000000e+00 : f32
    %726 = vector.broadcast %cst_213 : f32 to vector<8x64xf32>
    %727 = arith.maximumf %725, %726 : vector<8x64xf32>
    %728 = arith.truncf %727 : vector<8x64xf32> to vector<8x64xbf16>
    %cst_214 = arith.constant dense<0.000000e+00> : vector<8x64xf32>
    %729 = tpu.matmul %728, %2, %cst_214 {dimension_numbers = #tpu.dot_dimension_numbers<[1], [0], [0], [1], [0, 0, 1, 1], [], []>} : vector<8x64xbf16>, vector<64x64xbf16>, vector<8x64xf32> -> vector<8x64xf32>
    %730 = vector.broadcast %3 : vector<1x64xf32> to vector<8x64xf32>
    %731 = arith.addf %729, %730 : vector<8x64xf32>
    %cst_215 = arith.constant 0.000000e+00 : f32
    %732 = vector.broadcast %cst_215 : f32 to vector<8x64xf32>
    %733 = arith.maximumf %731, %732 : vector<8x64xf32>
    %734 = arith.truncf %733 : vector<8x64xf32> to vector<8x64xbf16>
    %cst_216 = arith.constant dense<0.000000e+00> : vector<8x64xf32>
    %735 = tpu.matmul %734, %4, %cst_216 {dimension_numbers = #tpu.dot_dimension_numbers<[1], [0], [0], [1], [0, 0, 1, 1], [], []>} : vector<8x64xbf16>, vector<64x64xbf16>, vector<8x64xf32> -> vector<8x64xf32>
    %736 = vector.broadcast %5 : vector<1x64xf32> to vector<8x64xf32>
    %737 = arith.addf %735, %736 : vector<8x64xf32>
    %cst_217 = arith.constant 0.000000e+00 : f32
    %738 = vector.broadcast %cst_217 : f32 to vector<8x64xf32>
    %739 = arith.maximumf %737, %738 : vector<8x64xf32>
    %740 = arith.truncf %739 : vector<8x64xf32> to vector<8x64xbf16>
    %cst_218 = arith.constant dense<0.000000e+00> : vector<8x128xf32>
    %741 = tpu.matmul %740, %6, %cst_218 {dimension_numbers = #tpu.dot_dimension_numbers<[1], [0], [0], [1], [0, 0, 1, 1], [], []>} : vector<8x64xbf16>, vector<64x128xbf16>, vector<8x128xf32> -> vector<8x128xf32>
    %742 = vector.broadcast %7 : vector<1x128xf32> to vector<8x128xf32>
    %743 = arith.addf %741, %742 : vector<8x128xf32>
    %744 = math.tanh %743 : vector<8x128xf32>
    %745 = arith.mulf %744, %721 : vector<8x128xf32>
    %746 = vector.extract_strided_slice %745 {offsets = [0, 0], sizes = [8, 32], strides = [1, 1]} : vector<8x128xf32> to vector<8x32xf32>
    %747 = vector.extract_strided_slice %745 {offsets = [0, 32], sizes = [8, 32], strides = [1, 1]} : vector<8x128xf32> to vector<8x32xf32>
    %748 = arith.addf %746, %747 : vector<8x32xf32>
    %749 = vector.extract_strided_slice %745 {offsets = [0, 64], sizes = [8, 32], strides = [1, 1]} : vector<8x128xf32> to vector<8x32xf32>
    %750 = arith.addf %748, %749 : vector<8x32xf32>
    %751 = vector.extract_strided_slice %745 {offsets = [0, 96], sizes = [8, 32], strides = [1, 1]} : vector<8x128xf32> to vector<8x32xf32>
    %752 = arith.addf %750, %751 : vector<8x32xf32>
    %753 = arith.addf %679, %716 : vector<8x32xf32>
    %cst_219 = arith.constant 3.000000e+00 : f32
    %754 = vector.broadcast %cst_219 : f32 to vector<8x32xf32>
    %755 = arith.mulf %754, %753 : vector<8x32xf32>
    %756 = arith.addf %643, %755 : vector<8x32xf32>
    %757 = arith.addf %756, %752 : vector<8x32xf32>
    %cst_220 = arith.constant 1.250000e-01 : f32
    %758 = vector.broadcast %cst_220 : f32 to vector<8x32xf32>
    %759 = arith.mulf %757, %758 : vector<8x32xf32>
    %760 = arith.addf %610, %759 : vector<8x32xf32>
    %c20 = arith.constant 20 : index
    %c0_221 = arith.constant 0 : index
    %c0_222 = arith.constant 0 : index
    %761 = vector.load %arg1[%c20, %c0_221, %c0_222] : memref<28x8x128xf32, #tpu.memory_space<vmem>>, vector<1x8x128xf32>
    %762 = vector.shape_cast %761 : vector<1x8x128xf32> to vector<8x128xf32>
    %763 = arith.truncf %760 : vector<8x32xf32> to vector<8x32xbf16>
    %cst_223 = arith.constant dense<0.000000e+00> : vector<8x64xf32>
    %764 = tpu.matmul %763, %0, %cst_223 {dimension_numbers = #tpu.dot_dimension_numbers<[1], [0], [0], [1], [0, 0, 1, 1], [], []>} : vector<8x32xbf16>, vector<32x64xbf16>, vector<8x64xf32> -> vector<8x64xf32>
    %765 = vector.broadcast %1 : vector<1x64xf32> to vector<8x64xf32>
    %766 = arith.addf %764, %765 : vector<8x64xf32>
    %cst_224 = arith.constant 0.000000e+00 : f32
    %767 = vector.broadcast %cst_224 : f32 to vector<8x64xf32>
    %768 = arith.maximumf %766, %767 : vector<8x64xf32>
    %769 = arith.truncf %768 : vector<8x64xf32> to vector<8x64xbf16>
    %cst_225 = arith.constant dense<0.000000e+00> : vector<8x64xf32>
    %770 = tpu.matmul %769, %2, %cst_225 {dimension_numbers = #tpu.dot_dimension_numbers<[1], [0], [0], [1], [0, 0, 1, 1], [], []>} : vector<8x64xbf16>, vector<64x64xbf16>, vector<8x64xf32> -> vector<8x64xf32>
    %771 = vector.broadcast %3 : vector<1x64xf32> to vector<8x64xf32>
    %772 = arith.addf %770, %771 : vector<8x64xf32>
    %cst_226 = arith.constant 0.000000e+00 : f32
    %773 = vector.broadcast %cst_226 : f32 to vector<8x64xf32>
    %774 = arith.maximumf %772, %773 : vector<8x64xf32>
    %775 = arith.truncf %774 : vector<8x64xf32> to vector<8x64xbf16>
    %cst_227 = arith.constant dense<0.000000e+00> : vector<8x64xf32>
    %776 = tpu.matmul %775, %4, %cst_227 {dimension_numbers = #tpu.dot_dimension_numbers<[1], [0], [0], [1], [0, 0, 1, 1], [], []>} : vector<8x64xbf16>, vector<64x64xbf16>, vector<8x64xf32> -> vector<8x64xf32>
    %777 = vector.broadcast %5 : vector<1x64xf32> to vector<8x64xf32>
    %778 = arith.addf %776, %777 : vector<8x64xf32>
    %cst_228 = arith.constant 0.000000e+00 : f32
    %779 = vector.broadcast %cst_228 : f32 to vector<8x64xf32>
    %780 = arith.maximumf %778, %779 : vector<8x64xf32>
    %781 = arith.truncf %780 : vector<8x64xf32> to vector<8x64xbf16>
    %cst_229 = arith.constant dense<0.000000e+00> : vector<8x128xf32>
    %782 = tpu.matmul %781, %6, %cst_229 {dimension_numbers = #tpu.dot_dimension_numbers<[1], [0], [0], [1], [0, 0, 1, 1], [], []>} : vector<8x64xbf16>, vector<64x128xbf16>, vector<8x128xf32> -> vector<8x128xf32>
    %783 = vector.broadcast %7 : vector<1x128xf32> to vector<8x128xf32>
    %784 = arith.addf %782, %783 : vector<8x128xf32>
    %785 = math.tanh %784 : vector<8x128xf32>
    %786 = arith.mulf %785, %762 : vector<8x128xf32>
    %787 = vector.extract_strided_slice %786 {offsets = [0, 0], sizes = [8, 32], strides = [1, 1]} : vector<8x128xf32> to vector<8x32xf32>
    %788 = vector.extract_strided_slice %786 {offsets = [0, 32], sizes = [8, 32], strides = [1, 1]} : vector<8x128xf32> to vector<8x32xf32>
    %789 = arith.addf %787, %788 : vector<8x32xf32>
    %790 = vector.extract_strided_slice %786 {offsets = [0, 64], sizes = [8, 32], strides = [1, 1]} : vector<8x128xf32> to vector<8x32xf32>
    %791 = arith.addf %789, %790 : vector<8x32xf32>
    %792 = vector.extract_strided_slice %786 {offsets = [0, 96], sizes = [8, 32], strides = [1, 1]} : vector<8x128xf32> to vector<8x32xf32>
    %793 = arith.addf %791, %792 : vector<8x32xf32>
    %cst_230 = arith.constant 0.333333343 : f32
    %794 = vector.broadcast %cst_230 : f32 to vector<8x32xf32>
    %795 = arith.mulf %793, %794 : vector<8x32xf32>
    %796 = arith.addf %760, %795 : vector<8x32xf32>
    %c21 = arith.constant 21 : index
    %c0_231 = arith.constant 0 : index
    %c0_232 = arith.constant 0 : index
    %797 = vector.load %arg1[%c21, %c0_231, %c0_232] : memref<28x8x128xf32, #tpu.memory_space<vmem>>, vector<1x8x128xf32>
    %798 = vector.shape_cast %797 : vector<1x8x128xf32> to vector<8x128xf32>
    %799 = arith.truncf %796 : vector<8x32xf32> to vector<8x32xbf16>
    %cst_233 = arith.constant dense<0.000000e+00> : vector<8x64xf32>
    %800 = tpu.matmul %799, %0, %cst_233 {dimension_numbers = #tpu.dot_dimension_numbers<[1], [0], [0], [1], [0, 0, 1, 1], [], []>} : vector<8x32xbf16>, vector<32x64xbf16>, vector<8x64xf32> -> vector<8x64xf32>
    %801 = vector.broadcast %1 : vector<1x64xf32> to vector<8x64xf32>
    %802 = arith.addf %800, %801 : vector<8x64xf32>
    %cst_234 = arith.constant 0.000000e+00 : f32
    %803 = vector.broadcast %cst_234 : f32 to vector<8x64xf32>
    %804 = arith.maximumf %802, %803 : vector<8x64xf32>
    %805 = arith.truncf %804 : vector<8x64xf32> to vector<8x64xbf16>
    %cst_235 = arith.constant dense<0.000000e+00> : vector<8x64xf32>
    %806 = tpu.matmul %805, %2, %cst_235 {dimension_numbers = #tpu.dot_dimension_numbers<[1], [0], [0], [1], [0, 0, 1, 1], [], []>} : vector<8x64xbf16>, vector<64x64xbf16>, vector<8x64xf32> -> vector<8x64xf32>
    %807 = vector.broadcast %3 : vector<1x64xf32> to vector<8x64xf32>
    %808 = arith.addf %806, %807 : vector<8x64xf32>
    %cst_236 = arith.constant 0.000000e+00 : f32
    %809 = vector.broadcast %cst_236 : f32 to vector<8x64xf32>
    %810 = arith.maximumf %808, %809 : vector<8x64xf32>
    %811 = arith.truncf %810 : vector<8x64xf32> to vector<8x64xbf16>
    %cst_237 = arith.constant dense<0.000000e+00> : vector<8x64xf32>
    %812 = tpu.matmul %811, %4, %cst_237 {dimension_numbers = #tpu.dot_dimension_numbers<[1], [0], [0], [1], [0, 0, 1, 1], [], []>} : vector<8x64xbf16>, vector<64x64xbf16>, vector<8x64xf32> -> vector<8x64xf32>
    %813 = vector.broadcast %5 : vector<1x64xf32> to vector<8x64xf32>
    %814 = arith.addf %812, %813 : vector<8x64xf32>
    %cst_238 = arith.constant 0.000000e+00 : f32
    %815 = vector.broadcast %cst_238 : f32 to vector<8x64xf32>
    %816 = arith.maximumf %814, %815 : vector<8x64xf32>
    %817 = arith.truncf %816 : vector<8x64xf32> to vector<8x64xbf16>
    %cst_239 = arith.constant dense<0.000000e+00> : vector<8x128xf32>
    %818 = tpu.matmul %817, %6, %cst_239 {dimension_numbers = #tpu.dot_dimension_numbers<[1], [0], [0], [1], [0, 0, 1, 1], [], []>} : vector<8x64xbf16>, vector<64x128xbf16>, vector<8x128xf32> -> vector<8x128xf32>
    %819 = vector.broadcast %7 : vector<1x128xf32> to vector<8x128xf32>
    %820 = arith.addf %818, %819 : vector<8x128xf32>
    %821 = math.tanh %820 : vector<8x128xf32>
    %822 = arith.mulf %821, %798 : vector<8x128xf32>
    %823 = vector.extract_strided_slice %822 {offsets = [0, 0], sizes = [8, 32], strides = [1, 1]} : vector<8x128xf32> to vector<8x32xf32>
    %824 = vector.extract_strided_slice %822 {offsets = [0, 32], sizes = [8, 32], strides = [1, 1]} : vector<8x128xf32> to vector<8x32xf32>
    %825 = arith.addf %823, %824 : vector<8x32xf32>
    %826 = vector.extract_strided_slice %822 {offsets = [0, 64], sizes = [8, 32], strides = [1, 1]} : vector<8x128xf32> to vector<8x32xf32>
    %827 = arith.addf %825, %826 : vector<8x32xf32>
    %828 = vector.extract_strided_slice %822 {offsets = [0, 96], sizes = [8, 32], strides = [1, 1]} : vector<8x128xf32> to vector<8x32xf32>
    %829 = arith.addf %827, %828 : vector<8x32xf32>
    %cst_240 = arith.constant 0.333333343 : f32
    %830 = vector.broadcast %cst_240 : f32 to vector<8x32xf32>
    %831 = arith.mulf %793, %830 : vector<8x32xf32>
    %832 = arith.subf %829, %831 : vector<8x32xf32>
    %833 = arith.addf %760, %832 : vector<8x32xf32>
    %c22 = arith.constant 22 : index
    %c0_241 = arith.constant 0 : index
    %c0_242 = arith.constant 0 : index
    %834 = vector.load %arg1[%c22, %c0_241, %c0_242] : memref<28x8x128xf32, #tpu.memory_space<vmem>>, vector<1x8x128xf32>
    %835 = vector.shape_cast %834 : vector<1x8x128xf32> to vector<8x128xf32>
    %836 = arith.truncf %833 : vector<8x32xf32> to vector<8x32xbf16>
    %cst_243 = arith.constant dense<0.000000e+00> : vector<8x64xf32>
    %837 = tpu.matmul %836, %0, %cst_243 {dimension_numbers = #tpu.dot_dimension_numbers<[1], [0], [0], [1], [0, 0, 1, 1], [], []>} : vector<8x32xbf16>, vector<32x64xbf16>, vector<8x64xf32> -> vector<8x64xf32>
    %838 = vector.broadcast %1 : vector<1x64xf32> to vector<8x64xf32>
    %839 = arith.addf %837, %838 : vector<8x64xf32>
    %cst_244 = arith.constant 0.000000e+00 : f32
    %840 = vector.broadcast %cst_244 : f32 to vector<8x64xf32>
    %841 = arith.maximumf %839, %840 : vector<8x64xf32>
    %842 = arith.truncf %841 : vector<8x64xf32> to vector<8x64xbf16>
    %cst_245 = arith.constant dense<0.000000e+00> : vector<8x64xf32>
    %843 = tpu.matmul %842, %2, %cst_245 {dimension_numbers = #tpu.dot_dimension_numbers<[1], [0], [0], [1], [0, 0, 1, 1], [], []>} : vector<8x64xbf16>, vector<64x64xbf16>, vector<8x64xf32> -> vector<8x64xf32>
    %844 = vector.broadcast %3 : vector<1x64xf32> to vector<8x64xf32>
    %845 = arith.addf %843, %844 : vector<8x64xf32>
    %cst_246 = arith.constant 0.000000e+00 : f32
    %846 = vector.broadcast %cst_246 : f32 to vector<8x64xf32>
    %847 = arith.maximumf %845, %846 : vector<8x64xf32>
    %848 = arith.truncf %847 : vector<8x64xf32> to vector<8x64xbf16>
    %cst_247 = arith.constant dense<0.000000e+00> : vector<8x64xf32>
    %849 = tpu.matmul %848, %4, %cst_247 {dimension_numbers = #tpu.dot_dimension_numbers<[1], [0], [0], [1], [0, 0, 1, 1], [], []>} : vector<8x64xbf16>, vector<64x64xbf16>, vector<8x64xf32> -> vector<8x64xf32>
    %850 = vector.broadcast %5 : vector<1x64xf32> to vector<8x64xf32>
    %851 = arith.addf %849, %850 : vector<8x64xf32>
    %cst_248 = arith.constant 0.000000e+00 : f32
    %852 = vector.broadcast %cst_248 : f32 to vector<8x64xf32>
    %853 = arith.maximumf %851, %852 : vector<8x64xf32>
    %854 = arith.truncf %853 : vector<8x64xf32> to vector<8x64xbf16>
    %cst_249 = arith.constant dense<0.000000e+00> : vector<8x128xf32>
    %855 = tpu.matmul %854, %6, %cst_249 {dimension_numbers = #tpu.dot_dimension_numbers<[1], [0], [0], [1], [0, 0, 1, 1], [], []>} : vector<8x64xbf16>, vector<64x128xbf16>, vector<8x128xf32> -> vector<8x128xf32>
    %856 = vector.broadcast %7 : vector<1x128xf32> to vector<8x128xf32>
    %857 = arith.addf %855, %856 : vector<8x128xf32>
    %858 = math.tanh %857 : vector<8x128xf32>
    %859 = arith.mulf %858, %835 : vector<8x128xf32>
    %860 = vector.extract_strided_slice %859 {offsets = [0, 0], sizes = [8, 32], strides = [1, 1]} : vector<8x128xf32> to vector<8x32xf32>
    %861 = vector.extract_strided_slice %859 {offsets = [0, 32], sizes = [8, 32], strides = [1, 1]} : vector<8x128xf32> to vector<8x32xf32>
    %862 = arith.addf %860, %861 : vector<8x32xf32>
    %863 = vector.extract_strided_slice %859 {offsets = [0, 64], sizes = [8, 32], strides = [1, 1]} : vector<8x128xf32> to vector<8x32xf32>
    %864 = arith.addf %862, %863 : vector<8x32xf32>
    %865 = vector.extract_strided_slice %859 {offsets = [0, 96], sizes = [8, 32], strides = [1, 1]} : vector<8x128xf32> to vector<8x32xf32>
    %866 = arith.addf %864, %865 : vector<8x32xf32>
    %867 = arith.subf %793, %829 : vector<8x32xf32>
    %868 = arith.addf %867, %866 : vector<8x32xf32>
    %869 = arith.addf %760, %868 : vector<8x32xf32>
    %c23 = arith.constant 23 : index
    %c0_250 = arith.constant 0 : index
    %c0_251 = arith.constant 0 : index
    %870 = vector.load %arg1[%c23, %c0_250, %c0_251] : memref<28x8x128xf32, #tpu.memory_space<vmem>>, vector<1x8x128xf32>
    %871 = vector.shape_cast %870 : vector<1x8x128xf32> to vector<8x128xf32>
    %872 = arith.truncf %869 : vector<8x32xf32> to vector<8x32xbf16>
    %cst_252 = arith.constant dense<0.000000e+00> : vector<8x64xf32>
    %873 = tpu.matmul %872, %0, %cst_252 {dimension_numbers = #tpu.dot_dimension_numbers<[1], [0], [0], [1], [0, 0, 1, 1], [], []>} : vector<8x32xbf16>, vector<32x64xbf16>, vector<8x64xf32> -> vector<8x64xf32>
    %874 = vector.broadcast %1 : vector<1x64xf32> to vector<8x64xf32>
    %875 = arith.addf %873, %874 : vector<8x64xf32>
    %cst_253 = arith.constant 0.000000e+00 : f32
    %876 = vector.broadcast %cst_253 : f32 to vector<8x64xf32>
    %877 = arith.maximumf %875, %876 : vector<8x64xf32>
    %878 = arith.truncf %877 : vector<8x64xf32> to vector<8x64xbf16>
    %cst_254 = arith.constant dense<0.000000e+00> : vector<8x64xf32>
    %879 = tpu.matmul %878, %2, %cst_254 {dimension_numbers = #tpu.dot_dimension_numbers<[1], [0], [0], [1], [0, 0, 1, 1], [], []>} : vector<8x64xbf16>, vector<64x64xbf16>, vector<8x64xf32> -> vector<8x64xf32>
    %880 = vector.broadcast %3 : vector<1x64xf32> to vector<8x64xf32>
    %881 = arith.addf %879, %880 : vector<8x64xf32>
    %cst_255 = arith.constant 0.000000e+00 : f32
    %882 = vector.broadcast %cst_255 : f32 to vector<8x64xf32>
    %883 = arith.maximumf %881, %882 : vector<8x64xf32>
    %884 = arith.truncf %883 : vector<8x64xf32> to vector<8x64xbf16>
    %cst_256 = arith.constant dense<0.000000e+00> : vector<8x64xf32>
    %885 = tpu.matmul %884, %4, %cst_256 {dimension_numbers = #tpu.dot_dimension_numbers<[1], [0], [0], [1], [0, 0, 1, 1], [], []>} : vector<8x64xbf16>, vector<64x64xbf16>, vector<8x64xf32> -> vector<8x64xf32>
    %886 = vector.broadcast %5 : vector<1x64xf32> to vector<8x64xf32>
    %887 = arith.addf %885, %886 : vector<8x64xf32>
    %cst_257 = arith.constant 0.000000e+00 : f32
    %888 = vector.broadcast %cst_257 : f32 to vector<8x64xf32>
    %889 = arith.maximumf %887, %888 : vector<8x64xf32>
    %890 = arith.truncf %889 : vector<8x64xf32> to vector<8x64xbf16>
    %cst_258 = arith.constant dense<0.000000e+00> : vector<8x128xf32>
    %891 = tpu.matmul %890, %6, %cst_258 {dimension_numbers = #tpu.dot_dimension_numbers<[1], [0], [0], [1], [0, 0, 1, 1], [], []>} : vector<8x64xbf16>, vector<64x128xbf16>, vector<8x128xf32> -> vector<8x128xf32>
    %892 = vector.broadcast %7 : vector<1x128xf32> to vector<8x128xf32>
    %893 = arith.addf %891, %892 : vector<8x128xf32>
    %894 = math.tanh %893 : vector<8x128xf32>
    %895 = arith.mulf %894, %871 : vector<8x128xf32>
    %896 = vector.extract_strided_slice %895 {offsets = [0, 0], sizes = [8, 32], strides = [1, 1]} : vector<8x128xf32> to vector<8x32xf32>
    %897 = vector.extract_strided_slice %895 {offsets = [0, 32], sizes = [8, 32], strides = [1, 1]} : vector<8x128xf32> to vector<8x32xf32>
    %898 = arith.addf %896, %897 : vector<8x32xf32>
    %899 = vector.extract_strided_slice %895 {offsets = [0, 64], sizes = [8, 32], strides = [1, 1]} : vector<8x128xf32> to vector<8x32xf32>
    %900 = arith.addf %898, %899 : vector<8x32xf32>
    %901 = vector.extract_strided_slice %895 {offsets = [0, 96], sizes = [8, 32], strides = [1, 1]} : vector<8x128xf32> to vector<8x32xf32>
    %902 = arith.addf %900, %901 : vector<8x32xf32>
    %903 = arith.addf %829, %866 : vector<8x32xf32>
    %cst_259 = arith.constant 3.000000e+00 : f32
    %904 = vector.broadcast %cst_259 : f32 to vector<8x32xf32>
    %905 = arith.mulf %904, %903 : vector<8x32xf32>
    %906 = arith.addf %793, %905 : vector<8x32xf32>
    %907 = arith.addf %906, %902 : vector<8x32xf32>
    %cst_260 = arith.constant 1.250000e-01 : f32
    %908 = vector.broadcast %cst_260 : f32 to vector<8x32xf32>
    %909 = arith.mulf %907, %908 : vector<8x32xf32>
    %910 = arith.addf %760, %909 : vector<8x32xf32>
    %c24 = arith.constant 24 : index
    %c0_261 = arith.constant 0 : index
    %c0_262 = arith.constant 0 : index
    %911 = vector.load %arg1[%c24, %c0_261, %c0_262] : memref<28x8x128xf32, #tpu.memory_space<vmem>>, vector<1x8x128xf32>
    %912 = vector.shape_cast %911 : vector<1x8x128xf32> to vector<8x128xf32>
    %913 = arith.truncf %910 : vector<8x32xf32> to vector<8x32xbf16>
    %cst_263 = arith.constant dense<0.000000e+00> : vector<8x64xf32>
    %914 = tpu.matmul %913, %0, %cst_263 {dimension_numbers = #tpu.dot_dimension_numbers<[1], [0], [0], [1], [0, 0, 1, 1], [], []>} : vector<8x32xbf16>, vector<32x64xbf16>, vector<8x64xf32> -> vector<8x64xf32>
    %915 = vector.broadcast %1 : vector<1x64xf32> to vector<8x64xf32>
    %916 = arith.addf %914, %915 : vector<8x64xf32>
    %cst_264 = arith.constant 0.000000e+00 : f32
    %917 = vector.broadcast %cst_264 : f32 to vector<8x64xf32>
    %918 = arith.maximumf %916, %917 : vector<8x64xf32>
    %919 = arith.truncf %918 : vector<8x64xf32> to vector<8x64xbf16>
    %cst_265 = arith.constant dense<0.000000e+00> : vector<8x64xf32>
    %920 = tpu.matmul %919, %2, %cst_265 {dimension_numbers = #tpu.dot_dimension_numbers<[1], [0], [0], [1], [0, 0, 1, 1], [], []>} : vector<8x64xbf16>, vector<64x64xbf16>, vector<8x64xf32> -> vector<8x64xf32>
    %921 = vector.broadcast %3 : vector<1x64xf32> to vector<8x64xf32>
    %922 = arith.addf %920, %921 : vector<8x64xf32>
    %cst_266 = arith.constant 0.000000e+00 : f32
    %923 = vector.broadcast %cst_266 : f32 to vector<8x64xf32>
    %924 = arith.maximumf %922, %923 : vector<8x64xf32>
    %925 = arith.truncf %924 : vector<8x64xf32> to vector<8x64xbf16>
    %cst_267 = arith.constant dense<0.000000e+00> : vector<8x64xf32>
    %926 = tpu.matmul %925, %4, %cst_267 {dimension_numbers = #tpu.dot_dimension_numbers<[1], [0], [0], [1], [0, 0, 1, 1], [], []>} : vector<8x64xbf16>, vector<64x64xbf16>, vector<8x64xf32> -> vector<8x64xf32>
    %927 = vector.broadcast %5 : vector<1x64xf32> to vector<8x64xf32>
    %928 = arith.addf %926, %927 : vector<8x64xf32>
    %cst_268 = arith.constant 0.000000e+00 : f32
    %929 = vector.broadcast %cst_268 : f32 to vector<8x64xf32>
    %930 = arith.maximumf %928, %929 : vector<8x64xf32>
    %931 = arith.truncf %930 : vector<8x64xf32> to vector<8x64xbf16>
    %cst_269 = arith.constant dense<0.000000e+00> : vector<8x128xf32>
    %932 = tpu.matmul %931, %6, %cst_269 {dimension_numbers = #tpu.dot_dimension_numbers<[1], [0], [0], [1], [0, 0, 1, 1], [], []>} : vector<8x64xbf16>, vector<64x128xbf16>, vector<8x128xf32> -> vector<8x128xf32>
    %933 = vector.broadcast %7 : vector<1x128xf32> to vector<8x128xf32>
    %934 = arith.addf %932, %933 : vector<8x128xf32>
    %935 = math.tanh %934 : vector<8x128xf32>
    %936 = arith.mulf %935, %912 : vector<8x128xf32>
    %937 = vector.extract_strided_slice %936 {offsets = [0, 0], sizes = [8, 32], strides = [1, 1]} : vector<8x128xf32> to vector<8x32xf32>
    %938 = vector.extract_strided_slice %936 {offsets = [0, 32], sizes = [8, 32], strides = [1, 1]} : vector<8x128xf32> to vector<8x32xf32>
    %939 = arith.addf %937, %938 : vector<8x32xf32>
    %940 = vector.extract_strided_slice %936 {offsets = [0, 64], sizes = [8, 32], strides = [1, 1]} : vector<8x128xf32> to vector<8x32xf32>
    %941 = arith.addf %939, %940 : vector<8x32xf32>
    %942 = vector.extract_strided_slice %936 {offsets = [0, 96], sizes = [8, 32], strides = [1, 1]} : vector<8x128xf32> to vector<8x32xf32>
    %943 = arith.addf %941, %942 : vector<8x32xf32>
    %cst_270 = arith.constant 0.333333343 : f32
    %944 = vector.broadcast %cst_270 : f32 to vector<8x32xf32>
    %945 = arith.mulf %943, %944 : vector<8x32xf32>
    %946 = arith.addf %910, %945 : vector<8x32xf32>
    %c25 = arith.constant 25 : index
    %c0_271 = arith.constant 0 : index
    %c0_272 = arith.constant 0 : index
    %947 = vector.load %arg1[%c25, %c0_271, %c0_272] : memref<28x8x128xf32, #tpu.memory_space<vmem>>, vector<1x8x128xf32>
    %948 = vector.shape_cast %947 : vector<1x8x128xf32> to vector<8x128xf32>
    %949 = arith.truncf %946 : vector<8x32xf32> to vector<8x32xbf16>
    %cst_273 = arith.constant dense<0.000000e+00> : vector<8x64xf32>
    %950 = tpu.matmul %949, %0, %cst_273 {dimension_numbers = #tpu.dot_dimension_numbers<[1], [0], [0], [1], [0, 0, 1, 1], [], []>} : vector<8x32xbf16>, vector<32x64xbf16>, vector<8x64xf32> -> vector<8x64xf32>
    %951 = vector.broadcast %1 : vector<1x64xf32> to vector<8x64xf32>
    %952 = arith.addf %950, %951 : vector<8x64xf32>
    %cst_274 = arith.constant 0.000000e+00 : f32
    %953 = vector.broadcast %cst_274 : f32 to vector<8x64xf32>
    %954 = arith.maximumf %952, %953 : vector<8x64xf32>
    %955 = arith.truncf %954 : vector<8x64xf32> to vector<8x64xbf16>
    %cst_275 = arith.constant dense<0.000000e+00> : vector<8x64xf32>
    %956 = tpu.matmul %955, %2, %cst_275 {dimension_numbers = #tpu.dot_dimension_numbers<[1], [0], [0], [1], [0, 0, 1, 1], [], []>} : vector<8x64xbf16>, vector<64x64xbf16>, vector<8x64xf32> -> vector<8x64xf32>
    %957 = vector.broadcast %3 : vector<1x64xf32> to vector<8x64xf32>
    %958 = arith.addf %956, %957 : vector<8x64xf32>
    %cst_276 = arith.constant 0.000000e+00 : f32
    %959 = vector.broadcast %cst_276 : f32 to vector<8x64xf32>
    %960 = arith.maximumf %958, %959 : vector<8x64xf32>
    %961 = arith.truncf %960 : vector<8x64xf32> to vector<8x64xbf16>
    %cst_277 = arith.constant dense<0.000000e+00> : vector<8x64xf32>
    %962 = tpu.matmul %961, %4, %cst_277 {dimension_numbers = #tpu.dot_dimension_numbers<[1], [0], [0], [1], [0, 0, 1, 1], [], []>} : vector<8x64xbf16>, vector<64x64xbf16>, vector<8x64xf32> -> vector<8x64xf32>
    %963 = vector.broadcast %5 : vector<1x64xf32> to vector<8x64xf32>
    %964 = arith.addf %962, %963 : vector<8x64xf32>
    %cst_278 = arith.constant 0.000000e+00 : f32
    %965 = vector.broadcast %cst_278 : f32 to vector<8x64xf32>
    %966 = arith.maximumf %964, %965 : vector<8x64xf32>
    %967 = arith.truncf %966 : vector<8x64xf32> to vector<8x64xbf16>
    %cst_279 = arith.constant dense<0.000000e+00> : vector<8x128xf32>
    %968 = tpu.matmul %967, %6, %cst_279 {dimension_numbers = #tpu.dot_dimension_numbers<[1], [0], [0], [1], [0, 0, 1, 1], [], []>} : vector<8x64xbf16>, vector<64x128xbf16>, vector<8x128xf32> -> vector<8x128xf32>
    %969 = vector.broadcast %7 : vector<1x128xf32> to vector<8x128xf32>
    %970 = arith.addf %968, %969 : vector<8x128xf32>
    %971 = math.tanh %970 : vector<8x128xf32>
    %972 = arith.mulf %971, %948 : vector<8x128xf32>
    %973 = vector.extract_strided_slice %972 {offsets = [0, 0], sizes = [8, 32], strides = [1, 1]} : vector<8x128xf32> to vector<8x32xf32>
    %974 = vector.extract_strided_slice %972 {offsets = [0, 32], sizes = [8, 32], strides = [1, 1]} : vector<8x128xf32> to vector<8x32xf32>
    %975 = arith.addf %973, %974 : vector<8x32xf32>
    %976 = vector.extract_strided_slice %972 {offsets = [0, 64], sizes = [8, 32], strides = [1, 1]} : vector<8x128xf32> to vector<8x32xf32>
    %977 = arith.addf %975, %976 : vector<8x32xf32>
    %978 = vector.extract_strided_slice %972 {offsets = [0, 96], sizes = [8, 32], strides = [1, 1]} : vector<8x128xf32> to vector<8x32xf32>
    %979 = arith.addf %977, %978 : vector<8x32xf32>
    %cst_280 = arith.constant 0.333333343 : f32
    %980 = vector.broadcast %cst_280 : f32 to vector<8x32xf32>
    %981 = arith.mulf %943, %980 : vector<8x32xf32>
    %982 = arith.subf %979, %981 : vector<8x32xf32>
    %983 = arith.addf %910, %982 : vector<8x32xf32>
    %c26 = arith.constant 26 : index
    %c0_281 = arith.constant 0 : index
    %c0_282 = arith.constant 0 : index
    %984 = vector.load %arg1[%c26, %c0_281, %c0_282] : memref<28x8x128xf32, #tpu.memory_space<vmem>>, vector<1x8x128xf32>
    %985 = vector.shape_cast %984 : vector<1x8x128xf32> to vector<8x128xf32>
    %986 = arith.truncf %983 : vector<8x32xf32> to vector<8x32xbf16>
    %cst_283 = arith.constant dense<0.000000e+00> : vector<8x64xf32>
    %987 = tpu.matmul %986, %0, %cst_283 {dimension_numbers = #tpu.dot_dimension_numbers<[1], [0], [0], [1], [0, 0, 1, 1], [], []>} : vector<8x32xbf16>, vector<32x64xbf16>, vector<8x64xf32> -> vector<8x64xf32>
    %988 = vector.broadcast %1 : vector<1x64xf32> to vector<8x64xf32>
    %989 = arith.addf %987, %988 : vector<8x64xf32>
    %cst_284 = arith.constant 0.000000e+00 : f32
    %990 = vector.broadcast %cst_284 : f32 to vector<8x64xf32>
    %991 = arith.maximumf %989, %990 : vector<8x64xf32>
    %992 = arith.truncf %991 : vector<8x64xf32> to vector<8x64xbf16>
    %cst_285 = arith.constant dense<0.000000e+00> : vector<8x64xf32>
    %993 = tpu.matmul %992, %2, %cst_285 {dimension_numbers = #tpu.dot_dimension_numbers<[1], [0], [0], [1], [0, 0, 1, 1], [], []>} : vector<8x64xbf16>, vector<64x64xbf16>, vector<8x64xf32> -> vector<8x64xf32>
    %994 = vector.broadcast %3 : vector<1x64xf32> to vector<8x64xf32>
    %995 = arith.addf %993, %994 : vector<8x64xf32>
    %cst_286 = arith.constant 0.000000e+00 : f32
    %996 = vector.broadcast %cst_286 : f32 to vector<8x64xf32>
    %997 = arith.maximumf %995, %996 : vector<8x64xf32>
    %998 = arith.truncf %997 : vector<8x64xf32> to vector<8x64xbf16>
    %cst_287 = arith.constant dense<0.000000e+00> : vector<8x64xf32>
    %999 = tpu.matmul %998, %4, %cst_287 {dimension_numbers = #tpu.dot_dimension_numbers<[1], [0], [0], [1], [0, 0, 1, 1], [], []>} : vector<8x64xbf16>, vector<64x64xbf16>, vector<8x64xf32> -> vector<8x64xf32>
    %1000 = vector.broadcast %5 : vector<1x64xf32> to vector<8x64xf32>
    %1001 = arith.addf %999, %1000 : vector<8x64xf32>
    %cst_288 = arith.constant 0.000000e+00 : f32
    %1002 = vector.broadcast %cst_288 : f32 to vector<8x64xf32>
    %1003 = arith.maximumf %1001, %1002 : vector<8x64xf32>
    %1004 = arith.truncf %1003 : vector<8x64xf32> to vector<8x64xbf16>
    %cst_289 = arith.constant dense<0.000000e+00> : vector<8x128xf32>
    %1005 = tpu.matmul %1004, %6, %cst_289 {dimension_numbers = #tpu.dot_dimension_numbers<[1], [0], [0], [1], [0, 0, 1, 1], [], []>} : vector<8x64xbf16>, vector<64x128xbf16>, vector<8x128xf32> -> vector<8x128xf32>
    %1006 = vector.broadcast %7 : vector<1x128xf32> to vector<8x128xf32>
    %1007 = arith.addf %1005, %1006 : vector<8x128xf32>
    %1008 = math.tanh %1007 : vector<8x128xf32>
    %1009 = arith.mulf %1008, %985 : vector<8x128xf32>
    %1010 = vector.extract_strided_slice %1009 {offsets = [0, 0], sizes = [8, 32], strides = [1, 1]} : vector<8x128xf32> to vector<8x32xf32>
    %1011 = vector.extract_strided_slice %1009 {offsets = [0, 32], sizes = [8, 32], strides = [1, 1]} : vector<8x128xf32> to vector<8x32xf32>
    %1012 = arith.addf %1010, %1011 : vector<8x32xf32>
    %1013 = vector.extract_strided_slice %1009 {offsets = [0, 64], sizes = [8, 32], strides = [1, 1]} : vector<8x128xf32> to vector<8x32xf32>
    %1014 = arith.addf %1012, %1013 : vector<8x32xf32>
    %1015 = vector.extract_strided_slice %1009 {offsets = [0, 96], sizes = [8, 32], strides = [1, 1]} : vector<8x128xf32> to vector<8x32xf32>
    %1016 = arith.addf %1014, %1015 : vector<8x32xf32>
    %1017 = arith.subf %943, %979 : vector<8x32xf32>
    %1018 = arith.addf %1017, %1016 : vector<8x32xf32>
    %1019 = arith.addf %910, %1018 : vector<8x32xf32>
    %c27 = arith.constant 27 : index
    %c0_290 = arith.constant 0 : index
    %c0_291 = arith.constant 0 : index
    %1020 = vector.load %arg1[%c27, %c0_290, %c0_291] : memref<28x8x128xf32, #tpu.memory_space<vmem>>, vector<1x8x128xf32>
    %1021 = vector.shape_cast %1020 : vector<1x8x128xf32> to vector<8x128xf32>
    %1022 = arith.truncf %1019 : vector<8x32xf32> to vector<8x32xbf16>
    %cst_292 = arith.constant dense<0.000000e+00> : vector<8x64xf32>
    %1023 = tpu.matmul %1022, %0, %cst_292 {dimension_numbers = #tpu.dot_dimension_numbers<[1], [0], [0], [1], [0, 0, 1, 1], [], []>} : vector<8x32xbf16>, vector<32x64xbf16>, vector<8x64xf32> -> vector<8x64xf32>
    %1024 = vector.broadcast %1 : vector<1x64xf32> to vector<8x64xf32>
    %1025 = arith.addf %1023, %1024 : vector<8x64xf32>
    %cst_293 = arith.constant 0.000000e+00 : f32
    %1026 = vector.broadcast %cst_293 : f32 to vector<8x64xf32>
    %1027 = arith.maximumf %1025, %1026 : vector<8x64xf32>
    %1028 = arith.truncf %1027 : vector<8x64xf32> to vector<8x64xbf16>
    %cst_294 = arith.constant dense<0.000000e+00> : vector<8x64xf32>
    %1029 = tpu.matmul %1028, %2, %cst_294 {dimension_numbers = #tpu.dot_dimension_numbers<[1], [0], [0], [1], [0, 0, 1, 1], [], []>} : vector<8x64xbf16>, vector<64x64xbf16>, vector<8x64xf32> -> vector<8x64xf32>
    %1030 = vector.broadcast %3 : vector<1x64xf32> to vector<8x64xf32>
    %1031 = arith.addf %1029, %1030 : vector<8x64xf32>
    %cst_295 = arith.constant 0.000000e+00 : f32
    %1032 = vector.broadcast %cst_295 : f32 to vector<8x64xf32>
    %1033 = arith.maximumf %1031, %1032 : vector<8x64xf32>
    %1034 = arith.truncf %1033 : vector<8x64xf32> to vector<8x64xbf16>
    %cst_296 = arith.constant dense<0.000000e+00> : vector<8x64xf32>
    %1035 = tpu.matmul %1034, %4, %cst_296 {dimension_numbers = #tpu.dot_dimension_numbers<[1], [0], [0], [1], [0, 0, 1, 1], [], []>} : vector<8x64xbf16>, vector<64x64xbf16>, vector<8x64xf32> -> vector<8x64xf32>
    %1036 = vector.broadcast %5 : vector<1x64xf32> to vector<8x64xf32>
    %1037 = arith.addf %1035, %1036 : vector<8x64xf32>
    %cst_297 = arith.constant 0.000000e+00 : f32
    %1038 = vector.broadcast %cst_297 : f32 to vector<8x64xf32>
    %1039 = arith.maximumf %1037, %1038 : vector<8x64xf32>
    %1040 = arith.truncf %1039 : vector<8x64xf32> to vector<8x64xbf16>
    %cst_298 = arith.constant dense<0.000000e+00> : vector<8x128xf32>
    %1041 = tpu.matmul %1040, %6, %cst_298 {dimension_numbers = #tpu.dot_dimension_numbers<[1], [0], [0], [1], [0, 0, 1, 1], [], []>} : vector<8x64xbf16>, vector<64x128xbf16>, vector<8x128xf32> -> vector<8x128xf32>
    %1042 = vector.broadcast %7 : vector<1x128xf32> to vector<8x128xf32>
    %1043 = arith.addf %1041, %1042 : vector<8x128xf32>
    %1044 = math.tanh %1043 : vector<8x128xf32>
    %1045 = arith.mulf %1044, %1021 : vector<8x128xf32>
    %1046 = vector.extract_strided_slice %1045 {offsets = [0, 0], sizes = [8, 32], strides = [1, 1]} : vector<8x128xf32> to vector<8x32xf32>
    %1047 = vector.extract_strided_slice %1045 {offsets = [0, 32], sizes = [8, 32], strides = [1, 1]} : vector<8x128xf32> to vector<8x32xf32>
    %1048 = arith.addf %1046, %1047 : vector<8x32xf32>
    %1049 = vector.extract_strided_slice %1045 {offsets = [0, 64], sizes = [8, 32], strides = [1, 1]} : vector<8x128xf32> to vector<8x32xf32>
    %1050 = arith.addf %1048, %1049 : vector<8x32xf32>
    %1051 = vector.extract_strided_slice %1045 {offsets = [0, 96], sizes = [8, 32], strides = [1, 1]} : vector<8x128xf32> to vector<8x32xf32>
    %1052 = arith.addf %1050, %1051 : vector<8x32xf32>
    %1053 = arith.addf %979, %1016 : vector<8x32xf32>
    %cst_299 = arith.constant 3.000000e+00 : f32
    %1054 = vector.broadcast %cst_299 : f32 to vector<8x32xf32>
    %1055 = arith.mulf %1054, %1053 : vector<8x32xf32>
    %1056 = arith.addf %943, %1055 : vector<8x32xf32>
    %1057 = arith.addf %1056, %1052 : vector<8x32xf32>
    %cst_300 = arith.constant 1.250000e-01 : f32
    %1058 = vector.broadcast %cst_300 : f32 to vector<8x32xf32>
    %1059 = arith.mulf %1057, %1058 : vector<8x32xf32>
    %1060 = arith.addf %910, %1059 : vector<8x32xf32>
    %1061 = arith.truncf %1060 : vector<8x32xf32> to vector<8x32xbf16>
    %cst_301 = arith.constant dense<0.000000e+00> : vector<8x128xf32>
    %1062 = tpu.matmul %1061, %8, %cst_301 {dimension_numbers = #tpu.dot_dimension_numbers<[1], [0], [0], [1], [0, 0, 1, 1], [], []>} : vector<8x32xbf16>, vector<32x128xbf16>, vector<8x128xf32> -> vector<8x128xf32>
    %1063 = vector.broadcast %9 : vector<1x128xf32> to vector<8x128xf32>
    %1064 = arith.addf %1062, %1063 : vector<8x128xf32>
    %c0_302 = arith.constant 0 : index
    %c0_303 = arith.constant 0 : index
    %1065 = vector.load %arg12[%c0_302, %c0_303] : memref<8x128xf32, #tpu.memory_space<vmem>>, vector<8x128xf32>
    tpu.vector_store %arg12[%c0_302, %c0_303], %1064 {strides = array<i32>} : memref<8x128xf32, #tpu.memory_space<vmem>>, vector<8x128xf32>,
    return
  }
}

</mosaic_0001>

<llo_original>
// kernel: neural_cde_forward.1
$region0: #{neural_cde_forward.1}
  #allocation0 [shape = 'u32[]', space=smem, size = 0x4, offset = 0x4, fixed_abs, tag = 'smem constant byte address 0x4 - core index']
  #allocation1 [shape = 'u32[72,128]{1,0:T(1,128)}', space=vmem, size = 0x9000, scoped, tag = 'internal scratch']
  %s0 = inlined_call_operand.vmem [shape: f32[8,32], index: 0, kind: input, shape index: {}]
  %s1 = inlined_call_operand.vmem [shape: f32[28,8,128], index: 1, kind: input, shape index: {}]
  %s2 = inlined_call_operand.vmem [shape: bf16[32,64], index: 2, kind: input, shape index: {}]
  %s3 = inlined_call_operand.vmem [shape: f32[1,64], index: 3, kind: input, shape index: {}]
  %s4 = inlined_call_operand.vmem [shape: bf16[64,64], index: 4, kind: input, shape index: {}]
  %s5 = inlined_call_operand.vmem [shape: f32[1,64], index: 5, kind: input, shape index: {}]
  %s6 = inlined_call_operand.vmem [shape: bf16[64,64], index: 6, kind: input, shape index: {}]
  %s7 = inlined_call_operand.vmem [shape: f32[1,64], index: 7, kind: input, shape index: {}]
  %s8 = inlined_call_operand.vmem [shape: bf16[64,128], index: 8, kind: input, shape index: {}]
  %s9 = inlined_call_operand.vmem [shape: f32[1,128], index: 9, kind: input, shape index: {}]
  %s10 = inlined_call_operand.vmem [shape: bf16[32,128], index: 10, kind: input, shape index: {}]
  %s11 = inlined_call_operand.vmem [shape: f32[1,128], index: 11, kind: input, shape index: {}]
  %s12 = inlined_call_operand.vmem [shape: f32[8,128], index: 12, kind: output, shape index: {}]
  %s13 = sld [smem:[#allocation0]]
  $region58: #{neural_cde_forward.1} parent=0
    _
  %s15 = ssub.s32 1, %s13
  %s16 = scalar_select 0, %s15, %s13
  // Predicated region
  $region2: #{neural_cde_forward.1} parent=0 // pred_check
    _
  $region3: #{neural_cde_forward.1} parent=0 // pred_check_branch
    %18 = sbr.rel (0) target = $region5
  $region4: #{neural_cde_forward.1} parent=0 // pred_region
    _
  $region5: #{neural_cde_forward.1} parent=0 // pred_fallthru
    _
  // Predicated region
  $region6: #{neural_cde_forward.1} parent=0 // pred_check
    _
  $region7: #{neural_cde_forward.1} parent=0 // pred_check_branch
    %20 = sbr.rel (0) target = $region9
  $region8: #{neural_cde_forward.1} parent=0 // pred_region
    _
  $region9: #{neural_cde_forward.1} parent=0 // pred_fallthru
    _
  // Predicated region
  $region10: #{neural_cde_forward.1} parent=0 // pred_check
    _
  $region11: #{neural_cde_forward.1} parent=0 // pred_check_branch
    %22 = sbr.rel (0) target = $region13
  $region12: #{neural_cde_forward.1} parent=0 // pred_region
    _
  $region13: #{neural_cde_forward.1} parent=0 // pred_fallthru
    _
  // Predicated region
  $region14: #{neural_cde_forward.1} parent=0 // pred_check
    _
  $region15: #{neural_cde_forward.1} parent=0 // pred_check_branch
    %24 = sbr.rel (0) target = $region17
  $region16: #{neural_cde_forward.1} parent=0 // pred_region
    _
  $region17: #{neural_cde_forward.1} parent=0 // pred_fallthru
    _
  // Predicated region
  $region18: #{neural_cde_forward.1} parent=0 // pred_check
    _
  $region19: #{neural_cde_forward.1} parent=0 // pred_check_branch
    %26 = sbr.rel (0) target = $region21
  $region20: #{neural_cde_forward.1} parent=0 // pred_region
    _
  $region21: #{neural_cde_forward.1} parent=0 // pred_fallthru
    _
  // Predicated region
  $region22: #{neural_cde_forward.1} parent=0 // pred_check
    _
  $region23: #{neural_cde_forward.1} parent=0 // pred_check_branch
    %28 = sbr.rel (0) target = $region25
  $region24: #{neural_cde_forward.1} parent=0 // pred_region
    _
  $region25: #{neural_cde_forward.1} parent=0 // pred_fallthru
    _
  // Predicated region
  $region26: #{neural_cde_forward.1} parent=0 // pred_check
    _
  $region27: #{neural_cde_forward.1} parent=0 // pred_check_branch
    %30 = sbr.rel (0) target = $region29
  $region28: #{neural_cde_forward.1} parent=0 // pred_region
    _
  $region29: #{neural_cde_forward.1} parent=0 // pred_fallthru
    _
  // Predicated region
  $region30: #{neural_cde_forward.1} parent=0 // pred_check
    _
  $region31: #{neural_cde_forward.1} parent=0 // pred_check_branch
    %32 = sbr.rel (0) target = $region33
  $region32: #{neural_cde_forward.1} parent=0 // pred_region
    _
  $region33: #{neural_cde_forward.1} parent=0 // pred_fallthru
    _
  // Predicated region
  $region34: #{neural_cde_forward.1} parent=0 // pred_check
    _
  $region35: #{neural_cde_forward.1} parent=0 // pred_check_branch
    %34 = sbr.rel (0) target = $region37
  $region36: #{neural_cde_forward.1} parent=0 // pred_region
    _
  $region37: #{neural_cde_forward.1} parent=0 // pred_fallthru
    _
  // Predicated region
  $region38: #{neural_cde_forward.1} parent=0 // pred_check
    _
  $region39: #{neural_cde_forward.1} parent=0 // pred_check_branch
    %36 = sbr.rel (0) target = $region41
  $region40: #{neural_cde_forward.1} parent=0 // pred_region
    _
  $region41: #{neural_cde_forward.1} parent=0 // pred_fallthru
    _
  // Predicated region
  $region42: #{neural_cde_forward.1} parent=0 // pred_check
    _
  $region43: #{neural_cde_forward.1} parent=0 // pred_check_branch
    %38 = sbr.rel (0) target = $region45
  $region44: #{neural_cde_forward.1} parent=0 // pred_region
    _
  $region45: #{neural_cde_forward.1} parent=0 // pred_fallthru
    _
  // Predicated region
  $region46: #{neural_cde_forward.1} parent=0 // pred_check
    _
  $region47: #{neural_cde_forward.1} parent=0 // pred_check_branch
    %40 = sbr.rel (0) target = $region49
  $region48: #{neural_cde_forward.1} parent=0 // pred_region
    _
  $region49: #{neural_cde_forward.1} parent=0 // pred_fallthru
    _
  %v42 = vld [vmem:[%s2] sm:$0xf]
  %v43 = vld [vmem:[%s2 + $0x4] sm:$0xf]
  %v44 = vld [vmem:[%s2 + $0x8] sm:$0xf]
  %v45 = vld [vmem:[%s2 + $0xc] sm:$0xf]
  %v46 = vld [vmem:[%s3] sm:$0x1]
  %v47 = vld [vmem:[%s4] sm:$0xf]
  %v48 = vld [vmem:[%s4 + $0x4] sm:$0xf]
  %v49 = vld [vmem:[%s4 + $0x8] sm:$0xf]
  %v50 = vld [vmem:[%s4 + $0xc] sm:$0xf]
  %v51 = vld [vmem:[%s4 + $0x10] sm:$0xf]
  %v52 = vld [vmem:[%s4 + $0x14] sm:$0xf]
  %v53 = vld [vmem:[%s4 + $0x18] sm:$0xf]
  %v54 = vld [vmem:[%s4 + $0x1c] sm:$0xf]
  %v55 = vld [vmem:[%s5] sm:$0x1]
  %v56 = vld [vmem:[%s6] sm:$0xf]
  %v57 = vld [vmem:[%s6 + $0x4] sm:$0xf]
  %v58 = vld [vmem:[%s6 + $0x8] sm:$0xf]
  %v59 = vld [vmem:[%s6 + $0xc] sm:$0xf]
  %v60 = vld [vmem:[%s6 + $0x10] sm:$0xf]
  %v61 = vld [vmem:[%s6 + $0x14] sm:$0xf]
  %v62 = vld [vmem:[%s6 + $0x18] sm:$0xf]
  %v63 = vld [vmem:[%s6 + $0x1c] sm:$0xf]
  %v64 = vld [vmem:[%s7] sm:$0x1]
  %v65 = vld [vmem:[%s8] sm:$0xf]
  %v66 = vld [vmem:[%s8 + $0x4] sm:$0xf]
  %v67 = vld [vmem:[%s8 + $0x8] sm:$0xf]
  %v68 = vld [vmem:[%s8 + $0xc] sm:$0xf]
  %v69 = vld [vmem:[%s8 + $0x10] sm:$0xf]
  %v70 = vld [vmem:[%s8 + $0x14] sm:$0xf]
  %v71 = vld [vmem:[%s8 + $0x18] sm:$0xf]
  %v72 = vld [vmem:[%s8 + $0x1c] sm:$0xf]
  %v73 = vld [vmem:[%s9] sm:$0x1]
  %v74 = vld [vmem:[%s10] sm:$0xf]
  %v75 = vld [vmem:[%s10 + $0x4] sm:$0xf]
  %v76 = vld [vmem:[%s10 + $0x8] sm:$0xf]
  %v77 = vld [vmem:[%s10 + $0xc] sm:$0xf]
  %v78 = vld [vmem:[%s11] sm:$0x1]
  %v79 = vld [vmem:[%s0] sm:$0xff]
  %v80 = vld [vmem:[%s1] sm:$0xff]
  %v81 = vpack.c.bf16 %v79, %v79
  %v83 = vperm.slane %v46, 0
  %v89 = vunpack.c.l.b16 %v42
  %v90 = vunpack.c.l.b16 %v43
  %v91 = vunpack.c.l.b16 %v44
  %v92 = vunpack.c.l.b16 %v45
  %v93 = vpack.c.b16 %v90, %v89
  %v94 = vpack.c.b16 %v92, %v91
  %vm97 = vcmask 261120
  %v99 = vsel %vm97, %v81, 0
  %101 = vmatpush.bf16.msra.mxu0 0
  %102 = vmatpush.bf16.msra.mxu0 0
  %103 = vmatpush.bf16.msra.mxu0 0
  %104 = vmatpush.bf16.msra.mxu0 0
  %105 = vmatpush.bf16.msra.mxu0 0
  %106 = vmatpush.bf16.msra.mxu0 0
  %107 = vmatpush.bf16.msra.mxu0 %v94
  %108 = vmatpush.bf16.msra.mxu0 %v93
  %109 = vmatmul.bf16.gmra.mxu0 %v99
  %v110 = vpop.f32.mrf.mxu0
  %v111 = vadd.f32 %v83, %v110
  %v112 = vpop.f32.mrf.mxu0
  %113 = vdwg.mxu0
  %v114 = vmax.f32 %v111, 0.0
  %v115 = vpack.c.bf16 %v114, %v114
  %v117 = vperm.slane %v55, 0
  %v127 = vunpack.c.l.b16 %v47
  %v128 = vunpack.c.l.b16 %v48
  %v129 = vunpack.c.l.b16 %v49
  %v130 = vunpack.c.l.b16 %v50
  %v131 = vunpack.c.l.b16 %v51
  %v132 = vunpack.c.l.b16 %v52
  %v133 = vunpack.c.l.b16 %v53
  %v134 = vunpack.c.l.b16 %v54
  %v135 = vpack.c.b16 %v128, %v127
  %v136 = vpack.c.b16 %v130, %v129
  %v137 = vpack.c.b16 %v132, %v131
  %v138 = vpack.c.b16 %v134, %v133
  %vm143 = vcmask 523264
  %v145 = vsel %vm143, %v115, 0
  %147 = vmatpush.bf16.msra.mxu0 0
  %148 = vmatpush.bf16.msra.mxu0 0
  %149 = vmatpush.bf16.msra.mxu0 0
  %150 = vmatpush.bf16.msra.mxu0 0
  %151 = vmatpush.bf16.msra.mxu0 %v138
  %152 = vmatpush.bf16.msra.mxu0 %v137
  %153 = vmatpush.bf16.msra.mxu0 %v136
  %154 = vmatpush.bf16.msra.mxu0 %v135
  %155 = vmatmul.bf16.gmra.mxu0 %v145
  %v156 = vpop.f32.mrf.mxu0
  %v157 = vadd.f32 %v117, %v156
  %v158 = vpop.f32.mrf.mxu0
  %159 = vdwg.mxu0
  %v160 = vmax.f32 %v157, 0.0
  %v161 = vpack.c.bf16 %v160, %v160
  %v163 = vperm.slane %v64, 0
  %v173 = vunpack.c.l.b16 %v56
  %v174 = vunpack.c.l.b16 %v57
  %v175 = vunpack.c.l.b16 %v58
  %v176 = vunpack.c.l.b16 %v59
  %v177 = vunpack.c.l.b16 %v60
  %v178 = vunpack.c.l.b16 %v61
  %v179 = vunpack.c.l.b16 %v62
  %v180 = vunpack.c.l.b16 %v63
  %v181 = vpack.c.b16 %v174, %v173
  %v182 = vpack.c.b16 %v176, %v175
  %v183 = vpack.c.b16 %v178, %v177
  %v184 = vpack.c.b16 %v180, %v179
  %v190 = vsel %vm143, %v161, 0
  %192 = vmatpush.bf16.msra.mxu0 0
  %193 = vmatpush.bf16.msra.mxu0 0
  %194 = vmatpush.bf16.msra.mxu0 0
  %195 = vmatpush.bf16.msra.mxu0 0
  %196 = vmatpush.bf16.msra.mxu0 %v184
  %197 = vmatpush.bf16.msra.mxu0 %v183
  %198 = vmatpush.bf16.msra.mxu0 %v182
  %199 = vmatpush.bf16.msra.mxu0 %v181
  %200 = vmatmul.bf16.gmra.mxu0 %v190
  %v201 = vpop.f32.mrf.mxu0
  %v202 = vadd.f32 %v163, %v201
  %v203 = vpop.f32.mrf.mxu0
  %204 = vdwg.mxu0
  %v205 = vmax.f32 %v202, 0.0
  %v206 = vpack.c.bf16 %v205, %v205
  %v208 = vperm.slane %v73, 0
  %v218 = vunpack.c.l.b16 %v65
  %v219 = vunpack.c.l.b16 %v66
  %v220 = vunpack.c.l.b16 %v67
  %v221 = vunpack.c.l.b16 %v68
  %v222 = vunpack.c.l.b16 %v69
  %v223 = vunpack.c.l.b16 %v70
  %v224 = vunpack.c.l.b16 %v71
  %v225 = vunpack.c.l.b16 %v72
  %v226 = vpack.c.b16 %v219, %v218
  %v227 = vpack.c.b16 %v221, %v220
  %v228 = vpack.c.b16 %v223, %v222
  %v229 = vpack.c.b16 %v225, %v224
  %v235 = vsel %vm143, %v206, 0
  %237 = vmatpush.bf16.msra.mxu0 0
  %238 = vmatpush.bf16.msra.mxu0 0
  %239 = vmatpush.bf16.msra.mxu0 0
  %240 = vmatpush.bf16.msra.mxu0 0
  %241 = vmatpush.bf16.msra.mxu0 %v229
  %242 = vmatpush.bf16.msra.mxu0 %v228
  %243 = vmatpush.bf16.msra.mxu0 %v227
  %244 = vmatpush.bf16.msra.mxu0 %v226
  %245 = vmatmul.bf16.gmra.mxu0 %v235
  %v246 = vpop.f32.mrf.mxu0
  %v247 = vadd.f32 %v208, %v246
  %v248 = vpop.f32.mrf.mxu0
  %249 = vdwg.mxu0
  %v250 = vtanh.pop %v247
  %v251 = vmul.f32 %v250, %v80
  %253 = vrot.lane.b32.xlu0 %v251, 96
  %v254 = vpop.permute.xlu0 %253
  %v256 = vadd.f32 %v251, %v254
  %257 = vrot.lane.b32.xlu0 %v251, 64
  %v258 = vpop.permute.xlu0 %257
  %v260 = vadd.f32 %v256, %v258
  %261 = vrot.lane.b32.xlu0 %v251, 32
  %v262 = vpop.permute.xlu0 %261
  %v264 = vadd.f32 %v260, %v262
  %v265 = vmul.f32 %v264, 0.33333334
  %v266 = vadd.f32 %v79, %v265
  %s267 = scalar_lea.vmem %s1, 8
  %v268 = vld [vmem:[%s267] sm:$0xff]
  %v269 = vpack.c.bf16 %v266, %v266
  %v271 = vsel %vm97, %v269, 0
  %273 = vmatpush.bf16.msra.mxu0 0
  %274 = vmatpush.bf16.msra.mxu0 0
  %275 = vmatpush.bf16.msra.mxu0 0
  %276 = vmatpush.bf16.msra.mxu0 0
  %277 = vmatpush.bf16.msra.mxu0 0
  %278 = vmatpush.bf16.msra.mxu0 0
  %279 = vmatpush.bf16.msra.mxu0 %v94
  %280 = vmatpush.bf16.msra.mxu0 %v93
  %281 = vmatmul.bf16.gmra.mxu0 %v271
  %v282 = vpop.f32.mrf.mxu0
  %v283 = vadd.f32 %v83, %v282
  %v284 = vpop.f32.mrf.mxu0
  %285 = vdwg.mxu0
  %v286 = vmax.f32 %v283, 0.0
  %v287 = vpack.c.bf16 %v286, %v286
  %v289 = vsel %vm143, %v287, 0
  %291 = vmatpush.bf16.msra.mxu0 0
  %292 = vmatpush.bf16.msra.mxu0 0
  %293 = vmatpush.bf16.msra.mxu0 0
  %294 = vmatpush.bf16.msra.mxu0 0
  %295 = vmatpush.bf16.msra.mxu0 %v138
  %296 = vmatpush.bf16.msra.mxu0 %v137
  %297 = vmatpush.bf16.msra.mxu0 %v136
  %298 = vmatpush.bf16.msra.mxu0 %v135
  %299 = vmatmul.bf16.gmra.mxu0 %v289
  %v300 = vpop.f32.mrf.mxu0
  %v301 = vadd.f32 %v117, %v300
  %v302 = vpop.f32.mrf.mxu0
  %303 = vdwg.mxu0
  %v304 = vmax.f32 %v301, 0.0
  %v305 = vpack.c.bf16 %v304, %v304
  %v307 = vsel %vm143, %v305, 0
  %309 = vmatpush.bf16.msra.mxu0 0
  %310 = vmatpush.bf16.msra.mxu0 0
  %311 = vmatpush.bf16.msra.mxu0 0
  %312 = vmatpush.bf16.msra.mxu0 0
  %313 = vmatpush.bf16.msra.mxu0 %v184
  %314 = vmatpush.bf16.msra.mxu0 %v183
  %315 = vmatpush.bf16.msra.mxu0 %v182
  %316 = vmatpush.bf16.msra.mxu0 %v181
  %317 = vmatmul.bf16.gmra.mxu0 %v307
  %v318 = vpop.f32.mrf.mxu0
  %v319 = vadd.f32 %v163, %v318
  %v320 = vpop.f32.mrf.mxu0
  %321 = vdwg.mxu0
  %v322 = vmax.f32 %v319, 0.0
  %v323 = vpack.c.bf16 %v322, %v322
  %v325 = vsel %vm143, %v323, 0
  %327 = vmatpush.bf16.msra.mxu0 0
  %328 = vmatpush.bf16.msra.mxu0 0
  %329 = vmatpush.bf16.msra.mxu0 0
  %330 = vmatpush.bf16.msra.mxu0 0
  %331 = vmatpush.bf16.msra.mxu0 %v229
  %332 = vmatpush.bf16.msra.mxu0 %v228
  %333 = vmatpush.bf16.msra.mxu0 %v227
  %334 = vmatpush.bf16.msra.mxu0 %v226
  %335 = vmatmul.bf16.gmra.mxu0 %v325
  %v336 = vpop.f32.mrf.mxu0
  %v337 = vadd.f32 %v208, %v336
  %v338 = vpop.f32.mrf.mxu0
  %339 = vdwg.mxu0
  %v340 = vtanh.pop %v337
  %v341 = vmul.f32 %v340, %v268
  %343 = vrot.lane.b32.xlu0 %v341, 96
  %v344 = vpop.permute.xlu0 %343
  %v346 = vadd.f32 %v341, %v344
  %347 = vrot.lane.b32.xlu0 %v341, 64
  %v348 = vpop.permute.xlu0 %347
  %v350 = vadd.f32 %v346, %v348
  %351 = vrot.lane.b32.xlu0 %v341, 32
  %v352 = vpop.permute.xlu0 %351
  %v354 = vadd.f32 %v350, %v352
  %v355 = vsub.f32 %v354, %v265
  %v356 = vadd.f32 %v79, %v355
  %s357 = scalar_lea.vmem %s1, 16
  %v358 = vld [vmem:[%s357] sm:$0xff]
  %v359 = vpack.c.bf16 %v356, %v356
  %v361 = vsel %vm97, %v359, 0
  %363 = vmatpush.bf16.msra.mxu0 0
  %364 = vmatpush.bf16.msra.mxu0 0
  %365 = vmatpush.bf16.msra.mxu0 0
  %366 = vmatpush.bf16.msra.mxu0 0
  %367 = vmatpush.bf16.msra.mxu0 0
  %368 = vmatpush.bf16.msra.mxu0 0
  %369 = vmatpush.bf16.msra.mxu0 %v94
  %370 = vmatpush.bf16.msra.mxu0 %v93
  %371 = vmatmul.bf16.gmra.mxu0 %v361
  %v372 = vpop.f32.mrf.mxu0
  %v373 = vadd.f32 %v83, %v372
  %v374 = vpop.f32.mrf.mxu0
  %375 = vdwg.mxu0
  %v376 = vmax.f32 %v373, 0.0
  %v377 = vpack.c.bf16 %v376, %v376
  %v379 = vsel %vm143, %v377, 0
  %381 = vmatpush.bf16.msra.mxu0 0
  %382 = vmatpush.bf16.msra.mxu0 0
  %383 = vmatpush.bf16.msra.mxu0 0
  %384 = vmatpush.bf16.msra.mxu0 0
  %385 = vmatpush.bf16.msra.mxu0 %v138
  %386 = vmatpush.bf16.msra.mxu0 %v137
  %387 = vmatpush.bf16.msra.mxu0 %v136
  %388 = vmatpush.bf16.msra.mxu0 %v135
  %389 = vmatmul.bf16.gmra.mxu0 %v379
  %v390 = vpop.f32.mrf.mxu0
  %v391 = vadd.f32 %v117, %v390
  %v392 = vpop.f32.mrf.mxu0
  %393 = vdwg.mxu0
  %v394 = vmax.f32 %v391, 0.0
  %v395 = vpack.c.bf16 %v394, %v394
  %v397 = vsel %vm143, %v395, 0
  %399 = vmatpush.bf16.msra.mxu0 0
  %400 = vmatpush.bf16.msra.mxu0 0
  %401 = vmatpush.bf16.msra.mxu0 0
  %402 = vmatpush.bf16.msra.mxu0 0
  %403 = vmatpush.bf16.msra.mxu0 %v184
  %404 = vmatpush.bf16.msra.mxu0 %v183
  %405 = vmatpush.bf16.msra.mxu0 %v182
  %406 = vmatpush.bf16.msra.mxu0 %v181
  %407 = vmatmul.bf16.gmra.mxu0 %v397
  %v408 = vpop.f32.mrf.mxu0
  %v409 = vadd.f32 %v163, %v408
  %v410 = vpop.f32.mrf.mxu0
  %411 = vdwg.mxu0
  %v412 = vmax.f32 %v409, 0.0
  %v413 = vpack.c.bf16 %v412, %v412
  %v415 = vsel %vm143, %v413, 0
  %417 = vmatpush.bf16.msra.mxu0 0
  %418 = vmatpush.bf16.msra.mxu0 0
  %419 = vmatpush.bf16.msra.mxu0 0
  %420 = vmatpush.bf16.msra.mxu0 0
  %421 = vmatpush.bf16.msra.mxu0 %v229
  %422 = vmatpush.bf16.msra.mxu0 %v228
  %423 = vmatpush.bf16.msra.mxu0 %v227
  %424 = vmatpush.bf16.msra.mxu0 %v226
  %425 = vmatmul.bf16.gmra.mxu0 %v415
  %v426 = vpop.f32.mrf.mxu0
  %v427 = vadd.f32 %v208, %v426
  %v428 = vpop.f32.mrf.mxu0
  %429 = vdwg.mxu0
  %v430 = vtanh.pop %v427
  %v431 = vmul.f32 %v430, %v358
  %433 = vrot.lane.b32.xlu0 %v431, 96
  %v434 = vpop.permute.xlu0 %433
  %v436 = vadd.f32 %v431, %v434
  %437 = vrot.lane.b32.xlu0 %v431, 64
  %v438 = vpop.permute.xlu0 %437
  %v440 = vadd.f32 %v436, %v438
  %441 = vrot.lane.b32.xlu0 %v431, 32
  %v442 = vpop.permute.xlu0 %441
  %v444 = vadd.f32 %v440, %v442
  %v445 = vsub.f32 %v264, %v354
  %v446 = vadd.f32 %v445, %v444
  %v447 = vadd.f32 %v79, %v446
  %s448 = scalar_lea.vmem %s1, 24
  %v449 = vld [vmem:[%s448] sm:$0xff]
  %v450 = vpack.c.bf16 %v447, %v447
  %v452 = vsel %vm97, %v450, 0
  %454 = vmatpush.bf16.msra.mxu0 0
  %455 = vmatpush.bf16.msra.mxu0 0
  %456 = vmatpush.bf16.msra.mxu0 0
  %457 = vmatpush.bf16.msra.mxu0 0
  %458 = vmatpush.bf16.msra.mxu0 0
  %459 = vmatpush.bf16.msra.mxu0 0
  %460 = vmatpush.bf16.msra.mxu0 %v94
  %461 = vmatpush.bf16.msra.mxu0 %v93
  %462 = vmatmul.bf16.gmra.mxu0 %v452
  %v463 = vpop.f32.mrf.mxu0
  %v464 = vadd.f32 %v83, %v463
  %v465 = vpop.f32.mrf.mxu0
  %466 = vdwg.mxu0
  %v467 = vmax.f32 %v464, 0.0
  %v468 = vpack.c.bf16 %v467, %v467
  %v470 = vsel %vm143, %v468, 0
  %472 = vmatpush.bf16.msra.mxu0 0
  %473 = vmatpush.bf16.msra.mxu0 0
  %474 = vmatpush.bf16.msra.mxu0 0
  %475 = vmatpush.bf16.msra.mxu0 0
  %476 = vmatpush.bf16.msra.mxu0 %v138
  %477 = vmatpush.bf16.msra.mxu0 %v137
  %478 = vmatpush.bf16.msra.mxu0 %v136
  %479 = vmatpush.bf16.msra.mxu0 %v135
  %480 = vmatmul.bf16.gmra.mxu0 %v470
  %v481 = vpop.f32.mrf.mxu0
  %v482 = vadd.f32 %v117, %v481
  %v483 = vpop.f32.mrf.mxu0
  %484 = vdwg.mxu0
  %v485 = vmax.f32 %v482, 0.0
  %v486 = vpack.c.bf16 %v485, %v485
  %v488 = vsel %vm143, %v486, 0
  %490 = vmatpush.bf16.msra.mxu0 0
  %491 = vmatpush.bf16.msra.mxu0 0
  %492 = vmatpush.bf16.msra.mxu0 0
  %493 = vmatpush.bf16.msra.mxu0 0
  %494 = vmatpush.bf16.msra.mxu0 %v184
  %495 = vmatpush.bf16.msra.mxu0 %v183
  %496 = vmatpush.bf16.msra.mxu0 %v182
  %497 = vmatpush.bf16.msra.mxu0 %v181
  %498 = vmatmul.bf16.gmra.mxu0 %v488
  %v499 = vpop.f32.mrf.mxu0
  %v500 = vadd.f32 %v163, %v499
  %v501 = vpop.f32.mrf.mxu0
  %502 = vdwg.mxu0
  %v503 = vmax.f32 %v500, 0.0
  %v504 = vpack.c.bf16 %v503, %v503
  %v506 = vsel %vm143, %v504, 0
  %508 = vmatpush.bf16.msra.mxu0 0
  %509 = vmatpush.bf16.msra.mxu0 0
  %510 = vmatpush.bf16.msra.mxu0 0
  %511 = vmatpush.bf16.msra.mxu0 0
  %512 = vmatpush.bf16.msra.mxu0 %v229
  %513 = vmatpush.bf16.msra.mxu0 %v228
  %514 = vmatpush.bf16.msra.mxu0 %v227
  %515 = vmatpush.bf16.msra.mxu0 %v226
  %516 = vmatmul.bf16.gmra.mxu0 %v506
  %v517 = vpop.f32.mrf.mxu0
  %v518 = vadd.f32 %v208, %v517
  %v519 = vpop.f32.mrf.mxu0
  %520 = vdwg.mxu0
  %v521 = vtanh.pop %v518
  %v522 = vmul.f32 %v521, %v449
  %524 = vrot.lane.b32.xlu0 %v522, 96
  %v525 = vpop.permute.xlu0 %524
  %v527 = vadd.f32 %v522, %v525
  %528 = vrot.lane.b32.xlu0 %v522, 64
  %v529 = vpop.permute.xlu0 %528
  %v531 = vadd.f32 %v527, %v529
  %532 = vrot.lane.b32.xlu0 %v522, 32
  %v533 = vpop.permute.xlu0 %532
  %v535 = vadd.f32 %v531, %v533
  %v536 = vadd.f32 %v354, %v444
  %v537 = vmul.f32 %v536, 3.0
  %v538 = vadd.f32 %v264, %v537
  %v539 = vadd.f32 %v538, %v535
  %v540 = vmul.f32 %v539, 0.125
  %v541 = vadd.f32 %v79, %v540
  %s542 = scalar_lea.vmem %s1, 32
  %v543 = vld [vmem:[%s542] sm:$0xff]
  %v544 = vpack.c.bf16 %v541, %v541
  %v546 = vsel %vm97, %v544, 0
  %548 = vmatpush.bf16.msra.mxu0 0
  %549 = vmatpush.bf16.msra.mxu0 0
  %550 = vmatpush.bf16.msra.mxu0 0
  %551 = vmatpush.bf16.msra.mxu0 0
  %552 = vmatpush.bf16.msra.mxu0 0
  %553 = vmatpush.bf16.msra.mxu0 0
  %554 = vmatpush.bf16.msra.mxu0 %v94
  %555 = vmatpush.bf16.msra.mxu0 %v93
  %556 = vmatmul.bf16.gmra.mxu0 %v546
  %v557 = vpop.f32.mrf.mxu0
  %v558 = vadd.f32 %v83, %v557
  %v559 = vpop.f32.mrf.mxu0
  %560 = vdwg.mxu0
  %v561 = vmax.f32 %v558, 0.0
  %v562 = vpack.c.bf16 %v561, %v561
  %v564 = vsel %vm143, %v562, 0
  %566 = vmatpush.bf16.msra.mxu0 0
  %567 = vmatpush.bf16.msra.mxu0 0
  %568 = vmatpush.bf16.msra.mxu0 0
  %569 = vmatpush.bf16.msra.mxu0 0
  %570 = vmatpush.bf16.msra.mxu0 %v138
  %571 = vmatpush.bf16.msra.mxu0 %v137
  %572 = vmatpush.bf16.msra.mxu0 %v136
  %573 = vmatpush.bf16.msra.mxu0 %v135
  %574 = vmatmul.bf16.gmra.mxu0 %v564
  %v575 = vpop.f32.mrf.mxu0
  %v576 = vadd.f32 %v117, %v575
  %v577 = vpop.f32.mrf.mxu0
  %578 = vdwg.mxu0
  %v579 = vmax.f32 %v576, 0.0
  %v580 = vpack.c.bf16 %v579, %v579
  %v582 = vsel %vm143, %v580, 0
  %584 = vmatpush.bf16.msra.mxu0 0
  %585 = vmatpush.bf16.msra.mxu0 0
  %586 = vmatpush.bf16.msra.mxu0 0
  %587 = vmatpush.bf16.msra.mxu0 0
  %588 = vmatpush.bf16.msra.mxu0 %v184
  %589 = vmatpush.bf16.msra.mxu0 %v183
  %590 = vmatpush.bf16.msra.mxu0 %v182
  %591 = vmatpush.bf16.msra.mxu0 %v181
  %592 = vmatmul.bf16.gmra.mxu0 %v582
  %v593 = vpop.f32.mrf.mxu0
  %v594 = vadd.f32 %v163, %v593
  %v595 = vpop.f32.mrf.mxu0
  %596 = vdwg.mxu0
  %v597 = vmax.f32 %v594, 0.0
  %v598 = vpack.c.bf16 %v597, %v597
  %v600 = vsel %vm143, %v598, 0
  %602 = vmatpush.bf16.msra.mxu0 0
  %603 = vmatpush.bf16.msra.mxu0 0
  %604 = vmatpush.bf16.msra.mxu0 0
  %605 = vmatpush.bf16.msra.mxu0 0
  %606 = vmatpush.bf16.msra.mxu0 %v229
  %607 = vmatpush.bf16.msra.mxu0 %v228
  %608 = vmatpush.bf16.msra.mxu0 %v227
  %609 = vmatpush.bf16.msra.mxu0 %v226
  %610 = vmatmul.bf16.gmra.mxu0 %v600
  %v611 = vpop.f32.mrf.mxu0
  %v612 = vadd.f32 %v208, %v611
  %v613 = vpop.f32.mrf.mxu0
  %614 = vdwg.mxu0
  %v615 = vtanh.pop %v612
  %v616 = vmul.f32 %v615, %v543
  %618 = vrot.lane.b32.xlu0 %v616, 96
  %v619 = vpop.permute.xlu0 %618
  %v621 = vadd.f32 %v616, %v619
  %622 = vrot.lane.b32.xlu0 %v616, 64
  %v623 = vpop.permute.xlu0 %622
  %v625 = vadd.f32 %v621, %v623
  %626 = vrot.lane.b32.xlu0 %v616, 32
  %v627 = vpop.permute.xlu0 %626
  %v629 = vadd.f32 %v625, %v627
  %v630 = vmul.f32 %v629, 0.33333334
  %v631 = vadd.f32 %v541, %v630
  %s632 = scalar_lea.vmem %s1, 40
  %v633 = vld [vmem:[%s632] sm:$0xff]
  %v634 = vpack.c.bf16 %v631, %v631
  %v636 = vsel %vm97, %v634, 0
  %638 = vmatpush.bf16.msra.mxu0 0
  %639 = vmatpush.bf16.msra.mxu0 0
  %640 = vmatpush.bf16.msra.mxu0 0
  %641 = vmatpush.bf16.msra.mxu0 0
  %642 = vmatpush.bf16.msra.mxu0 0
  %643 = vmatpush.bf16.msra.mxu0 0
  %644 = vmatpush.bf16.msra.mxu0 %v94
  %645 = vmatpush.bf16.msra.mxu0 %v93
  %646 = vmatmul.bf16.gmra.mxu0 %v636
  %v647 = vpop.f32.mrf.mxu0
  %v648 = vadd.f32 %v83, %v647
  %v649 = vpop.f32.mrf.mxu0
  %650 = vdwg.mxu0
  %v651 = vmax.f32 %v648, 0.0
  %v652 = vpack.c.bf16 %v651, %v651
  %v654 = vsel %vm143, %v652, 0
  %656 = vmatpush.bf16.msra.mxu0 0
  %657 = vmatpush.bf16.msra.mxu0 0
  %658 = vmatpush.bf16.msra.mxu0 0
  %659 = vmatpush.bf16.msra.mxu0 0
  %660 = vmatpush.bf16.msra.mxu0 %v138
  %661 = vmatpush.bf16.msra.mxu0 %v137
  %662 = vmatpush.bf16.msra.mxu0 %v136
  %663 = vmatpush.bf16.msra.mxu0 %v135
  %664 = vmatmul.bf16.gmra.mxu0 %v654
  %v665 = vpop.f32.mrf.mxu0
  %v666 = vadd.f32 %v117, %v665
  %v667 = vpop.f32.mrf.mxu0
  %668 = vdwg.mxu0
  %v669 = vmax.f32 %v666, 0.0
  %v670 = vpack.c.bf16 %v669, %v669
  %v672 = vsel %vm143, %v670, 0
  %674 = vmatpush.bf16.msra.mxu0 0
  %675 = vmatpush.bf16.msra.mxu0 0
  %676 = vmatpush.bf16.msra.mxu0 0
  %677 = vmatpush.bf16.msra.mxu0 0
  %678 = vmatpush.bf16.msra.mxu0 %v184
  %679 = vmatpush.bf16.msra.mxu0 %v183
  %680 = vmatpush.bf16.msra.mxu0 %v182
  %681 = vmatpush.bf16.msra.mxu0 %v181
  %682 = vmatmul.bf16.gmra.mxu0 %v672
  %v683 = vpop.f32.mrf.mxu0
  %v684 = vadd.f32 %v163, %v683
  %v685 = vpop.f32.mrf.mxu0
  %686 = vdwg.mxu0
  %v687 = vmax.f32 %v684, 0.0
  %v688 = vpack.c.bf16 %v687, %v687
  %v690 = vsel %vm143, %v688, 0
  %692 = vmatpush.bf16.msra.mxu0 0
  %693 = vmatpush.bf16.msra.mxu0 0
  %694 = vmatpush.bf16.msra.mxu0 0
  %695 = vmatpush.bf16.msra.mxu0 0
  %696 = vmatpush.bf16.msra.mxu0 %v229
  %697 = vmatpush.bf16.msra.mxu0 %v228
  %698 = vmatpush.bf16.msra.mxu0 %v227
  %699 = vmatpush.bf16.msra.mxu0 %v226
  %700 = vmatmul.bf16.gmra.mxu0 %v690
  %v701 = vpop.f32.mrf.mxu0
  %v702 = vadd.f32 %v208, %v701
  %v703 = vpop.f32.mrf.mxu0
  %704 = vdwg.mxu0
  %v705 = vtanh.pop %v702
  %v706 = vmul.f32 %v705, %v633
  %708 = vrot.lane.b32.xlu0 %v706, 96
  %v709 = vpop.permute.xlu0 %708
  %v711 = vadd.f32 %v706, %v709
  %712 = vrot.lane.b32.xlu0 %v706, 64
  %v713 = vpop.permute.xlu0 %712
  %v715 = vadd.f32 %v711, %v713
  %716 = vrot.lane.b32.xlu0 %v706, 32
  %v717 = vpop.permute.xlu0 %716
  %v719 = vadd.f32 %v715, %v717
  %v720 = vsub.f32 %v719, %v630
  %v721 = vadd.f32 %v541, %v720
  %s722 = scalar_lea.vmem %s1, 48
  %v723 = vld [vmem:[%s722] sm:$0xff]
  %v724 = vpack.c.bf16 %v721, %v721
  %v726 = vsel %vm97, %v724, 0
  %728 = vmatpush.bf16.msra.mxu0 0
  %729 = vmatpush.bf16.msra.mxu0 0
  %730 = vmatpush.bf16.msra.mxu0 0
  %731 = vmatpush.bf16.msra.mxu0 0
  %732 = vmatpush.bf16.msra.mxu0 0
  %733 = vmatpush.bf16.msra.mxu0 0
  %734 = vmatpush.bf16.msra.mxu0 %v94
  %735 = vmatpush.bf16.msra.mxu0 %v93
  %736 = vmatmul.bf16.gmra.mxu0 %v726
  %v737 = vpop.f32.mrf.mxu0
  %v738 = vadd.f32 %v83, %v737
  %v739 = vpop.f32.mrf.mxu0
  %740 = vdwg.mxu0
  %v741 = vmax.f32 %v738, 0.0
  %v742 = vpack.c.bf16 %v741, %v741
  %v744 = vsel %vm143, %v742, 0
  %746 = vmatpush.bf16.msra.mxu0 0
  %747 = vmatpush.bf16.msra.mxu0 0
  %748 = vmatpush.bf16.msra.mxu0 0
  %749 = vmatpush.bf16.msra.mxu0 0
  %750 = vmatpush.bf16.msra.mxu0 %v138
  %751 = vmatpush.bf16.msra.mxu0 %v137
  %752 = vmatpush.bf16.msra.mxu0 %v136
  %753 = vmatpush.bf16.msra.mxu0 %v135
  %754 = vmatmul.bf16.gmra.mxu0 %v744
  %v755 = vpop.f32.mrf.mxu0
  %v756 = vadd.f32 %v117, %v755
  %v757 = vpop.f32.mrf.mxu0
  %758 = vdwg.mxu0
  %v759 = vmax.f32 %v756, 0.0
  %v760 = vpack.c.bf16 %v759, %v759
  %v762 = vsel %vm143, %v760, 0
  %764 = vmatpush.bf16.msra.mxu0 0
  %765 = vmatpush.bf16.msra.mxu0 0
  %766 = vmatpush.bf16.msra.mxu0 0
  %767 = vmatpush.bf16.msra.mxu0 0
  %768 = vmatpush.bf16.msra.mxu0 %v184
  %769 = vmatpush.bf16.msra.mxu0 %v183
  %770 = vmatpush.bf16.msra.mxu0 %v182
  %771 = vmatpush.bf16.msra.mxu0 %v181
  %772 = vmatmul.bf16.gmra.mxu0 %v762
  %v773 = vpop.f32.mrf.mxu0
  %v774 = vadd.f32 %v163, %v773
  %v775 = vpop.f32.mrf.mxu0
  %776 = vdwg.mxu0
  %v777 = vmax.f32 %v774, 0.0
  %v778 = vpack.c.bf16 %v777, %v777
  %v780 = vsel %vm143, %v778, 0
  %782 = vmatpush.bf16.msra.mxu0 0
  %783 = vmatpush.bf16.msra.mxu0 0
  %784 = vmatpush.bf16.msra.mxu0 0
  %785 = vmatpush.bf16.msra.mxu0 0
  %786 = vmatpush.bf16.msra.mxu0 %v229
  %787 = vmatpush.bf16.msra.mxu0 %v228
  %788 = vmatpush.bf16.msra.mxu0 %v227
  %789 = vmatpush.bf16.msra.mxu0 %v226
  %790 = vmatmul.bf16.gmra.mxu0 %v780
  %v791 = vpop.f32.mrf.mxu0
  %v792 = vadd.f32 %v208, %v791
  %v793 = vpop.f32.mrf.mxu0
  %794 = vdwg.mxu0
  %v795 = vtanh.pop %v792
  %v796 = vmul.f32 %v795, %v723
  %798 = vrot.lane.b32.xlu0 %v796, 96
  %v799 = vpop.permute.xlu0 %798
  %v801 = vadd.f32 %v796, %v799
  %802 = vrot.lane.b32.xlu0 %v796, 64
  %v803 = vpop.permute.xlu0 %802
  %v805 = vadd.f32 %v801, %v803
  %806 = vrot.lane.b32.xlu0 %v796, 32
  %v807 = vpop.permute.xlu0 %806
  %v809 = vadd.f32 %v805, %v807
  %v810 = vsub.f32 %v629, %v719
  %v811 = vadd.f32 %v810, %v809
  %v812 = vadd.f32 %v541, %v811
  %s813 = scalar_lea.vmem %s1, 56
  %v814 = vld [vmem:[%s813] sm:$0xff]
  %v815 = vpack.c.bf16 %v812, %v812
  %v817 = vsel %vm97, %v815, 0
  %819 = vmatpush.bf16.msra.mxu0 0
  %820 = vmatpush.bf16.msra.mxu0 0
  %821 = vmatpush.bf16.msra.mxu0 0
  %822 = vmatpush.bf16.msra.mxu0 0
  %823 = vmatpush.bf16.msra.mxu0 0
  %824 = vmatpush.bf16.msra.mxu0 0
  %825 = vmatpush.bf16.msra.mxu0 %v94
  %826 = vmatpush.bf16.msra.mxu0 %v93
  %827 = vmatmul.bf16.gmra.mxu0 %v817
  %v828 = vpop.f32.mrf.mxu0
  %v829 = vadd.f32 %v83, %v828
  %v830 = vpop.f32.mrf.mxu0
  %831 = vdwg.mxu0
  %v832 = vmax.f32 %v829, 0.0
  %v833 = vpack.c.bf16 %v832, %v832
  %v835 = vsel %vm143, %v833, 0
  %837 = vmatpush.bf16.msra.mxu0 0
  %838 = vmatpush.bf16.msra.mxu0 0
  %839 = vmatpush.bf16.msra.mxu0 0
  %840 = vmatpush.bf16.msra.mxu0 0
  %841 = vmatpush.bf16.msra.mxu0 %v138
  %842 = vmatpush.bf16.msra.mxu0 %v137
  %843 = vmatpush.bf16.msra.mxu0 %v136
  %844 = vmatpush.bf16.msra.mxu0 %v135
  %845 = vmatmul.bf16.gmra.mxu0 %v835
  %v846 = vpop.f32.mrf.mxu0
  %v847 = vadd.f32 %v117, %v846
  %v848 = vpop.f32.mrf.mxu0
  %849 = vdwg.mxu0
  %v850 = vmax.f32 %v847, 0.0
  %v851 = vpack.c.bf16 %v850, %v850
  %v853 = vsel %vm143, %v851, 0
  %855 = vmatpush.bf16.msra.mxu0 0
  %856 = vmatpush.bf16.msra.mxu0 0
  %857 = vmatpush.bf16.msra.mxu0 0
  %858 = vmatpush.bf16.msra.mxu0 0
  %859 = vmatpush.bf16.msra.mxu0 %v184
  %860 = vmatpush.bf16.msra.mxu0 %v183
  %861 = vmatpush.bf16.msra.mxu0 %v182
  %862 = vmatpush.bf16.msra.mxu0 %v181
  %863 = vmatmul.bf16.gmra.mxu0 %v853
  %v864 = vpop.f32.mrf.mxu0
  %v865 = vadd.f32 %v163, %v864
  %v866 = vpop.f32.mrf.mxu0
  %867 = vdwg.mxu0
  %v868 = vmax.f32 %v865, 0.0
  %v869 = vpack.c.bf16 %v868, %v868
  %v871 = vsel %vm143, %v869, 0
  %873 = vmatpush.bf16.msra.mxu0 0
  %874 = vmatpush.bf16.msra.mxu0 0
  %875 = vmatpush.bf16.msra.mxu0 0
  %876 = vmatpush.bf16.msra.mxu0 0
  %877 = vmatpush.bf16.msra.mxu0 %v229
  %878 = vmatpush.bf16.msra.mxu0 %v228
  %879 = vmatpush.bf16.msra.mxu0 %v227
  %880 = vmatpush.bf16.msra.mxu0 %v226
  %881 = vmatmul.bf16.gmra.mxu0 %v871
  %v882 = vpop.f32.mrf.mxu0
  %v883 = vadd.f32 %v208, %v882
  %v884 = vpop.f32.mrf.mxu0
  %885 = vdwg.mxu0
  %v886 = vtanh.pop %v883
  %v887 = vmul.f32 %v886, %v814
  %889 = vrot.lane.b32.xlu0 %v887, 96
  %v890 = vpop.permute.xlu0 %889
  %v892 = vadd.f32 %v887, %v890
  %893 = vrot.lane.b32.xlu0 %v887, 64
  %v894 = vpop.permute.xlu0 %893
  %v896 = vadd.f32 %v892, %v894
  %897 = vrot.lane.b32.xlu0 %v887, 32
  %v898 = vpop.permute.xlu0 %897
  %v900 = vadd.f32 %v896, %v898
  %v901 = vadd.f32 %v719, %v809
  %v902 = vmul.f32 %v901, 3.0
  %v903 = vadd.f32 %v629, %v902
  %v904 = vadd.f32 %v903, %v900
  %v905 = vmul.f32 %v904, 0.125
  %v906 = vadd.f32 %v541, %v905
  %s907 = scalar_lea.vmem %s1, 64
  %v908 = vld [vmem:[%s907] sm:$0xff]
  %v909 = vpack.c.bf16 %v906, %v906
  %v911 = vsel %vm97, %v909, 0
  %913 = vmatpush.bf16.msra.mxu0 0
  %914 = vmatpush.bf16.msra.mxu0 0
  %915 = vmatpush.bf16.msra.mxu0 0
  %916 = vmatpush.bf16.msra.mxu0 0
  %917 = vmatpush.bf16.msra.mxu0 0
  %918 = vmatpush.bf16.msra.mxu0 0
  %919 = vmatpush.bf16.msra.mxu0 %v94
  %920 = vmatpush.bf16.msra.mxu0 %v93
  %921 = vmatmul.bf16.gmra.mxu0 %v911
  %v922 = vpop.f32.mrf.mxu0
  %v923 = vadd.f32 %v83, %v922
  %v924 = vpop.f32.mrf.mxu0
  %925 = vdwg.mxu0
  %v926 = vmax.f32 %v923, 0.0
  %v927 = vpack.c.bf16 %v926, %v926
  %v929 = vsel %vm143, %v927, 0
  %931 = vmatpush.bf16.msra.mxu0 0
  %932 = vmatpush.bf16.msra.mxu0 0
  %933 = vmatpush.bf16.msra.mxu0 0
  %934 = vmatpush.bf16.msra.mxu0 0
  %935 = vmatpush.bf16.msra.mxu0 %v138
  %936 = vmatpush.bf16.msra.mxu0 %v137
  %937 = vmatpush.bf16.msra.mxu0 %v136
  %938 = vmatpush.bf16.msra.mxu0 %v135
  %939 = vmatmul.bf16.gmra.mxu0 %v929
  %v940 = vpop.f32.mrf.mxu0
  %v941 = vadd.f32 %v117, %v940
  %v942 = vpop.f32.mrf.mxu0
  %943 = vdwg.mxu0
  %v944 = vmax.f32 %v941, 0.0
  %v945 = vpack.c.bf16 %v944, %v944
  %v947 = vsel %vm143, %v945, 0
  %949 = vmatpush.bf16.msra.mxu0 0
  %950 = vmatpush.bf16.msra.mxu0 0
  %951 = vmatpush.bf16.msra.mxu0 0
  %952 = vmatpush.bf16.msra.mxu0 0
  %953 = vmatpush.bf16.msra.mxu0 %v184
  %954 = vmatpush.bf16.msra.mxu0 %v183
  %955 = vmatpush.bf16.msra.mxu0 %v182
  %956 = vmatpush.bf16.msra.mxu0 %v181
  %957 = vmatmul.bf16.gmra.mxu0 %v947
  %v958 = vpop.f32.mrf.mxu0
  %v959 = vadd.f32 %v163, %v958
  %v960 = vpop.f32.mrf.mxu0
  %961 = vdwg.mxu0
  %v962 = vmax.f32 %v959, 0.0
  %v963 = vpack.c.bf16 %v962, %v962
  %v965 = vsel %vm143, %v963, 0
  %967 = vmatpush.bf16.msra.mxu0 0
  %968 = vmatpush.bf16.msra.mxu0 0
  %969 = vmatpush.bf16.msra.mxu0 0
  %970 = vmatpush.bf16.msra.mxu0 0
  %971 = vmatpush.bf16.msra.mxu0 %v229
  %972 = vmatpush.bf16.msra.mxu0 %v228
  %973 = vmatpush.bf16.msra.mxu0 %v227
  %974 = vmatpush.bf16.msra.mxu0 %v226
  %975 = vmatmul.bf16.gmra.mxu0 %v965
  %v976 = vpop.f32.mrf.mxu0
  %v977 = vadd.f32 %v208, %v976
  %v978 = vpop.f32.mrf.mxu0
  %979 = vdwg.mxu0
  %v980 = vtanh.pop %v977
  %v981 = vmul.f32 %v980, %v908
  %983 = vrot.lane.b32.xlu0 %v981, 96
  %v984 = vpop.permute.xlu0 %983
  %v986 = vadd.f32 %v981, %v984
  %987 = vrot.lane.b32.xlu0 %v981, 64
  %v988 = vpop.permute.xlu0 %987
  %v990 = vadd.f32 %v986, %v988
  %991 = vrot.lane.b32.xlu0 %v981, 32
  %v992 = vpop.permute.xlu0 %991
  %v994 = vadd.f32 %v990, %v992
  %v995 = vmul.f32 %v994, 0.33333334
  %v996 = vadd.f32 %v906, %v995
  %s997 = scalar_lea.vmem %s1, 72
  %v998 = vld [vmem:[%s997] sm:$0xff]
  %v999 = vpack.c.bf16 %v996, %v996
  %v1001 = vsel %vm97, %v999, 0
  %1003 = vmatpush.bf16.msra.mxu0 0
  %1004 = vmatpush.bf16.msra.mxu0 0
  %1005 = vmatpush.bf16.msra.mxu0 0
  %1006 = vmatpush.bf16.msra.mxu0 0
  %1007 = vmatpush.bf16.msra.mxu0 0
  %1008 = vmatpush.bf16.msra.mxu0 0
  %1009 = vmatpush.bf16.msra.mxu0 %v94
  %1010 = vmatpush.bf16.msra.mxu0 %v93
  %1011 = vmatmul.bf16.gmra.mxu0 %v1001
  %v1012 = vpop.f32.mrf.mxu0
  %v1013 = vadd.f32 %v83, %v1012
  %v1014 = vpop.f32.mrf.mxu0
  %1015 = vdwg.mxu0
  %v1016 = vmax.f32 %v1013, 0.0
  %v1017 = vpack.c.bf16 %v1016, %v1016
  %v1019 = vsel %vm143, %v1017, 0
  %1021 = vmatpush.bf16.msra.mxu0 0
  %1022 = vmatpush.bf16.msra.mxu0 0
  %1023 = vmatpush.bf16.msra.mxu0 0
  %1024 = vmatpush.bf16.msra.mxu0 0
  %1025 = vmatpush.bf16.msra.mxu0 %v138
  %1026 = vmatpush.bf16.msra.mxu0 %v137
  %1027 = vmatpush.bf16.msra.mxu0 %v136
  %1028 = vmatpush.bf16.msra.mxu0 %v135
  %1029 = vmatmul.bf16.gmra.mxu0 %v1019
  %v1030 = vpop.f32.mrf.mxu0
  %v1031 = vadd.f32 %v117, %v1030
  %v1032 = vpop.f32.mrf.mxu0
  %1033 = vdwg.mxu0
  %v1034 = vmax.f32 %v1031, 0.0
  %v1035 = vpack.c.bf16 %v1034, %v1034
  %v1037 = vsel %vm143, %v1035, 0
  %1039 = vmatpush.bf16.msra.mxu0 0
  %1040 = vmatpush.bf16.msra.mxu0 0
  %1041 = vmatpush.bf16.msra.mxu0 0
  %1042 = vmatpush.bf16.msra.mxu0 0
  %1043 = vmatpush.bf16.msra.mxu0 %v184
  %1044 = vmatpush.bf16.msra.mxu0 %v183
  %1045 = vmatpush.bf16.msra.mxu0 %v182
  %1046 = vmatpush.bf16.msra.mxu0 %v181
  %1047 = vmatmul.bf16.gmra.mxu0 %v1037
  %v1048 = vpop.f32.mrf.mxu0
  %v1049 = vadd.f32 %v163, %v1048
  %v1050 = vpop.f32.mrf.mxu0
  %1051 = vdwg.mxu0
  %v1052 = vmax.f32 %v1049, 0.0
  %v1053 = vpack.c.bf16 %v1052, %v1052
  %v1055 = vsel %vm143, %v1053, 0
  %1057 = vmatpush.bf16.msra.mxu0 0
  %1058 = vmatpush.bf16.msra.mxu0 0
  %1059 = vmatpush.bf16.msra.mxu0 0
  %1060 = vmatpush.bf16.msra.mxu0 0
  %1061 = vmatpush.bf16.msra.mxu0 %v229
  %1062 = vmatpush.bf16.msra.mxu0 %v228
  %1063 = vmatpush.bf16.msra.mxu0 %v227
  %1064 = vmatpush.bf16.msra.mxu0 %v226
  %1065 = vmatmul.bf16.gmra.mxu0 %v1055
  %v1066 = vpop.f32.mrf.mxu0
  %v1067 = vadd.f32 %v208, %v1066
  %v1068 = vpop.f32.mrf.mxu0
  %1069 = vdwg.mxu0
  %v1070 = vtanh.pop %v1067
  %v1071 = vmul.f32 %v1070, %v998
  %1073 = vrot.lane.b32.xlu0 %v1071, 96
  %v1074 = vpop.permute.xlu0 %1073
  %v1076 = vadd.f32 %v1071, %v1074
  %1077 = vrot.lane.b32.xlu0 %v1071, 64
  %v1078 = vpop.permute.xlu0 %1077
  %v1080 = vadd.f32 %v1076, %v1078
  %1081 = vrot.lane.b32.xlu0 %v1071, 32
  %v1082 = vpop.permute.xlu0 %1081
  %v1084 = vadd.f32 %v1080, %v1082
  %v1085 = vsub.f32 %v1084, %v995
  %v1086 = vadd.f32 %v906, %v1085
  %s1087 = scalar_lea.vmem %s1, 80
  %v1088 = vld [vmem:[%s1087] sm:$0xff]
  %v1089 = vpack.c.bf16 %v1086, %v1086
  %v1091 = vsel %vm97, %v1089, 0
  %1093 = vmatpush.bf16.msra.mxu0 0
  %1094 = vmatpush.bf16.msra.mxu0 0
  %1095 = vmatpush.bf16.msra.mxu0 0
  %1096 = vmatpush.bf16.msra.mxu0 0
  %1097 = vmatpush.bf16.msra.mxu0 0
  %1098 = vmatpush.bf16.msra.mxu0 0
  %1099 = vmatpush.bf16.msra.mxu0 %v94
  %1100 = vmatpush.bf16.msra.mxu0 %v93
  %1101 = vmatmul.bf16.gmra.mxu0 %v1091
  %v1102 = vpop.f32.mrf.mxu0
  %v1103 = vadd.f32 %v83, %v1102
  %v1104 = vpop.f32.mrf.mxu0
  %1105 = vdwg.mxu0
  %v1106 = vmax.f32 %v1103, 0.0
  %v1107 = vpack.c.bf16 %v1106, %v1106
  %v1109 = vsel %vm143, %v1107, 0
  %1111 = vmatpush.bf16.msra.mxu0 0
  %1112 = vmatpush.bf16.msra.mxu0 0
  %1113 = vmatpush.bf16.msra.mxu0 0
  %1114 = vmatpush.bf16.msra.mxu0 0
  %1115 = vmatpush.bf16.msra.mxu0 %v138
  %1116 = vmatpush.bf16.msra.mxu0 %v137
  %1117 = vmatpush.bf16.msra.mxu0 %v136
  %1118 = vmatpush.bf16.msra.mxu0 %v135
  %1119 = vmatmul.bf16.gmra.mxu0 %v1109
  %v1120 = vpop.f32.mrf.mxu0
  %v1121 = vadd.f32 %v117, %v1120
  %v1122 = vpop.f32.mrf.mxu0
  %1123 = vdwg.mxu0
  %v1124 = vmax.f32 %v1121, 0.0
  %v1125 = vpack.c.bf16 %v1124, %v1124
  %v1127 = vsel %vm143, %v1125, 0
  %1129 = vmatpush.bf16.msra.mxu0 0
  %1130 = vmatpush.bf16.msra.mxu0 0
  %1131 = vmatpush.bf16.msra.mxu0 0
  %1132 = vmatpush.bf16.msra.mxu0 0
  %1133 = vmatpush.bf16.msra.mxu0 %v184
  %1134 = vmatpush.bf16.msra.mxu0 %v183
  %1135 = vmatpush.bf16.msra.mxu0 %v182
  %1136 = vmatpush.bf16.msra.mxu0 %v181
  %1137 = vmatmul.bf16.gmra.mxu0 %v1127
  %v1138 = vpop.f32.mrf.mxu0
  %v1139 = vadd.f32 %v163, %v1138
  %v1140 = vpop.f32.mrf.mxu0
  %1141 = vdwg.mxu0
  %v1142 = vmax.f32 %v1139, 0.0
  %v1143 = vpack.c.bf16 %v1142, %v1142
  %v1145 = vsel %vm143, %v1143, 0
  %1147 = vmatpush.bf16.msra.mxu0 0
  %1148 = vmatpush.bf16.msra.mxu0 0
  %1149 = vmatpush.bf16.msra.mxu0 0
  %1150 = vmatpush.bf16.msra.mxu0 0
  %1151 = vmatpush.bf16.msra.mxu0 %v229
  %1152 = vmatpush.bf16.msra.mxu0 %v228
  %1153 = vmatpush.bf16.msra.mxu0 %v227
  %1154 = vmatpush.bf16.msra.mxu0 %v226
  %1155 = vmatmul.bf16.gmra.mxu0 %v1145
  %v1156 = vpop.f32.mrf.mxu0
  %v1157 = vadd.f32 %v208, %v1156
  %v1158 = vpop.f32.mrf.mxu0
  %1159 = vdwg.mxu0
  %v1160 = vtanh.pop %v1157
  %v1161 = vmul.f32 %v1160, %v1088
  %1163 = vrot.lane.b32.xlu0 %v1161, 96
  %v1164 = vpop.permute.xlu0 %1163
  %v1166 = vadd.f32 %v1161, %v1164
  %1167 = vrot.lane.b32.xlu0 %v1161, 64
  %v1168 = vpop.permute.xlu0 %1167
  %v1170 = vadd.f32 %v1166, %v1168
  %1171 = vrot.lane.b32.xlu0 %v1161, 32
  %v1172 = vpop.permute.xlu0 %1171
  %v1174 = vadd.f32 %v1170, %v1172
  %v1175 = vsub.f32 %v994, %v1084
  %v1176 = vadd.f32 %v1175, %v1174
  %v1177 = vadd.f32 %v906, %v1176
  %s1178 = scalar_lea.vmem %s1, 88
  %v1179 = vld [vmem:[%s1178] sm:$0xff]
  %v1180 = vpack.c.bf16 %v1177, %v1177
  %v1182 = vsel %vm97, %v1180, 0
  %1184 = vmatpush.bf16.msra.mxu0 0
  %1185 = vmatpush.bf16.msra.mxu0 0
  %1186 = vmatpush.bf16.msra.mxu0 0
  %1187 = vmatpush.bf16.msra.mxu0 0
  %1188 = vmatpush.bf16.msra.mxu0 0
  %1189 = vmatpush.bf16.msra.mxu0 0
  %1190 = vmatpush.bf16.msra.mxu0 %v94
  %1191 = vmatpush.bf16.msra.mxu0 %v93
  %1192 = vmatmul.bf16.gmra.mxu0 %v1182
  %v1193 = vpop.f32.mrf.mxu0
  %v1194 = vadd.f32 %v83, %v1193
  %v1195 = vpop.f32.mrf.mxu0
  %1196 = vdwg.mxu0
  %v1197 = vmax.f32 %v1194, 0.0
  %v1198 = vpack.c.bf16 %v1197, %v1197
  %v1200 = vsel %vm143, %v1198, 0
  %1202 = vmatpush.bf16.msra.mxu0 0
  %1203 = vmatpush.bf16.msra.mxu0 0
  %1204 = vmatpush.bf16.msra.mxu0 0
  %1205 = vmatpush.bf16.msra.mxu0 0
  %1206 = vmatpush.bf16.msra.mxu0 %v138
  %1207 = vmatpush.bf16.msra.mxu0 %v137
  %1208 = vmatpush.bf16.msra.mxu0 %v136
  %1209 = vmatpush.bf16.msra.mxu0 %v135
  %1210 = vmatmul.bf16.gmra.mxu0 %v1200
  %v1211 = vpop.f32.mrf.mxu0
  %v1212 = vadd.f32 %v117, %v1211
  %v1213 = vpop.f32.mrf.mxu0
  %1214 = vdwg.mxu0
  %v1215 = vmax.f32 %v1212, 0.0
  %v1216 = vpack.c.bf16 %v1215, %v1215
  %v1218 = vsel %vm143, %v1216, 0
  %1220 = vmatpush.bf16.msra.mxu0 0
  %1221 = vmatpush.bf16.msra.mxu0 0
  %1222 = vmatpush.bf16.msra.mxu0 0
  %1223 = vmatpush.bf16.msra.mxu0 0
  %1224 = vmatpush.bf16.msra.mxu0 %v184
  %1225 = vmatpush.bf16.msra.mxu0 %v183
  %1226 = vmatpush.bf16.msra.mxu0 %v182
  %1227 = vmatpush.bf16.msra.mxu0 %v181
  %1228 = vmatmul.bf16.gmra.mxu0 %v1218
  %v1229 = vpop.f32.mrf.mxu0
  %v1230 = vadd.f32 %v163, %v1229
  %v1231 = vpop.f32.mrf.mxu0
  %1232 = vdwg.mxu0
  %v1233 = vmax.f32 %v1230, 0.0
  %v1234 = vpack.c.bf16 %v1233, %v1233
  %v1236 = vsel %vm143, %v1234, 0
  %1238 = vmatpush.bf16.msra.mxu0 0
  %1239 = vmatpush.bf16.msra.mxu0 0
  %1240 = vmatpush.bf16.msra.mxu0 0
  %1241 = vmatpush.bf16.msra.mxu0 0
  %1242 = vmatpush.bf16.msra.mxu0 %v229
  %1243 = vmatpush.bf16.msra.mxu0 %v228
  %1244 = vmatpush.bf16.msra.mxu0 %v227
  %1245 = vmatpush.bf16.msra.mxu0 %v226
  %1246 = vmatmul.bf16.gmra.mxu0 %v1236
  %v1247 = vpop.f32.mrf.mxu0
  %v1248 = vadd.f32 %v208, %v1247
  %v1249 = vpop.f32.mrf.mxu0
  %1250 = vdwg.mxu0
  %v1251 = vtanh.pop %v1248
  %v1252 = vmul.f32 %v1251, %v1179
  %1254 = vrot.lane.b32.xlu0 %v1252, 96
  %v1255 = vpop.permute.xlu0 %1254
  %v1257 = vadd.f32 %v1252, %v1255
  %1258 = vrot.lane.b32.xlu0 %v1252, 64
  %v1259 = vpop.permute.xlu0 %1258
  %v1261 = vadd.f32 %v1257, %v1259
  %1262 = vrot.lane.b32.xlu0 %v1252, 32
  %v1263 = vpop.permute.xlu0 %1262
  %v1265 = vadd.f32 %v1261, %v1263
  %v1266 = vadd.f32 %v1084, %v1174
  %v1267 = vmul.f32 %v1266, 3.0
  %v1268 = vadd.f32 %v994, %v1267
  %v1269 = vadd.f32 %v1268, %v1265
  %v1270 = vmul.f32 %v1269, 0.125
  %v1271 = vadd.f32 %v906, %v1270
  %s1272 = scalar_lea.vmem %s1, 96
  %v1273 = vld [vmem:[%s1272] sm:$0xff]
  %v1274 = vpack.c.bf16 %v1271, %v1271
  %v1276 = vsel %vm97, %v1274, 0
  %1278 = vmatpush.bf16.msra.mxu0 0
  %1279 = vmatpush.bf16.msra.mxu0 0
  %1280 = vmatpush.bf16.msra.mxu0 0
  %1281 = vmatpush.bf16.msra.mxu0 0
  %1282 = vmatpush.bf16.msra.mxu0 0
  %1283 = vmatpush.bf16.msra.mxu0 0
  %1284 = vmatpush.bf16.msra.mxu0 %v94
  %1285 = vmatpush.bf16.msra.mxu0 %v93
  %1286 = vmatmul.bf16.gmra.mxu0 %v1276
  %v1287 = vpop.f32.mrf.mxu0
  %v1288 = vadd.f32 %v83, %v1287
  %v1289 = vpop.f32.mrf.mxu0
  %1290 = vdwg.mxu0
  %v1291 = vmax.f32 %v1288, 0.0
  %v1292 = vpack.c.bf16 %v1291, %v1291
  %v1294 = vsel %vm143, %v1292, 0
  %1296 = vmatpush.bf16.msra.mxu0 0
  %1297 = vmatpush.bf16.msra.mxu0 0
  %1298 = vmatpush.bf16.msra.mxu0 0
  %1299 = vmatpush.bf16.msra.mxu0 0
  %1300 = vmatpush.bf16.msra.mxu0 %v138
  %1301 = vmatpush.bf16.msra.mxu0 %v137
  %1302 = vmatpush.bf16.msra.mxu0 %v136
  %1303 = vmatpush.bf16.msra.mxu0 %v135
  %1304 = vmatmul.bf16.gmra.mxu0 %v1294
  %v1305 = vpop.f32.mrf.mxu0
  %v1306 = vadd.f32 %v117, %v1305
  %v1307 = vpop.f32.mrf.mxu0
  %1308 = vdwg.mxu0
  %v1309 = vmax.f32 %v1306, 0.0
  %v1310 = vpack.c.bf16 %v1309, %v1309
  %v1312 = vsel %vm143, %v1310, 0
  %1314 = vmatpush.bf16.msra.mxu0 0
  %1315 = vmatpush.bf16.msra.mxu0 0
  %1316 = vmatpush.bf16.msra.mxu0 0
  %1317 = vmatpush.bf16.msra.mxu0 0
  %1318 = vmatpush.bf16.msra.mxu0 %v184
  %1319 = vmatpush.bf16.msra.mxu0 %v183
  %1320 = vmatpush.bf16.msra.mxu0 %v182
  %1321 = vmatpush.bf16.msra.mxu0 %v181
  %1322 = vmatmul.bf16.gmra.mxu0 %v1312
  %v1323 = vpop.f32.mrf.mxu0
  %v1324 = vadd.f32 %v163, %v1323
  %v1325 = vpop.f32.mrf.mxu0
  %1326 = vdwg.mxu0
  %v1327 = vmax.f32 %v1324, 0.0
  %v1328 = vpack.c.bf16 %v1327, %v1327
  %v1330 = vsel %vm143, %v1328, 0
  %1332 = vmatpush.bf16.msra.mxu0 0
  %1333 = vmatpush.bf16.msra.mxu0 0
  %1334 = vmatpush.bf16.msra.mxu0 0
  %1335 = vmatpush.bf16.msra.mxu0 0
  %1336 = vmatpush.bf16.msra.mxu0 %v229
  %1337 = vmatpush.bf16.msra.mxu0 %v228
  %1338 = vmatpush.bf16.msra.mxu0 %v227
  %1339 = vmatpush.bf16.msra.mxu0 %v226
  %1340 = vmatmul.bf16.gmra.mxu0 %v1330
  %v1341 = vpop.f32.mrf.mxu0
  %v1342 = vadd.f32 %v208, %v1341
  %v1343 = vpop.f32.mrf.mxu0
  %1344 = vdwg.mxu0
  %v1345 = vtanh.pop %v1342
  %v1346 = vmul.f32 %v1345, %v1273
  %1348 = vrot.lane.b32.xlu0 %v1346, 96
  %v1349 = vpop.permute.xlu0 %1348
  %v1351 = vadd.f32 %v1346, %v1349
  %1352 = vrot.lane.b32.xlu0 %v1346, 64
  %v1353 = vpop.permute.xlu0 %1352
  %v1355 = vadd.f32 %v1351, %v1353
  %1356 = vrot.lane.b32.xlu0 %v1346, 32
  %v1357 = vpop.permute.xlu0 %1356
  %v1359 = vadd.f32 %v1355, %v1357
  %v1360 = vmul.f32 %v1359, 0.33333334
  %v1361 = vadd.f32 %v1271, %v1360
  %s1362 = scalar_lea.vmem %s1, 104
  %v1363 = vld [vmem:[%s1362] sm:$0xff]
  %v1364 = vpack.c.bf16 %v1361, %v1361
  %v1366 = vsel %vm97, %v1364, 0
  %1368 = vmatpush.bf16.msra.mxu0 0
  %1369 = vmatpush.bf16.msra.mxu0 0
  %1370 = vmatpush.bf16.msra.mxu0 0
  %1371 = vmatpush.bf16.msra.mxu0 0
  %1372 = vmatpush.bf16.msra.mxu0 0
  %1373 = vmatpush.bf16.msra.mxu0 0
  %1374 = vmatpush.bf16.msra.mxu0 %v94
  %1375 = vmatpush.bf16.msra.mxu0 %v93
  %1376 = vmatmul.bf16.gmra.mxu0 %v1366
  %v1377 = vpop.f32.mrf.mxu0
  %v1378 = vadd.f32 %v83, %v1377
  %v1379 = vpop.f32.mrf.mxu0
  %1380 = vdwg.mxu0
  %v1381 = vmax.f32 %v1378, 0.0
  %v1382 = vpack.c.bf16 %v1381, %v1381
  %v1384 = vsel %vm143, %v1382, 0
  %1386 = vmatpush.bf16.msra.mxu0 0
  %1387 = vmatpush.bf16.msra.mxu0 0
  %1388 = vmatpush.bf16.msra.mxu0 0
  %1389 = vmatpush.bf16.msra.mxu0 0
  %1390 = vmatpush.bf16.msra.mxu0 %v138
  %1391 = vmatpush.bf16.msra.mxu0 %v137
  %1392 = vmatpush.bf16.msra.mxu0 %v136
  %1393 = vmatpush.bf16.msra.mxu0 %v135
  %1394 = vmatmul.bf16.gmra.mxu0 %v1384
  %v1395 = vpop.f32.mrf.mxu0
  %v1396 = vadd.f32 %v117, %v1395
  %v1397 = vpop.f32.mrf.mxu0
  %1398 = vdwg.mxu0
  %v1399 = vmax.f32 %v1396, 0.0
  %v1400 = vpack.c.bf16 %v1399, %v1399
  %v1402 = vsel %vm143, %v1400, 0
  %1404 = vmatpush.bf16.msra.mxu0 0
  %1405 = vmatpush.bf16.msra.mxu0 0
  %1406 = vmatpush.bf16.msra.mxu0 0
  %1407 = vmatpush.bf16.msra.mxu0 0
  %1408 = vmatpush.bf16.msra.mxu0 %v184
  %1409 = vmatpush.bf16.msra.mxu0 %v183
  %1410 = vmatpush.bf16.msra.mxu0 %v182
  %1411 = vmatpush.bf16.msra.mxu0 %v181
  %1412 = vmatmul.bf16.gmra.mxu0 %v1402
  %v1413 = vpop.f32.mrf.mxu0
  %v1414 = vadd.f32 %v163, %v1413
  %v1415 = vpop.f32.mrf.mxu0
  %1416 = vdwg.mxu0
  %v1417 = vmax.f32 %v1414, 0.0
  %v1418 = vpack.c.bf16 %v1417, %v1417
  %v1420 = vsel %vm143, %v1418, 0
  %1422 = vmatpush.bf16.msra.mxu0 0
  %1423 = vmatpush.bf16.msra.mxu0 0
  %1424 = vmatpush.bf16.msra.mxu0 0
  %1425 = vmatpush.bf16.msra.mxu0 0
  %1426 = vmatpush.bf16.msra.mxu0 %v229
  %1427 = vmatpush.bf16.msra.mxu0 %v228
  %1428 = vmatpush.bf16.msra.mxu0 %v227
  %1429 = vmatpush.bf16.msra.mxu0 %v226
  %1430 = vmatmul.bf16.gmra.mxu0 %v1420
  %v1431 = vpop.f32.mrf.mxu0
  %v1432 = vadd.f32 %v208, %v1431
  %v1433 = vpop.f32.mrf.mxu0
  %1434 = vdwg.mxu0
  %v1435 = vtanh.pop %v1432
  %v1436 = vmul.f32 %v1435, %v1363
  %1438 = vrot.lane.b32.xlu0 %v1436, 96
  %v1439 = vpop.permute.xlu0 %1438
  %v1441 = vadd.f32 %v1436, %v1439
  %1442 = vrot.lane.b32.xlu0 %v1436, 64
  %v1443 = vpop.permute.xlu0 %1442
  %v1445 = vadd.f32 %v1441, %v1443
  %1446 = vrot.lane.b32.xlu0 %v1436, 32
  %v1447 = vpop.permute.xlu0 %1446
  %v1449 = vadd.f32 %v1445, %v1447
  %v1450 = vsub.f32 %v1449, %v1360
  %v1451 = vadd.f32 %v1271, %v1450
  %s1452 = scalar_lea.vmem %s1, 112
  %v1453 = vld [vmem:[%s1452] sm:$0xff]
  %v1454 = vpack.c.bf16 %v1451, %v1451
  %v1456 = vsel %vm97, %v1454, 0
  %1458 = vmatpush.bf16.msra.mxu0 0
  %1459 = vmatpush.bf16.msra.mxu0 0
  %1460 = vmatpush.bf16.msra.mxu0 0
  %1461 = vmatpush.bf16.msra.mxu0 0
  %1462 = vmatpush.bf16.msra.mxu0 0
  %1463 = vmatpush.bf16.msra.mxu0 0
  %1464 = vmatpush.bf16.msra.mxu0 %v94
  %1465 = vmatpush.bf16.msra.mxu0 %v93
  %1466 = vmatmul.bf16.gmra.mxu0 %v1456
  %v1467 = vpop.f32.mrf.mxu0
  %v1468 = vadd.f32 %v83, %v1467
  %v1469 = vpop.f32.mrf.mxu0
  %1470 = vdwg.mxu0
  %v1471 = vmax.f32 %v1468, 0.0
  %v1472 = vpack.c.bf16 %v1471, %v1471
  %v1474 = vsel %vm143, %v1472, 0
  %1476 = vmatpush.bf16.msra.mxu0 0
  %1477 = vmatpush.bf16.msra.mxu0 0
  %1478 = vmatpush.bf16.msra.mxu0 0
  %1479 = vmatpush.bf16.msra.mxu0 0
  %1480 = vmatpush.bf16.msra.mxu0 %v138
  %1481 = vmatpush.bf16.msra.mxu0 %v137
  %1482 = vmatpush.bf16.msra.mxu0 %v136
  %1483 = vmatpush.bf16.msra.mxu0 %v135
  %1484 = vmatmul.bf16.gmra.mxu0 %v1474
  %v1485 = vpop.f32.mrf.mxu0
  %v1486 = vadd.f32 %v117, %v1485
  %v1487 = vpop.f32.mrf.mxu0
  %1488 = vdwg.mxu0
  %v1489 = vmax.f32 %v1486, 0.0
  %v1490 = vpack.c.bf16 %v1489, %v1489
  %v1492 = vsel %vm143, %v1490, 0
  %1494 = vmatpush.bf16.msra.mxu0 0
  %1495 = vmatpush.bf16.msra.mxu0 0
  %1496 = vmatpush.bf16.msra.mxu0 0
  %1497 = vmatpush.bf16.msra.mxu0 0
  %1498 = vmatpush.bf16.msra.mxu0 %v184
  %1499 = vmatpush.bf16.msra.mxu0 %v183
  %1500 = vmatpush.bf16.msra.mxu0 %v182
  %1501 = vmatpush.bf16.msra.mxu0 %v181
  %1502 = vmatmul.bf16.gmra.mxu0 %v1492
  %v1503 = vpop.f32.mrf.mxu0
  %v1504 = vadd.f32 %v163, %v1503
  %v1505 = vpop.f32.mrf.mxu0
  %1506 = vdwg.mxu0
  %v1507 = vmax.f32 %v1504, 0.0
  %v1508 = vpack.c.bf16 %v1507, %v1507
  %v1510 = vsel %vm143, %v1508, 0
  %1512 = vmatpush.bf16.msra.mxu0 0
  %1513 = vmatpush.bf16.msra.mxu0 0
  %1514 = vmatpush.bf16.msra.mxu0 0
  %1515 = vmatpush.bf16.msra.mxu0 0
  %1516 = vmatpush.bf16.msra.mxu0 %v229
  %1517 = vmatpush.bf16.msra.mxu0 %v228
  %1518 = vmatpush.bf16.msra.mxu0 %v227
  %1519 = vmatpush.bf16.msra.mxu0 %v226
  %1520 = vmatmul.bf16.gmra.mxu0 %v1510
  %v1521 = vpop.f32.mrf.mxu0
  %v1522 = vadd.f32 %v208, %v1521
  %v1523 = vpop.f32.mrf.mxu0
  %1524 = vdwg.mxu0
  %v1525 = vtanh.pop %v1522
  %v1526 = vmul.f32 %v1525, %v1453
  %1528 = vrot.lane.b32.xlu0 %v1526, 96
  %v1529 = vpop.permute.xlu0 %1528
  %v1531 = vadd.f32 %v1526, %v1529
  %1532 = vrot.lane.b32.xlu0 %v1526, 64
  %v1533 = vpop.permute.xlu0 %1532
  %v1535 = vadd.f32 %v1531, %v1533
  %1536 = vrot.lane.b32.xlu0 %v1526, 32
  %v1537 = vpop.permute.xlu0 %1536
  %v1539 = vadd.f32 %v1535, %v1537
  %v1540 = vsub.f32 %v1359, %v1449
  %v1541 = vadd.f32 %v1540, %v1539
  %v1542 = vadd.f32 %v1271, %v1541
  %s1543 = scalar_lea.vmem %s1, 120
  %v1544 = vld [vmem:[%s1543] sm:$0xff]
  %v1545 = vpack.c.bf16 %v1542, %v1542
  %v1547 = vsel %vm97, %v1545, 0
  %1549 = vmatpush.bf16.msra.mxu0 0
  %1550 = vmatpush.bf16.msra.mxu0 0
  %1551 = vmatpush.bf16.msra.mxu0 0
  %1552 = vmatpush.bf16.msra.mxu0 0
  %1553 = vmatpush.bf16.msra.mxu0 0
  %1554 = vmatpush.bf16.msra.mxu0 0
  %1555 = vmatpush.bf16.msra.mxu0 %v94
  %1556 = vmatpush.bf16.msra.mxu0 %v93
  %1557 = vmatmul.bf16.gmra.mxu0 %v1547
  %v1558 = vpop.f32.mrf.mxu0
  %v1559 = vadd.f32 %v83, %v1558
  %v1560 = vpop.f32.mrf.mxu0
  %1561 = vdwg.mxu0
  %v1562 = vmax.f32 %v1559, 0.0
  %v1563 = vpack.c.bf16 %v1562, %v1562
  %v1565 = vsel %vm143, %v1563, 0
  %1567 = vmatpush.bf16.msra.mxu0 0
  %1568 = vmatpush.bf16.msra.mxu0 0
  %1569 = vmatpush.bf16.msra.mxu0 0
  %1570 = vmatpush.bf16.msra.mxu0 0
  %1571 = vmatpush.bf16.msra.mxu0 %v138
  %1572 = vmatpush.bf16.msra.mxu0 %v137
  %1573 = vmatpush.bf16.msra.mxu0 %v136
  %1574 = vmatpush.bf16.msra.mxu0 %v135
  %1575 = vmatmul.bf16.gmra.mxu0 %v1565
  %v1576 = vpop.f32.mrf.mxu0
  %v1577 = vadd.f32 %v117, %v1576
  %v1578 = vpop.f32.mrf.mxu0
  %1579 = vdwg.mxu0
  %v1580 = vmax.f32 %v1577, 0.0
  %v1581 = vpack.c.bf16 %v1580, %v1580
  %v1583 = vsel %vm143, %v1581, 0
  %1585 = vmatpush.bf16.msra.mxu0 0
  %1586 = vmatpush.bf16.msra.mxu0 0
  %1587 = vmatpush.bf16.msra.mxu0 0
  %1588 = vmatpush.bf16.msra.mxu0 0
  %1589 = vmatpush.bf16.msra.mxu0 %v184
  %1590 = vmatpush.bf16.msra.mxu0 %v183
  %1591 = vmatpush.bf16.msra.mxu0 %v182
  %1592 = vmatpush.bf16.msra.mxu0 %v181
  %1593 = vmatmul.bf16.gmra.mxu0 %v1583
  %v1594 = vpop.f32.mrf.mxu0
  %v1595 = vadd.f32 %v163, %v1594
  %v1596 = vpop.f32.mrf.mxu0
  %1597 = vdwg.mxu0
  %v1598 = vmax.f32 %v1595, 0.0
  %v1599 = vpack.c.bf16 %v1598, %v1598
  %v1601 = vsel %vm143, %v1599, 0
  %1603 = vmatpush.bf16.msra.mxu0 0
  %1604 = vmatpush.bf16.msra.mxu0 0
  %1605 = vmatpush.bf16.msra.mxu0 0
  %1606 = vmatpush.bf16.msra.mxu0 0
  %1607 = vmatpush.bf16.msra.mxu0 %v229
  %1608 = vmatpush.bf16.msra.mxu0 %v228
  %1609 = vmatpush.bf16.msra.mxu0 %v227
  %1610 = vmatpush.bf16.msra.mxu0 %v226
  %1611 = vmatmul.bf16.gmra.mxu0 %v1601
  %v1612 = vpop.f32.mrf.mxu0
  %v1613 = vadd.f32 %v208, %v1612
  %v1614 = vpop.f32.mrf.mxu0
  %1615 = vdwg.mxu0
  %v1616 = vtanh.pop %v1613
  %v1617 = vmul.f32 %v1616, %v1544
  %1619 = vrot.lane.b32.xlu0 %v1617, 96
  %v1620 = vpop.permute.xlu0 %1619
  %v1622 = vadd.f32 %v1617, %v1620
  %1623 = vrot.lane.b32.xlu0 %v1617, 64
  %v1624 = vpop.permute.xlu0 %1623
  %v1626 = vadd.f32 %v1622, %v1624
  %1627 = vrot.lane.b32.xlu0 %v1617, 32
  %v1628 = vpop.permute.xlu0 %1627
  %v1630 = vadd.f32 %v1626, %v1628
  %v1631 = vadd.f32 %v1449, %v1539
  %v1632 = vmul.f32 %v1631, 3.0
  %v1633 = vadd.f32 %v1359, %v1632
  %v1634 = vadd.f32 %v1633, %v1630
  %v1635 = vmul.f32 %v1634, 0.125
  %v1636 = vadd.f32 %v1271, %v1635
  %s1637 = scalar_lea.vmem %s1, 128
  %v1638 = vld [vmem:[%s1637] sm:$0xff]
  %v1639 = vpack.c.bf16 %v1636, %v1636
  %v1641 = vsel %vm97, %v1639, 0
  %1643 = vmatpush.bf16.msra.mxu0 0
  %1644 = vmatpush.bf16.msra.mxu0 0
  %1645 = vmatpush.bf16.msra.mxu0 0
  %1646 = vmatpush.bf16.msra.mxu0 0
  %1647 = vmatpush.bf16.msra.mxu0 0
  %1648 = vmatpush.bf16.msra.mxu0 0
  %1649 = vmatpush.bf16.msra.mxu0 %v94
  %1650 = vmatpush.bf16.msra.mxu0 %v93
  %1651 = vmatmul.bf16.gmra.mxu0 %v1641
  %v1652 = vpop.f32.mrf.mxu0
  %v1653 = vadd.f32 %v83, %v1652
  %v1654 = vpop.f32.mrf.mxu0
  %1655 = vdwg.mxu0
  %v1656 = vmax.f32 %v1653, 0.0
  %v1657 = vpack.c.bf16 %v1656, %v1656
  %v1659 = vsel %vm143, %v1657, 0
  %1661 = vmatpush.bf16.msra.mxu0 0
  %1662 = vmatpush.bf16.msra.mxu0 0
  %1663 = vmatpush.bf16.msra.mxu0 0
  %1664 = vmatpush.bf16.msra.mxu0 0
  %1665 = vmatpush.bf16.msra.mxu0 %v138
  %1666 = vmatpush.bf16.msra.mxu0 %v137
  %1667 = vmatpush.bf16.msra.mxu0 %v136
  %1668 = vmatpush.bf16.msra.mxu0 %v135
  %1669 = vmatmul.bf16.gmra.mxu0 %v1659
  %v1670 = vpop.f32.mrf.mxu0
  %v1671 = vadd.f32 %v117, %v1670
  %v1672 = vpop.f32.mrf.mxu0
  %1673 = vdwg.mxu0
  %v1674 = vmax.f32 %v1671, 0.0
  %v1675 = vpack.c.bf16 %v1674, %v1674
  %v1677 = vsel %vm143, %v1675, 0
  %1679 = vmatpush.bf16.msra.mxu0 0
  %1680 = vmatpush.bf16.msra.mxu0 0
  %1681 = vmatpush.bf16.msra.mxu0 0
  %1682 = vmatpush.bf16.msra.mxu0 0
  %1683 = vmatpush.bf16.msra.mxu0 %v184
  %1684 = vmatpush.bf16.msra.mxu0 %v183
  %1685 = vmatpush.bf16.msra.mxu0 %v182
  %1686 = vmatpush.bf16.msra.mxu0 %v181
  %1687 = vmatmul.bf16.gmra.mxu0 %v1677
  %v1688 = vpop.f32.mrf.mxu0
  %v1689 = vadd.f32 %v163, %v1688
  %v1690 = vpop.f32.mrf.mxu0
  %1691 = vdwg.mxu0
  %v1692 = vmax.f32 %v1689, 0.0
  %v1693 = vpack.c.bf16 %v1692, %v1692
  %v1695 = vsel %vm143, %v1693, 0
  %1697 = vmatpush.bf16.msra.mxu0 0
  %1698 = vmatpush.bf16.msra.mxu0 0
  %1699 = vmatpush.bf16.msra.mxu0 0
  %1700 = vmatpush.bf16.msra.mxu0 0
  %1701 = vmatpush.bf16.msra.mxu0 %v229
  %1702 = vmatpush.bf16.msra.mxu0 %v228
  %1703 = vmatpush.bf16.msra.mxu0 %v227
  %1704 = vmatpush.bf16.msra.mxu0 %v226
  %1705 = vmatmul.bf16.gmra.mxu0 %v1695
  %v1706 = vpop.f32.mrf.mxu0
  %v1707 = vadd.f32 %v208, %v1706
  %v1708 = vpop.f32.mrf.mxu0
  %1709 = vdwg.mxu0
  %v1710 = vtanh.pop %v1707
  %v1711 = vmul.f32 %v1710, %v1638
  %1713 = vrot.lane.b32.xlu0 %v1711, 96
  %v1714 = vpop.permute.xlu0 %1713
  %v1716 = vadd.f32 %v1711, %v1714
  %1717 = vrot.lane.b32.xlu0 %v1711, 64
  %v1718 = vpop.permute.xlu0 %1717
  %v1720 = vadd.f32 %v1716, %v1718
  %1721 = vrot.lane.b32.xlu0 %v1711, 32
  %v1722 = vpop.permute.xlu0 %1721
  %v1724 = vadd.f32 %v1720, %v1722
  %v1725 = vmul.f32 %v1724, 0.33333334
  %v1726 = vadd.f32 %v1636, %v1725
  %s1727 = scalar_lea.vmem %s1, 136
  %v1728 = vld [vmem:[%s1727] sm:$0xff]
  %v1729 = vpack.c.bf16 %v1726, %v1726
  %v1731 = vsel %vm97, %v1729, 0
  %1733 = vmatpush.bf16.msra.mxu0 0
  %1734 = vmatpush.bf16.msra.mxu0 0
  %1735 = vmatpush.bf16.msra.mxu0 0
  %1736 = vmatpush.bf16.msra.mxu0 0
  %1737 = vmatpush.bf16.msra.mxu0 0
  %1738 = vmatpush.bf16.msra.mxu0 0
  %1739 = vmatpush.bf16.msra.mxu0 %v94
  %1740 = vmatpush.bf16.msra.mxu0 %v93
  %1741 = vmatmul.bf16.gmra.mxu0 %v1731
  %v1742 = vpop.f32.mrf.mxu0
  %v1743 = vadd.f32 %v83, %v1742
  %v1744 = vpop.f32.mrf.mxu0
  %1745 = vdwg.mxu0
  %v1746 = vmax.f32 %v1743, 0.0
  %v1747 = vpack.c.bf16 %v1746, %v1746
  %v1749 = vsel %vm143, %v1747, 0
  %1751 = vmatpush.bf16.msra.mxu0 0
  %1752 = vmatpush.bf16.msra.mxu0 0
  %1753 = vmatpush.bf16.msra.mxu0 0
  %1754 = vmatpush.bf16.msra.mxu0 0
  %1755 = vmatpush.bf16.msra.mxu0 %v138
  %1756 = vmatpush.bf16.msra.mxu0 %v137
  %1757 = vmatpush.bf16.msra.mxu0 %v136
  %1758 = vmatpush.bf16.msra.mxu0 %v135
  %1759 = vmatmul.bf16.gmra.mxu0 %v1749
  %v1760 = vpop.f32.mrf.mxu0
  %v1761 = vadd.f32 %v117, %v1760
  %v1762 = vpop.f32.mrf.mxu0
  %1763 = vdwg.mxu0
  %v1764 = vmax.f32 %v1761, 0.0
  %v1765 = vpack.c.bf16 %v1764, %v1764
  %v1767 = vsel %vm143, %v1765, 0
  %1769 = vmatpush.bf16.msra.mxu0 0
  %1770 = vmatpush.bf16.msra.mxu0 0
  %1771 = vmatpush.bf16.msra.mxu0 0
  %1772 = vmatpush.bf16.msra.mxu0 0
  %1773 = vmatpush.bf16.msra.mxu0 %v184
  %1774 = vmatpush.bf16.msra.mxu0 %v183
  %1775 = vmatpush.bf16.msra.mxu0 %v182
  %1776 = vmatpush.bf16.msra.mxu0 %v181
  %1777 = vmatmul.bf16.gmra.mxu0 %v1767
  %v1778 = vpop.f32.mrf.mxu0
  %v1779 = vadd.f32 %v163, %v1778
  %v1780 = vpop.f32.mrf.mxu0
  %1781 = vdwg.mxu0
  %v1782 = vmax.f32 %v1779, 0.0
  %v1783 = vpack.c.bf16 %v1782, %v1782
  %v1785 = vsel %vm143, %v1783, 0
  %1787 = vmatpush.bf16.msra.mxu0 0
  %1788 = vmatpush.bf16.msra.mxu0 0
  %1789 = vmatpush.bf16.msra.mxu0 0
  %1790 = vmatpush.bf16.msra.mxu0 0
  %1791 = vmatpush.bf16.msra.mxu0 %v229
  %1792 = vmatpush.bf16.msra.mxu0 %v228
  %1793 = vmatpush.bf16.msra.mxu0 %v227
  %1794 = vmatpush.bf16.msra.mxu0 %v226
  %1795 = vmatmul.bf16.gmra.mxu0 %v1785
  %v1796 = vpop.f32.mrf.mxu0
  %v1797 = vadd.f32 %v208, %v1796
  %v1798 = vpop.f32.mrf.mxu0
  %1799 = vdwg.mxu0
  %v1800 = vtanh.pop %v1797
  %v1801 = vmul.f32 %v1800, %v1728
  %1803 = vrot.lane.b32.xlu0 %v1801, 96
  %v1804 = vpop.permute.xlu0 %1803
  %v1806 = vadd.f32 %v1801, %v1804
  %1807 = vrot.lane.b32.xlu0 %v1801, 64
  %v1808 = vpop.permute.xlu0 %1807
  %v1810 = vadd.f32 %v1806, %v1808
  %1811 = vrot.lane.b32.xlu0 %v1801, 32
  %v1812 = vpop.permute.xlu0 %1811
  %v1814 = vadd.f32 %v1810, %v1812
  %v1815 = vsub.f32 %v1814, %v1725
  %v1816 = vadd.f32 %v1636, %v1815
  %s1817 = scalar_lea.vmem %s1, 144
  %v1818 = vld [vmem:[%s1817] sm:$0xff]
  %v1819 = vpack.c.bf16 %v1816, %v1816
  %v1821 = vsel %vm97, %v1819, 0
  %1823 = vmatpush.bf16.msra.mxu0 0
  %1824 = vmatpush.bf16.msra.mxu0 0
  %1825 = vmatpush.bf16.msra.mxu0 0
  %1826 = vmatpush.bf16.msra.mxu0 0
  %1827 = vmatpush.bf16.msra.mxu0 0
  %1828 = vmatpush.bf16.msra.mxu0 0
  %1829 = vmatpush.bf16.msra.mxu0 %v94
  %1830 = vmatpush.bf16.msra.mxu0 %v93
  %1831 = vmatmul.bf16.gmra.mxu0 %v1821
  %v1832 = vpop.f32.mrf.mxu0
  %v1833 = vadd.f32 %v83, %v1832
  %v1834 = vpop.f32.mrf.mxu0
  %1835 = vdwg.mxu0
  %v1836 = vmax.f32 %v1833, 0.0
  %v1837 = vpack.c.bf16 %v1836, %v1836
  %v1839 = vsel %vm143, %v1837, 0
  %1841 = vmatpush.bf16.msra.mxu0 0
  %1842 = vmatpush.bf16.msra.mxu0 0
  %1843 = vmatpush.bf16.msra.mxu0 0
  %1844 = vmatpush.bf16.msra.mxu0 0
  %1845 = vmatpush.bf16.msra.mxu0 %v138
  %1846 = vmatpush.bf16.msra.mxu0 %v137
  %1847 = vmatpush.bf16.msra.mxu0 %v136
  %1848 = vmatpush.bf16.msra.mxu0 %v135
  %1849 = vmatmul.bf16.gmra.mxu0 %v1839
  %v1850 = vpop.f32.mrf.mxu0
  %v1851 = vadd.f32 %v117, %v1850
  %v1852 = vpop.f32.mrf.mxu0
  %1853 = vdwg.mxu0
  %v1854 = vmax.f32 %v1851, 0.0
  %v1855 = vpack.c.bf16 %v1854, %v1854
  %v1857 = vsel %vm143, %v1855, 0
  %1859 = vmatpush.bf16.msra.mxu0 0
  %1860 = vmatpush.bf16.msra.mxu0 0
  %1861 = vmatpush.bf16.msra.mxu0 0
  %1862 = vmatpush.bf16.msra.mxu0 0
  %1863 = vmatpush.bf16.msra.mxu0 %v184
  %1864 = vmatpush.bf16.msra.mxu0 %v183
  %1865 = vmatpush.bf16.msra.mxu0 %v182
  %1866 = vmatpush.bf16.msra.mxu0 %v181
  %1867 = vmatmul.bf16.gmra.mxu0 %v1857
  %v1868 = vpop.f32.mrf.mxu0
  %v1869 = vadd.f32 %v163, %v1868
  %v1870 = vpop.f32.mrf.mxu0
  %1871 = vdwg.mxu0
  %v1872 = vmax.f32 %v1869, 0.0
  %v1873 = vpack.c.bf16 %v1872, %v1872
  %v1875 = vsel %vm143, %v1873, 0
  %1877 = vmatpush.bf16.msra.mxu0 0
  %1878 = vmatpush.bf16.msra.mxu0 0
  %1879 = vmatpush.bf16.msra.mxu0 0
  %1880 = vmatpush.bf16.msra.mxu0 0
  %1881 = vmatpush.bf16.msra.mxu0 %v229
  %1882 = vmatpush.bf16.msra.mxu0 %v228
  %1883 = vmatpush.bf16.msra.mxu0 %v227
  %1884 = vmatpush.bf16.msra.mxu0 %v226
  %1885 = vmatmul.bf16.gmra.mxu0 %v1875
  %v1886 = vpop.f32.mrf.mxu0
  %v1887 = vadd.f32 %v208, %v1886
  %v1888 = vpop.f32.mrf.mxu0
  %1889 = vdwg.mxu0
  %v1890 = vtanh.pop %v1887
  %v1891 = vmul.f32 %v1890, %v1818
  %1893 = vrot.lane.b32.xlu0 %v1891, 96
  %v1894 = vpop.permute.xlu0 %1893
  %v1896 = vadd.f32 %v1891, %v1894
  %1897 = vrot.lane.b32.xlu0 %v1891, 64
  %v1898 = vpop.permute.xlu0 %1897
  %v1900 = vadd.f32 %v1896, %v1898
  %1901 = vrot.lane.b32.xlu0 %v1891, 32
  %v1902 = vpop.permute.xlu0 %1901
  %v1904 = vadd.f32 %v1900, %v1902
  %v1905 = vsub.f32 %v1724, %v1814
  %v1906 = vadd.f32 %v1905, %v1904
  %v1907 = vadd.f32 %v1636, %v1906
  %s1908 = scalar_lea.vmem %s1, 152
  %v1909 = vld [vmem:[%s1908] sm:$0xff]
  %v1910 = vpack.c.bf16 %v1907, %v1907
  %v1912 = vsel %vm97, %v1910, 0
  %1914 = vmatpush.bf16.msra.mxu0 0
  %1915 = vmatpush.bf16.msra.mxu0 0
  %1916 = vmatpush.bf16.msra.mxu0 0
  %1917 = vmatpush.bf16.msra.mxu0 0
  %1918 = vmatpush.bf16.msra.mxu0 0
  %1919 = vmatpush.bf16.msra.mxu0 0
  %1920 = vmatpush.bf16.msra.mxu0 %v94
  %1921 = vmatpush.bf16.msra.mxu0 %v93
  %1922 = vmatmul.bf16.gmra.mxu0 %v1912
  %v1923 = vpop.f32.mrf.mxu0
  %v1924 = vadd.f32 %v83, %v1923
  %v1925 = vpop.f32.mrf.mxu0
  %1926 = vdwg.mxu0
  %v1927 = vmax.f32 %v1924, 0.0
  %v1928 = vpack.c.bf16 %v1927, %v1927
  %v1930 = vsel %vm143, %v1928, 0
  %1932 = vmatpush.bf16.msra.mxu0 0
  %1933 = vmatpush.bf16.msra.mxu0 0
  %1934 = vmatpush.bf16.msra.mxu0 0
  %1935 = vmatpush.bf16.msra.mxu0 0
  %1936 = vmatpush.bf16.msra.mxu0 %v138
  %1937 = vmatpush.bf16.msra.mxu0 %v137
  %1938 = vmatpush.bf16.msra.mxu0 %v136
  %1939 = vmatpush.bf16.msra.mxu0 %v135
  %1940 = vmatmul.bf16.gmra.mxu0 %v1930
  %v1941 = vpop.f32.mrf.mxu0
  %v1942 = vadd.f32 %v117, %v1941
  %v1943 = vpop.f32.mrf.mxu0
  %1944 = vdwg.mxu0
  %v1945 = vmax.f32 %v1942, 0.0
  %v1946 = vpack.c.bf16 %v1945, %v1945
  %v1948 = vsel %vm143, %v1946, 0
  %1950 = vmatpush.bf16.msra.mxu0 0
  %1951 = vmatpush.bf16.msra.mxu0 0
  %1952 = vmatpush.bf16.msra.mxu0 0
  %1953 = vmatpush.bf16.msra.mxu0 0
  %1954 = vmatpush.bf16.msra.mxu0 %v184
  %1955 = vmatpush.bf16.msra.mxu0 %v183
  %1956 = vmatpush.bf16.msra.mxu0 %v182
  %1957 = vmatpush.bf16.msra.mxu0 %v181
  %1958 = vmatmul.bf16.gmra.mxu0 %v1948
  %v1959 = vpop.f32.mrf.mxu0
  %v1960 = vadd.f32 %v163, %v1959
  %v1961 = vpop.f32.mrf.mxu0
  %1962 = vdwg.mxu0
  %v1963 = vmax.f32 %v1960, 0.0
  %v1964 = vpack.c.bf16 %v1963, %v1963
  %v1966 = vsel %vm143, %v1964, 0
  %1968 = vmatpush.bf16.msra.mxu0 0
  %1969 = vmatpush.bf16.msra.mxu0 0
  %1970 = vmatpush.bf16.msra.mxu0 0
  %1971 = vmatpush.bf16.msra.mxu0 0
  %1972 = vmatpush.bf16.msra.mxu0 %v229
  %1973 = vmatpush.bf16.msra.mxu0 %v228
  %1974 = vmatpush.bf16.msra.mxu0 %v227
  %1975 = vmatpush.bf16.msra.mxu0 %v226
  %1976 = vmatmul.bf16.gmra.mxu0 %v1966
  %v1977 = vpop.f32.mrf.mxu0
  %v1978 = vadd.f32 %v208, %v1977
  %v1979 = vpop.f32.mrf.mxu0
  %1980 = vdwg.mxu0
  %v1981 = vtanh.pop %v1978
  %v1982 = vmul.f32 %v1981, %v1909
  %1984 = vrot.lane.b32.xlu0 %v1982, 96
  %v1985 = vpop.permute.xlu0 %1984
  %v1987 = vadd.f32 %v1982, %v1985
  %1988 = vrot.lane.b32.xlu0 %v1982, 64
  %v1989 = vpop.permute.xlu0 %1988
  %v1991 = vadd.f32 %v1987, %v1989
  %1992 = vrot.lane.b32.xlu0 %v1982, 32
  %v1993 = vpop.permute.xlu0 %1992
  %v1995 = vadd.f32 %v1991, %v1993
  %v1996 = vadd.f32 %v1814, %v1904
  %v1997 = vmul.f32 %v1996, 3.0
  %v1998 = vadd.f32 %v1724, %v1997
  %v1999 = vadd.f32 %v1998, %v1995
  %v2000 = vmul.f32 %v1999, 0.125
  %v2001 = vadd.f32 %v1636, %v2000
  %s2002 = scalar_lea.vmem %s1, 160
  %v2003 = vld [vmem:[%s2002] sm:$0xff]
  %v2004 = vpack.c.bf16 %v2001, %v2001
  %v2006 = vsel %vm97, %v2004, 0
  %2008 = vmatpush.bf16.msra.mxu0 0
  %2009 = vmatpush.bf16.msra.mxu0 0
  %2010 = vmatpush.bf16.msra.mxu0 0
  %2011 = vmatpush.bf16.msra.mxu0 0
  %2012 = vmatpush.bf16.msra.mxu0 0
  %2013 = vmatpush.bf16.msra.mxu0 0
  %2014 = vmatpush.bf16.msra.mxu0 %v94
  %2015 = vmatpush.bf16.msra.mxu0 %v93
  %2016 = vmatmul.bf16.gmra.mxu0 %v2006
  %v2017 = vpop.f32.mrf.mxu0
  %v2018 = vadd.f32 %v83, %v2017
  %v2019 = vpop.f32.mrf.mxu0
  %2020 = vdwg.mxu0
  %v2021 = vmax.f32 %v2018, 0.0
  %v2022 = vpack.c.bf16 %v2021, %v2021
  %v2024 = vsel %vm143, %v2022, 0
  %2026 = vmatpush.bf16.msra.mxu0 0
  %2027 = vmatpush.bf16.msra.mxu0 0
  %2028 = vmatpush.bf16.msra.mxu0 0
  %2029 = vmatpush.bf16.msra.mxu0 0
  %2030 = vmatpush.bf16.msra.mxu0 %v138
  %2031 = vmatpush.bf16.msra.mxu0 %v137
  %2032 = vmatpush.bf16.msra.mxu0 %v136
  %2033 = vmatpush.bf16.msra.mxu0 %v135
  %2034 = vmatmul.bf16.gmra.mxu0 %v2024
  %v2035 = vpop.f32.mrf.mxu0
  %v2036 = vadd.f32 %v117, %v2035
  %v2037 = vpop.f32.mrf.mxu0
  %2038 = vdwg.mxu0
  %v2039 = vmax.f32 %v2036, 0.0
  %v2040 = vpack.c.bf16 %v2039, %v2039
  %v2042 = vsel %vm143, %v2040, 0
  %2044 = vmatpush.bf16.msra.mxu0 0
  %2045 = vmatpush.bf16.msra.mxu0 0
  %2046 = vmatpush.bf16.msra.mxu0 0
  %2047 = vmatpush.bf16.msra.mxu0 0
  %2048 = vmatpush.bf16.msra.mxu0 %v184
  %2049 = vmatpush.bf16.msra.mxu0 %v183
  %2050 = vmatpush.bf16.msra.mxu0 %v182
  %2051 = vmatpush.bf16.msra.mxu0 %v181
  %2052 = vmatmul.bf16.gmra.mxu0 %v2042
  %v2053 = vpop.f32.mrf.mxu0
  %v2054 = vadd.f32 %v163, %v2053
  %v2055 = vpop.f32.mrf.mxu0
  %2056 = vdwg.mxu0
  %v2057 = vmax.f32 %v2054, 0.0
  %v2058 = vpack.c.bf16 %v2057, %v2057
  %v2060 = vsel %vm143, %v2058, 0
  %2062 = vmatpush.bf16.msra.mxu0 0
  %2063 = vmatpush.bf16.msra.mxu0 0
  %2064 = vmatpush.bf16.msra.mxu0 0
  %2065 = vmatpush.bf16.msra.mxu0 0
  %2066 = vmatpush.bf16.msra.mxu0 %v229
  %2067 = vmatpush.bf16.msra.mxu0 %v228
  %2068 = vmatpush.bf16.msra.mxu0 %v227
  %2069 = vmatpush.bf16.msra.mxu0 %v226
  %2070 = vmatmul.bf16.gmra.mxu0 %v2060
  %v2071 = vpop.f32.mrf.mxu0
  %v2072 = vadd.f32 %v208, %v2071
  %v2073 = vpop.f32.mrf.mxu0
  %2074 = vdwg.mxu0
  %v2075 = vtanh.pop %v2072
  %v2076 = vmul.f32 %v2075, %v2003
  %2078 = vrot.lane.b32.xlu0 %v2076, 96
  %v2079 = vpop.permute.xlu0 %2078
  %v2081 = vadd.f32 %v2076, %v2079
  %2082 = vrot.lane.b32.xlu0 %v2076, 64
  %v2083 = vpop.permute.xlu0 %2082
  %v2085 = vadd.f32 %v2081, %v2083
  %2086 = vrot.lane.b32.xlu0 %v2076, 32
  %v2087 = vpop.permute.xlu0 %2086
  %v2089 = vadd.f32 %v2085, %v2087
  %v2090 = vmul.f32 %v2089, 0.33333334
  %v2091 = vadd.f32 %v2001, %v2090
  %s2092 = scalar_lea.vmem %s1, 168
  %v2093 = vld [vmem:[%s2092] sm:$0xff]
  %v2094 = vpack.c.bf16 %v2091, %v2091
  %v2096 = vsel %vm97, %v2094, 0
  %2098 = vmatpush.bf16.msra.mxu0 0
  %2099 = vmatpush.bf16.msra.mxu0 0
  %2100 = vmatpush.bf16.msra.mxu0 0
  %2101 = vmatpush.bf16.msra.mxu0 0
  %2102 = vmatpush.bf16.msra.mxu0 0
  %2103 = vmatpush.bf16.msra.mxu0 0
  %2104 = vmatpush.bf16.msra.mxu0 %v94
  %2105 = vmatpush.bf16.msra.mxu0 %v93
  %2106 = vmatmul.bf16.gmra.mxu0 %v2096
  %v2107 = vpop.f32.mrf.mxu0
  %v2108 = vadd.f32 %v83, %v2107
  %v2109 = vpop.f32.mrf.mxu0
  %2110 = vdwg.mxu0
  %v2111 = vmax.f32 %v2108, 0.0
  %v2112 = vpack.c.bf16 %v2111, %v2111
  %v2114 = vsel %vm143, %v2112, 0
  %2116 = vmatpush.bf16.msra.mxu0 0
  %2117 = vmatpush.bf16.msra.mxu0 0
  %2118 = vmatpush.bf16.msra.mxu0 0
  %2119 = vmatpush.bf16.msra.mxu0 0
  %2120 = vmatpush.bf16.msra.mxu0 %v138
  %2121 = vmatpush.bf16.msra.mxu0 %v137
  %2122 = vmatpush.bf16.msra.mxu0 %v136
  %2123 = vmatpush.bf16.msra.mxu0 %v135
  %2124 = vmatmul.bf16.gmra.mxu0 %v2114
  %v2125 = vpop.f32.mrf.mxu0
  %v2126 = vadd.f32 %v117, %v2125
  %v2127 = vpop.f32.mrf.mxu0
  %2128 = vdwg.mxu0
  %v2129 = vmax.f32 %v2126, 0.0
  %v2130 = vpack.c.bf16 %v2129, %v2129
  %v2132 = vsel %vm143, %v2130, 0
  %2134 = vmatpush.bf16.msra.mxu0 0
  %2135 = vmatpush.bf16.msra.mxu0 0
  %2136 = vmatpush.bf16.msra.mxu0 0
  %2137 = vmatpush.bf16.msra.mxu0 0
  %2138 = vmatpush.bf16.msra.mxu0 %v184
  %2139 = vmatpush.bf16.msra.mxu0 %v183
  %2140 = vmatpush.bf16.msra.mxu0 %v182
  %2141 = vmatpush.bf16.msra.mxu0 %v181
  %2142 = vmatmul.bf16.gmra.mxu0 %v2132
  %v2143 = vpop.f32.mrf.mxu0
  %v2144 = vadd.f32 %v163, %v2143
  %v2145 = vpop.f32.mrf.mxu0
  %2146 = vdwg.mxu0
  %v2147 = vmax.f32 %v2144, 0.0
  %v2148 = vpack.c.bf16 %v2147, %v2147
  %v2150 = vsel %vm143, %v2148, 0
  %2152 = vmatpush.bf16.msra.mxu0 0
  %2153 = vmatpush.bf16.msra.mxu0 0
  %2154 = vmatpush.bf16.msra.mxu0 0
  %2155 = vmatpush.bf16.msra.mxu0 0
  %2156 = vmatpush.bf16.msra.mxu0 %v229
  %2157 = vmatpush.bf16.msra.mxu0 %v228
  %2158 = vmatpush.bf16.msra.mxu0 %v227
  %2159 = vmatpush.bf16.msra.mxu0 %v226
  %2160 = vmatmul.bf16.gmra.mxu0 %v2150
  %v2161 = vpop.f32.mrf.mxu0
  %v2162 = vadd.f32 %v208, %v2161
  %v2163 = vpop.f32.mrf.mxu0
  %2164 = vdwg.mxu0
  %v2165 = vtanh.pop %v2162
  %v2166 = vmul.f32 %v2165, %v2093
  %2168 = vrot.lane.b32.xlu0 %v2166, 96
  %v2169 = vpop.permute.xlu0 %2168
  %v2171 = vadd.f32 %v2166, %v2169
  %2172 = vrot.lane.b32.xlu0 %v2166, 64
  %v2173 = vpop.permute.xlu0 %2172
  %v2175 = vadd.f32 %v2171, %v2173
  %2176 = vrot.lane.b32.xlu0 %v2166, 32
  %v2177 = vpop.permute.xlu0 %2176
  %v2179 = vadd.f32 %v2175, %v2177
  %v2180 = vsub.f32 %v2179, %v2090
  %v2181 = vadd.f32 %v2001, %v2180
  %s2182 = scalar_lea.vmem %s1, 176
  %v2183 = vld [vmem:[%s2182] sm:$0xff]
  %v2184 = vpack.c.bf16 %v2181, %v2181
  %v2186 = vsel %vm97, %v2184, 0
  %2188 = vmatpush.bf16.msra.mxu0 0
  %2189 = vmatpush.bf16.msra.mxu0 0
  %2190 = vmatpush.bf16.msra.mxu0 0
  %2191 = vmatpush.bf16.msra.mxu0 0
  %2192 = vmatpush.bf16.msra.mxu0 0
  %2193 = vmatpush.bf16.msra.mxu0 0
  %2194 = vmatpush.bf16.msra.mxu0 %v94
  %2195 = vmatpush.bf16.msra.mxu0 %v93
  %2196 = vmatmul.bf16.gmra.mxu0 %v2186
  %v2197 = vpop.f32.mrf.mxu0
  %v2198 = vadd.f32 %v83, %v2197
  %v2199 = vpop.f32.mrf.mxu0
  %2200 = vdwg.mxu0
  %v2201 = vmax.f32 %v2198, 0.0
  %v2202 = vpack.c.bf16 %v2201, %v2201
  %v2204 = vsel %vm143, %v2202, 0
  %2206 = vmatpush.bf16.msra.mxu0 0
  %2207 = vmatpush.bf16.msra.mxu0 0
  %2208 = vmatpush.bf16.msra.mxu0 0
  %2209 = vmatpush.bf16.msra.mxu0 0
  %2210 = vmatpush.bf16.msra.mxu0 %v138
  %2211 = vmatpush.bf16.msra.mxu0 %v137
  %2212 = vmatpush.bf16.msra.mxu0 %v136
  %2213 = vmatpush.bf16.msra.mxu0 %v135
  %2214 = vmatmul.bf16.gmra.mxu0 %v2204
  %v2215 = vpop.f32.mrf.mxu0
  %v2216 = vadd.f32 %v117, %v2215
  %v2217 = vpop.f32.mrf.mxu0
  %2218 = vdwg.mxu0
  %v2219 = vmax.f32 %v2216, 0.0
  %v2220 = vpack.c.bf16 %v2219, %v2219
  %v2222 = vsel %vm143, %v2220, 0
  %2224 = vmatpush.bf16.msra.mxu0 0
  %2225 = vmatpush.bf16.msra.mxu0 0
  %2226 = vmatpush.bf16.msra.mxu0 0
  %2227 = vmatpush.bf16.msra.mxu0 0
  %2228 = vmatpush.bf16.msra.mxu0 %v184
  %2229 = vmatpush.bf16.msra.mxu0 %v183
  %2230 = vmatpush.bf16.msra.mxu0 %v182
  %2231 = vmatpush.bf16.msra.mxu0 %v181
  %2232 = vmatmul.bf16.gmra.mxu0 %v2222
  %v2233 = vpop.f32.mrf.mxu0
  %v2234 = vadd.f32 %v163, %v2233
  %v2235 = vpop.f32.mrf.mxu0
  %2236 = vdwg.mxu0
  %v2237 = vmax.f32 %v2234, 0.0
  %v2238 = vpack.c.bf16 %v2237, %v2237
  %v2240 = vsel %vm143, %v2238, 0
  %2242 = vmatpush.bf16.msra.mxu0 0
  %2243 = vmatpush.bf16.msra.mxu0 0
  %2244 = vmatpush.bf16.msra.mxu0 0
  %2245 = vmatpush.bf16.msra.mxu0 0
  %2246 = vmatpush.bf16.msra.mxu0 %v229
  %2247 = vmatpush.bf16.msra.mxu0 %v228
  %2248 = vmatpush.bf16.msra.mxu0 %v227
  %2249 = vmatpush.bf16.msra.mxu0 %v226
  %2250 = vmatmul.bf16.gmra.mxu0 %v2240
  %v2251 = vpop.f32.mrf.mxu0
  %v2252 = vadd.f32 %v208, %v2251
  %v2253 = vpop.f32.mrf.mxu0
  %2254 = vdwg.mxu0
  %v2255 = vtanh.pop %v2252
  %v2256 = vmul.f32 %v2255, %v2183
  %2258 = vrot.lane.b32.xlu0 %v2256, 96
  %v2259 = vpop.permute.xlu0 %2258
  %v2261 = vadd.f32 %v2256, %v2259
  %2262 = vrot.lane.b32.xlu0 %v2256, 64
  %v2263 = vpop.permute.xlu0 %2262
  %v2265 = vadd.f32 %v2261, %v2263
  %2266 = vrot.lane.b32.xlu0 %v2256, 32
  %v2267 = vpop.permute.xlu0 %2266
  %v2269 = vadd.f32 %v2265, %v2267
  %v2270 = vsub.f32 %v2089, %v2179
  %v2271 = vadd.f32 %v2270, %v2269
  %v2272 = vadd.f32 %v2001, %v2271
  %s2273 = scalar_lea.vmem %s1, 184
  %v2274 = vld [vmem:[%s2273] sm:$0xff]
  %v2275 = vpack.c.bf16 %v2272, %v2272
  %v2277 = vsel %vm97, %v2275, 0
  %2279 = vmatpush.bf16.msra.mxu0 0
  %2280 = vmatpush.bf16.msra.mxu0 0
  %2281 = vmatpush.bf16.msra.mxu0 0
  %2282 = vmatpush.bf16.msra.mxu0 0
  %2283 = vmatpush.bf16.msra.mxu0 0
  %2284 = vmatpush.bf16.msra.mxu0 0
  %2285 = vmatpush.bf16.msra.mxu0 %v94
  %2286 = vmatpush.bf16.msra.mxu0 %v93
  %2287 = vmatmul.bf16.gmra.mxu0 %v2277
  %v2288 = vpop.f32.mrf.mxu0
  %v2289 = vadd.f32 %v83, %v2288
  %v2290 = vpop.f32.mrf.mxu0
  %2291 = vdwg.mxu0
  %v2292 = vmax.f32 %v2289, 0.0
  %v2293 = vpack.c.bf16 %v2292, %v2292
  %v2295 = vsel %vm143, %v2293, 0
  %2297 = vmatpush.bf16.msra.mxu0 0
  %2298 = vmatpush.bf16.msra.mxu0 0
  %2299 = vmatpush.bf16.msra.mxu0 0
  %2300 = vmatpush.bf16.msra.mxu0 0
  %2301 = vmatpush.bf16.msra.mxu0 %v138
  %2302 = vmatpush.bf16.msra.mxu0 %v137
  %2303 = vmatpush.bf16.msra.mxu0 %v136
  %2304 = vmatpush.bf16.msra.mxu0 %v135
  %2305 = vmatmul.bf16.gmra.mxu0 %v2295
  %v2306 = vpop.f32.mrf.mxu0
  %v2307 = vadd.f32 %v117, %v2306
  %v2308 = vpop.f32.mrf.mxu0
  %2309 = vdwg.mxu0
  %v2310 = vmax.f32 %v2307, 0.0
  %v2311 = vpack.c.bf16 %v2310, %v2310
  %v2313 = vsel %vm143, %v2311, 0
  %2315 = vmatpush.bf16.msra.mxu0 0
  %2316 = vmatpush.bf16.msra.mxu0 0
  %2317 = vmatpush.bf16.msra.mxu0 0
  %2318 = vmatpush.bf16.msra.mxu0 0
  %2319 = vmatpush.bf16.msra.mxu0 %v184
  %2320 = vmatpush.bf16.msra.mxu0 %v183
  %2321 = vmatpush.bf16.msra.mxu0 %v182
  %2322 = vmatpush.bf16.msra.mxu0 %v181
  %2323 = vmatmul.bf16.gmra.mxu0 %v2313
  %v2324 = vpop.f32.mrf.mxu0
  %v2325 = vadd.f32 %v163, %v2324
  %v2326 = vpop.f32.mrf.mxu0
  %2327 = vdwg.mxu0
  %v2328 = vmax.f32 %v2325, 0.0
  %v2329 = vpack.c.bf16 %v2328, %v2328
  %v2331 = vsel %vm143, %v2329, 0
  %2333 = vmatpush.bf16.msra.mxu0 0
  %2334 = vmatpush.bf16.msra.mxu0 0
  %2335 = vmatpush.bf16.msra.mxu0 0
  %2336 = vmatpush.bf16.msra.mxu0 0
  %2337 = vmatpush.bf16.msra.mxu0 %v229
  %2338 = vmatpush.bf16.msra.mxu0 %v228
  %2339 = vmatpush.bf16.msra.mxu0 %v227
  %2340 = vmatpush.bf16.msra.mxu0 %v226
  %2341 = vmatmul.bf16.gmra.mxu0 %v2331
  %v2342 = vpop.f32.mrf.mxu0
  %v2343 = vadd.f32 %v208, %v2342
  %v2344 = vpop.f32.mrf.mxu0
  %2345 = vdwg.mxu0
  %v2346 = vtanh.pop %v2343
  %v2347 = vmul.f32 %v2346, %v2274
  %2349 = vrot.lane.b32.xlu0 %v2347, 96
  %v2350 = vpop.permute.xlu0 %2349
  %v2352 = vadd.f32 %v2347, %v2350
  %2353 = vrot.lane.b32.xlu0 %v2347, 64
  %v2354 = vpop.permute.xlu0 %2353
  %v2356 = vadd.f32 %v2352, %v2354
  %2357 = vrot.lane.b32.xlu0 %v2347, 32
  %v2358 = vpop.permute.xlu0 %2357
  %v2360 = vadd.f32 %v2356, %v2358
  %v2361 = vadd.f32 %v2179, %v2269
  %v2362 = vmul.f32 %v2361, 3.0
  %v2363 = vadd.f32 %v2089, %v2362
  %v2364 = vadd.f32 %v2363, %v2360
  %v2365 = vmul.f32 %v2364, 0.125
  %v2366 = vadd.f32 %v2001, %v2365
  %s2367 = scalar_lea.vmem %s1, 192
  %v2368 = vld [vmem:[%s2367] sm:$0xff]
  %v2369 = vpack.c.bf16 %v2366, %v2366
  %v2371 = vsel %vm97, %v2369, 0
  %2373 = vmatpush.bf16.msra.mxu0 0
  %2374 = vmatpush.bf16.msra.mxu0 0
  %2375 = vmatpush.bf16.msra.mxu0 0
  %2376 = vmatpush.bf16.msra.mxu0 0
  %2377 = vmatpush.bf16.msra.mxu0 0
  %2378 = vmatpush.bf16.msra.mxu0 0
  %2379 = vmatpush.bf16.msra.mxu0 %v94
  %2380 = vmatpush.bf16.msra.mxu0 %v93
  %2381 = vmatmul.bf16.gmra.mxu0 %v2371
  %v2382 = vpop.f32.mrf.mxu0
  %v2383 = vadd.f32 %v83, %v2382
  %v2384 = vpop.f32.mrf.mxu0
  %2385 = vdwg.mxu0
  %v2386 = vmax.f32 %v2383, 0.0
  %v2387 = vpack.c.bf16 %v2386, %v2386
  %v2389 = vsel %vm143, %v2387, 0
  %2391 = vmatpush.bf16.msra.mxu0 0
  %2392 = vmatpush.bf16.msra.mxu0 0
  %2393 = vmatpush.bf16.msra.mxu0 0
  %2394 = vmatpush.bf16.msra.mxu0 0
  %2395 = vmatpush.bf16.msra.mxu0 %v138
  %2396 = vmatpush.bf16.msra.mxu0 %v137
  %2397 = vmatpush.bf16.msra.mxu0 %v136
  %2398 = vmatpush.bf16.msra.mxu0 %v135
  %2399 = vmatmul.bf16.gmra.mxu0 %v2389
  %v2400 = vpop.f32.mrf.mxu0
  %v2401 = vadd.f32 %v117, %v2400
  %v2402 = vpop.f32.mrf.mxu0
  %2403 = vdwg.mxu0
  %v2404 = vmax.f32 %v2401, 0.0
  %v2405 = vpack.c.bf16 %v2404, %v2404
  %v2407 = vsel %vm143, %v2405, 0
  %2409 = vmatpush.bf16.msra.mxu0 0
  %2410 = vmatpush.bf16.msra.mxu0 0
  %2411 = vmatpush.bf16.msra.mxu0 0
  %2412 = vmatpush.bf16.msra.mxu0 0
  %2413 = vmatpush.bf16.msra.mxu0 %v184
  %2414 = vmatpush.bf16.msra.mxu0 %v183
  %2415 = vmatpush.bf16.msra.mxu0 %v182
  %2416 = vmatpush.bf16.msra.mxu0 %v181
  %2417 = vmatmul.bf16.gmra.mxu0 %v2407
  %v2418 = vpop.f32.mrf.mxu0
  %v2419 = vadd.f32 %v163, %v2418
  %v2420 = vpop.f32.mrf.mxu0
  %2421 = vdwg.mxu0
  %v2422 = vmax.f32 %v2419, 0.0
  %v2423 = vpack.c.bf16 %v2422, %v2422
  %v2425 = vsel %vm143, %v2423, 0
  %2427 = vmatpush.bf16.msra.mxu0 0
  %2428 = vmatpush.bf16.msra.mxu0 0
  %2429 = vmatpush.bf16.msra.mxu0 0
  %2430 = vmatpush.bf16.msra.mxu0 0
  %2431 = vmatpush.bf16.msra.mxu0 %v229
  %2432 = vmatpush.bf16.msra.mxu0 %v228
  %2433 = vmatpush.bf16.msra.mxu0 %v227
  %2434 = vmatpush.bf16.msra.mxu0 %v226
  %2435 = vmatmul.bf16.gmra.mxu0 %v2425
  %v2436 = vpop.f32.mrf.mxu0
  %v2437 = vadd.f32 %v208, %v2436
  %v2438 = vpop.f32.mrf.mxu0
  %2439 = vdwg.mxu0
  %v2440 = vtanh.pop %v2437
  %v2441 = vmul.f32 %v2440, %v2368
  %2443 = vrot.lane.b32.xlu0 %v2441, 96
  %v2444 = vpop.permute.xlu0 %2443
  %v2446 = vadd.f32 %v2441, %v2444
  %2447 = vrot.lane.b32.xlu0 %v2441, 64
  %v2448 = vpop.permute.xlu0 %2447
  %v2450 = vadd.f32 %v2446, %v2448
  %2451 = vrot.lane.b32.xlu0 %v2441, 32
  %v2452 = vpop.permute.xlu0 %2451
  %v2454 = vadd.f32 %v2450, %v2452
  %v2455 = vmul.f32 %v2454, 0.33333334
  %v2456 = vadd.f32 %v2366, %v2455
  %s2457 = scalar_lea.vmem %s1, 200
  %v2458 = vld [vmem:[%s2457] sm:$0xff]
  %v2459 = vpack.c.bf16 %v2456, %v2456
  %v2461 = vsel %vm97, %v2459, 0
  %2463 = vmatpush.bf16.msra.mxu0 0
  %2464 = vmatpush.bf16.msra.mxu0 0
  %2465 = vmatpush.bf16.msra.mxu0 0
  %2466 = vmatpush.bf16.msra.mxu0 0
  %2467 = vmatpush.bf16.msra.mxu0 0
  %2468 = vmatpush.bf16.msra.mxu0 0
  %2469 = vmatpush.bf16.msra.mxu0 %v94
  %2470 = vmatpush.bf16.msra.mxu0 %v93
  %2471 = vmatmul.bf16.gmra.mxu0 %v2461
  %v2472 = vpop.f32.mrf.mxu0
  %v2473 = vadd.f32 %v83, %v2472
  %v2474 = vpop.f32.mrf.mxu0
  %2475 = vdwg.mxu0
  %v2476 = vmax.f32 %v2473, 0.0
  %v2477 = vpack.c.bf16 %v2476, %v2476
  %v2479 = vsel %vm143, %v2477, 0
  %2481 = vmatpush.bf16.msra.mxu0 0
  %2482 = vmatpush.bf16.msra.mxu0 0
  %2483 = vmatpush.bf16.msra.mxu0 0
  %2484 = vmatpush.bf16.msra.mxu0 0
  %2485 = vmatpush.bf16.msra.mxu0 %v138
  %2486 = vmatpush.bf16.msra.mxu0 %v137
  %2487 = vmatpush.bf16.msra.mxu0 %v136
  %2488 = vmatpush.bf16.msra.mxu0 %v135
  %2489 = vmatmul.bf16.gmra.mxu0 %v2479
  %v2490 = vpop.f32.mrf.mxu0
  %v2491 = vadd.f32 %v117, %v2490
  %v2492 = vpop.f32.mrf.mxu0
  %2493 = vdwg.mxu0
  %v2494 = vmax.f32 %v2491, 0.0
  %v2495 = vpack.c.bf16 %v2494, %v2494
  %v2497 = vsel %vm143, %v2495, 0
  %2499 = vmatpush.bf16.msra.mxu0 0
  %2500 = vmatpush.bf16.msra.mxu0 0
  %2501 = vmatpush.bf16.msra.mxu0 0
  %2502 = vmatpush.bf16.msra.mxu0 0
  %2503 = vmatpush.bf16.msra.mxu0 %v184
  %2504 = vmatpush.bf16.msra.mxu0 %v183
  %2505 = vmatpush.bf16.msra.mxu0 %v182
  %2506 = vmatpush.bf16.msra.mxu0 %v181
  %2507 = vmatmul.bf16.gmra.mxu0 %v2497
  %v2508 = vpop.f32.mrf.mxu0
  %v2509 = vadd.f32 %v163, %v2508
  %v2510 = vpop.f32.mrf.mxu0
  %2511 = vdwg.mxu0
  %v2512 = vmax.f32 %v2509, 0.0
  %v2513 = vpack.c.bf16 %v2512, %v2512
  %v2515 = vsel %vm143, %v2513, 0
  %2517 = vmatpush.bf16.msra.mxu0 0
  %2518 = vmatpush.bf16.msra.mxu0 0
  %2519 = vmatpush.bf16.msra.mxu0 0
  %2520 = vmatpush.bf16.msra.mxu0 0
  %2521 = vmatpush.bf16.msra.mxu0 %v229
  %2522 = vmatpush.bf16.msra.mxu0 %v228
  %2523 = vmatpush.bf16.msra.mxu0 %v227
  %2524 = vmatpush.bf16.msra.mxu0 %v226
  %2525 = vmatmul.bf16.gmra.mxu0 %v2515
  %v2526 = vpop.f32.mrf.mxu0
  %v2527 = vadd.f32 %v208, %v2526
  %v2528 = vpop.f32.mrf.mxu0
  %2529 = vdwg.mxu0
  %v2530 = vtanh.pop %v2527
  %v2531 = vmul.f32 %v2530, %v2458
  %2533 = vrot.lane.b32.xlu0 %v2531, 96
  %v2534 = vpop.permute.xlu0 %2533
  %v2536 = vadd.f32 %v2531, %v2534
  %2537 = vrot.lane.b32.xlu0 %v2531, 64
  %v2538 = vpop.permute.xlu0 %2537
  %v2540 = vadd.f32 %v2536, %v2538
  %2541 = vrot.lane.b32.xlu0 %v2531, 32
  %v2542 = vpop.permute.xlu0 %2541
  %v2544 = vadd.f32 %v2540, %v2542
  %v2545 = vsub.f32 %v2544, %v2455
  %v2546 = vadd.f32 %v2366, %v2545
  %s2547 = scalar_lea.vmem %s1, 208
  %v2548 = vld [vmem:[%s2547] sm:$0xff]
  %v2549 = vpack.c.bf16 %v2546, %v2546
  %v2551 = vsel %vm97, %v2549, 0
  %2553 = vmatpush.bf16.msra.mxu0 0
  %2554 = vmatpush.bf16.msra.mxu0 0
  %2555 = vmatpush.bf16.msra.mxu0 0
  %2556 = vmatpush.bf16.msra.mxu0 0
  %2557 = vmatpush.bf16.msra.mxu0 0
  %2558 = vmatpush.bf16.msra.mxu0 0
  %2559 = vmatpush.bf16.msra.mxu0 %v94
  %2560 = vmatpush.bf16.msra.mxu0 %v93
  %2561 = vmatmul.bf16.gmra.mxu0 %v2551
  %v2562 = vpop.f32.mrf.mxu0
  %v2563 = vadd.f32 %v83, %v2562
  %v2564 = vpop.f32.mrf.mxu0
  %2565 = vdwg.mxu0
  %v2566 = vmax.f32 %v2563, 0.0
  %v2567 = vpack.c.bf16 %v2566, %v2566
  %v2569 = vsel %vm143, %v2567, 0
  %2571 = vmatpush.bf16.msra.mxu0 0
  %2572 = vmatpush.bf16.msra.mxu0 0
  %2573 = vmatpush.bf16.msra.mxu0 0
  %2574 = vmatpush.bf16.msra.mxu0 0
  %2575 = vmatpush.bf16.msra.mxu0 %v138
  %2576 = vmatpush.bf16.msra.mxu0 %v137
  %2577 = vmatpush.bf16.msra.mxu0 %v136
  %2578 = vmatpush.bf16.msra.mxu0 %v135
  %2579 = vmatmul.bf16.gmra.mxu0 %v2569
  %v2580 = vpop.f32.mrf.mxu0
  %v2581 = vadd.f32 %v117, %v2580
  %v2582 = vpop.f32.mrf.mxu0
  %2583 = vdwg.mxu0
  %v2584 = vmax.f32 %v2581, 0.0
  %v2585 = vpack.c.bf16 %v2584, %v2584
  %v2587 = vsel %vm143, %v2585, 0
  %2589 = vmatpush.bf16.msra.mxu0 0
  %2590 = vmatpush.bf16.msra.mxu0 0
  %2591 = vmatpush.bf16.msra.mxu0 0
  %2592 = vmatpush.bf16.msra.mxu0 0
  %2593 = vmatpush.bf16.msra.mxu0 %v184
  %2594 = vmatpush.bf16.msra.mxu0 %v183
  %2595 = vmatpush.bf16.msra.mxu0 %v182
  %2596 = vmatpush.bf16.msra.mxu0 %v181
  %2597 = vmatmul.bf16.gmra.mxu0 %v2587
  %v2598 = vpop.f32.mrf.mxu0
  %v2599 = vadd.f32 %v163, %v2598
  %v2600 = vpop.f32.mrf.mxu0
  %2601 = vdwg.mxu0
  %v2602 = vmax.f32 %v2599, 0.0
  %v2603 = vpack.c.bf16 %v2602, %v2602
  %v2605 = vsel %vm143, %v2603, 0
  %2607 = vmatpush.bf16.msra.mxu0 0
  %2608 = vmatpush.bf16.msra.mxu0 0
  %2609 = vmatpush.bf16.msra.mxu0 0
  %2610 = vmatpush.bf16.msra.mxu0 0
  %2611 = vmatpush.bf16.msra.mxu0 %v229
  %2612 = vmatpush.bf16.msra.mxu0 %v228
  %2613 = vmatpush.bf16.msra.mxu0 %v227
  %2614 = vmatpush.bf16.msra.mxu0 %v226
  %2615 = vmatmul.bf16.gmra.mxu0 %v2605
  %v2616 = vpop.f32.mrf.mxu0
  %v2617 = vadd.f32 %v208, %v2616
  %v2618 = vpop.f32.mrf.mxu0
  %2619 = vdwg.mxu0
  %v2620 = vtanh.pop %v2617
  %v2621 = vmul.f32 %v2620, %v2548
  %2623 = vrot.lane.b32.xlu0 %v2621, 96
  %v2624 = vpop.permute.xlu0 %2623
  %v2626 = vadd.f32 %v2621, %v2624
  %2627 = vrot.lane.b32.xlu0 %v2621, 64
  %v2628 = vpop.permute.xlu0 %2627
  %v2630 = vadd.f32 %v2626, %v2628
  %2631 = vrot.lane.b32.xlu0 %v2621, 32
  %v2632 = vpop.permute.xlu0 %2631
  %v2634 = vadd.f32 %v2630, %v2632
  %v2635 = vsub.f32 %v2454, %v2544
  %v2636 = vadd.f32 %v2635, %v2634
  %v2637 = vadd.f32 %v2366, %v2636
  %s2638 = scalar_lea.vmem %s1, 216
  %v2639 = vld [vmem:[%s2638] sm:$0xff]
  %v2640 = vpack.c.bf16 %v2637, %v2637
  %v2642 = vsel %vm97, %v2640, 0
  %2644 = vmatpush.bf16.msra.mxu0 0
  %2645 = vmatpush.bf16.msra.mxu0 0
  %2646 = vmatpush.bf16.msra.mxu0 0
  %2647 = vmatpush.bf16.msra.mxu0 0
  %2648 = vmatpush.bf16.msra.mxu0 0
  %2649 = vmatpush.bf16.msra.mxu0 0
  %2650 = vmatpush.bf16.msra.mxu0 %v94
  %2651 = vmatpush.bf16.msra.mxu0 %v93
  %2652 = vmatmul.bf16.gmra.mxu0 %v2642
  %v2653 = vpop.f32.mrf.mxu0
  %v2654 = vadd.f32 %v83, %v2653
  %v2655 = vpop.f32.mrf.mxu0
  %2656 = vdwg.mxu0
  %v2657 = vmax.f32 %v2654, 0.0
  %v2658 = vpack.c.bf16 %v2657, %v2657
  %v2660 = vsel %vm143, %v2658, 0
  %2662 = vmatpush.bf16.msra.mxu0 0
  %2663 = vmatpush.bf16.msra.mxu0 0
  %2664 = vmatpush.bf16.msra.mxu0 0
  %2665 = vmatpush.bf16.msra.mxu0 0
  %2666 = vmatpush.bf16.msra.mxu0 %v138
  %2667 = vmatpush.bf16.msra.mxu0 %v137
  %2668 = vmatpush.bf16.msra.mxu0 %v136
  %2669 = vmatpush.bf16.msra.mxu0 %v135
  %2670 = vmatmul.bf16.gmra.mxu0 %v2660
  %v2671 = vpop.f32.mrf.mxu0
  %v2672 = vadd.f32 %v117, %v2671
  %v2673 = vpop.f32.mrf.mxu0
  %2674 = vdwg.mxu0
  %v2675 = vmax.f32 %v2672, 0.0
  %v2676 = vpack.c.bf16 %v2675, %v2675
  %v2678 = vsel %vm143, %v2676, 0
  %2680 = vmatpush.bf16.msra.mxu0 0
  %2681 = vmatpush.bf16.msra.mxu0 0
  %2682 = vmatpush.bf16.msra.mxu0 0
  %2683 = vmatpush.bf16.msra.mxu0 0
  %2684 = vmatpush.bf16.msra.mxu0 %v184
  %2685 = vmatpush.bf16.msra.mxu0 %v183
  %2686 = vmatpush.bf16.msra.mxu0 %v182
  %2687 = vmatpush.bf16.msra.mxu0 %v181
  %2688 = vmatmul.bf16.gmra.mxu0 %v2678
  %v2689 = vpop.f32.mrf.mxu0
  %v2690 = vadd.f32 %v163, %v2689
  %v2691 = vpop.f32.mrf.mxu0
  %2692 = vdwg.mxu0
  %v2693 = vmax.f32 %v2690, 0.0
  %v2694 = vpack.c.bf16 %v2693, %v2693
  %v2696 = vsel %vm143, %v2694, 0
  %2698 = vmatpush.bf16.msra.mxu0 0
  %2699 = vmatpush.bf16.msra.mxu0 0
  %2700 = vmatpush.bf16.msra.mxu0 0
  %2701 = vmatpush.bf16.msra.mxu0 0
  %2702 = vmatpush.bf16.msra.mxu0 %v229
  %2703 = vmatpush.bf16.msra.mxu0 %v228
  %2704 = vmatpush.bf16.msra.mxu0 %v227
  %2705 = vmatpush.bf16.msra.mxu0 %v226
  %2706 = vmatmul.bf16.gmra.mxu0 %v2696
  %v2707 = vpop.f32.mrf.mxu0
  %v2708 = vadd.f32 %v208, %v2707
  %v2709 = vpop.f32.mrf.mxu0
  %2710 = vdwg.mxu0
  %v2711 = vtanh.pop %v2708
  %v2712 = vmul.f32 %v2711, %v2639
  %2714 = vrot.lane.b32.xlu0 %v2712, 96
  %v2715 = vpop.permute.xlu0 %2714
  %v2717 = vadd.f32 %v2712, %v2715
  %2718 = vrot.lane.b32.xlu0 %v2712, 64
  %v2719 = vpop.permute.xlu0 %2718
  %v2721 = vadd.f32 %v2717, %v2719
  %2722 = vrot.lane.b32.xlu0 %v2712, 32
  %v2723 = vpop.permute.xlu0 %2722
  %v2725 = vadd.f32 %v2721, %v2723
  %v2726 = vadd.f32 %v2544, %v2634
  %v2727 = vmul.f32 %v2726, 3.0
  %v2728 = vadd.f32 %v2454, %v2727
  %v2729 = vadd.f32 %v2728, %v2725
  %v2730 = vmul.f32 %v2729, 0.125
  %v2731 = vadd.f32 %v2366, %v2730
  %v2732 = vpack.c.bf16 %v2731, %v2731
  %v2734 = vperm.slane %v78, 0
  %v2740 = vunpack.c.l.b16 %v74
  %v2741 = vunpack.c.l.b16 %v75
  %v2742 = vunpack.c.l.b16 %v76
  %v2743 = vunpack.c.l.b16 %v77
  %v2744 = vpack.c.b16 %v2741, %v2740
  %v2745 = vpack.c.b16 %v2743, %v2742
  %v2749 = vsel %vm97, %v2732, 0
  %2751 = vmatpush.bf16.msra.mxu0 0
  %2752 = vmatpush.bf16.msra.mxu0 0
  %2753 = vmatpush.bf16.msra.mxu0 0
  %2754 = vmatpush.bf16.msra.mxu0 0
  %2755 = vmatpush.bf16.msra.mxu0 0
  %2756 = vmatpush.bf16.msra.mxu0 0
  %2757 = vmatpush.bf16.msra.mxu0 %v2745
  %2758 = vmatpush.bf16.msra.mxu0 %v2744
  %2759 = vmatmul.bf16.gmra.mxu0 %v2749
  %v2760 = vpop.f32.mrf.mxu0
  %v2761 = vadd.f32 %v2734, %v2760
  %v2762 = vpop.f32.mrf.mxu0
  %2763 = vdwg.mxu0
  %2764 = vst [vmem:[%s12] sm:$0xff] %v2761
  // Predicated region
  $region50: #{neural_cde_forward.1} parent=0 // pred_check
    _
  $region51: #{neural_cde_forward.1} parent=0 // pred_check_branch
    %2766 = sbr.rel (0) target = $region53
  $region52: #{neural_cde_forward.1} parent=0 // pred_region
    _
  $region53: #{neural_cde_forward.1} parent=0 // pred_fallthru
    _
  // Predicated region
  $region54: #{neural_cde_forward.1} parent=0 // pred_check
    _
  $region55: #{neural_cde_forward.1} parent=0 // pred_check_branch
    %2768 = sbr.rel (0) target = $region57
  $region56: #{neural_cde_forward.1} parent=0 // pred_region
    _
  $region57: #{neural_cde_forward.1} parent=0 // pred_fallthru
    _

</llo_original>
